<compile_context>
chip_gen: v5e
topology: v5e:2x2
jax: 0.10.0
libtpu: 0.0.40
codegen_flags: <defaults>
</compile_context>

<pallas_src>
import functools
import math

import jax
import jax.numpy as jnp
from jax.experimental import pallas as pl
from jax.experimental.pallas import tpu as pltpu


def _mha_kernel(scale, ln_eps, n_heads, d_head, mm_dtype, approx_recip,
                q_ref, kv_ref,
                wq_ref, bq_ref,
                wk_ref, bk_ref,
                wv_ref, bv_ref,
                wo_ref, bo_ref,
                g_ref, beta_ref,
                o_ref):
    x = q_ref[0]                                   # (tq, D) f32 — residual branch
    x_mm = x.astype(mm_dtype)                      # cast once per tile (not per head)
    kv_mm = kv_ref[0]                              # (Skv, D), already mm_dtype

    # Fused, lane-dense projections over the full H = n_heads * d_head.
    q_all = jnp.dot(x_mm, wq_ref[...], preferred_element_type=jnp.float32) + bq_ref[...]
    if scale:
        # Fold the 1/sqrt(d_head) softmax scale into Q (tq*H muls, not tq*Skv per head).
        q_all = q_all * (1.0 / math.sqrt(d_head))
    k_all = jnp.dot(kv_mm, wk_ref[...], preferred_element_type=jnp.float32) + bk_ref[...]
    v_all = jnp.dot(kv_mm, wv_ref[...], preferred_element_type=jnp.float32) + bv_ref[...]

    q_all = q_all.astype(mm_dtype)
    k_all = k_all.astype(mm_dtype)
    v_all = v_all.astype(mm_dtype)

    # Per-head attention.  The QK^T / PV contractions are inherently d_head
    # wide, so heads cannot be fused into MXU lanes here; n_heads is small and
    # this static Python loop unrolls at trace time.
    ctx_parts = []
    for h in range(n_heads):
        lo = h * d_head
        q_h = q_all[:, lo:lo + d_head]             # (tq, d_head)
        k_h = k_all[:, lo:lo + d_head]             # (Skv, d_head)
        v_h = v_all[:, lo:lo + d_head]             # (Skv, d_head)

        # Scores without materializing k_h.T: contract the last axis of both.
        scores = jax.lax.dot_general(
            q_h, k_h, dimension_numbers=(((1,), (1,)), ((), ())),
            preferred_element_type=jnp.float32)    # (tq, Skv) f32

        # TODO(synk): optional boolean attention mask would be applied here:
        #   scores = jnp.where(mask, -jnp.inf, scores)

        # Numerically stable softmax; reciprocal on the EUP slot in fast mode.
        m = jnp.max(scores, axis=-1, keepdims=True)
        e = jnp.exp(scores - m)
        denom = jnp.sum(e, axis=-1, keepdims=True)
        probs = e * pl.reciprocal(denom, approx=approx_recip)

        ctx_parts.append(
            jnp.dot(probs.astype(mm_dtype), v_h,
                    preferred_element_type=jnp.float32).astype(mm_dtype))

    ctx = jnp.concatenate(ctx_parts, axis=-1)      # (tq, H) lane-dense

    # Output projection as ONE (tq, H) x (H, D) matmul, then bias, residual,
    # LayerNorm — all on this lane-dense tile.
    out = jnp.dot(ctx, wo_ref[...], preferred_element_type=jnp.float32) + bo_ref[...]
    res = x + out
    mu = jnp.mean(res, axis=-1, keepdims=True)
    diff = res - mu
    var = jnp.mean(diff * diff, axis=-1, keepdims=True)
    normed = diff * jax.lax.rsqrt(var + ln_eps)
    o_ref[0] = (normed * g_ref[...] + beta_ref[...]).astype(o_ref.dtype)


def _pick_q_tile(sq):
    for t in (512, 256, 128):
        if sq % t == 0 and sq >= t:
            return t
    return sq


def _vmem_limit_bytes():
    # v5e/v6e: 128 MiB physical -> 96 MiB; v7x: 64 MiB physical -> 48 MiB.
    try:
        phys = pltpu.get_tpu_info().vmem_capacity_bytes
    except Exception:
        phys = 128 * 1024 * 1024
    return int(min(96 * 1024 * 1024, (phys * 3) // 4))


def multi_head_attention(q, kv, params, n_heads, d_head, scale=True,
                         ln_eps=1e-5, matmul_dtype=jnp.bfloat16, tq=None):
    """q, kv: (B, S, D) float32.  params: weights already transposed to (in, out).

    matmul_dtype=jnp.bfloat16 uses the MXU fast path (bf16 inputs, f32
    accumulation); pass jnp.float32 for a bit-near-reference check.
    """
    B, Sq, D = q.shape
    Skv = kv.shape[1]
    H = n_heads * d_head
    assert params["wq"].shape == (D, H) and params["wo"].shape == (H, D)

    mm = matmul_dtype
    if tq is None:
        tq = _pick_q_tile(Sq)
    assert Sq % tq == 0, "query length must be divisible by the query tile"
    n_qt = Sq // tq

    # Pre-cast the streamed kv operand and the (resident) weights in the
    # wrapper: halves DMA bytes / VMEM in bf16 mode.  Biases / LN params stay
    # f32 (they feed f32 epilogue math).
    kv_mm = kv.astype(mm)
    wq = params["wq"].astype(mm)
    wk = params["wk"].astype(mm)
    wv = params["wv"].astype(mm)
    wo = params["wo"].astype(mm)

    q_spec = pl.BlockSpec((1, tq, D), lambda b, t: (b, t, 0))
    kv_spec = pl.BlockSpec((1, Skv, D), lambda b, t: (b, 0, 0))     # resident across q tiles
    resident2 = lambda b, t: (0, 0)                                  # weights: never re-fetched
    w_in_spec = pl.BlockSpec((D, H), resident2)
    b_in_spec = pl.BlockSpec((1, H), resident2)
    w_out_spec = pl.BlockSpec((H, D), resident2)
    row_d_spec = pl.BlockSpec((1, D), resident2)

    kernel = functools.partial(
        _mha_kernel, scale, ln_eps, n_heads, d_head, mm,
        matmul_dtype != jnp.float32)

    return pl.pallas_call(
        kernel,
        out_shape=jax.ShapeDtypeStruct((B, Sq, D), jnp.float32),
        grid_spec=pltpu.PrefetchScalarGridSpec(
            num_scalar_prefetch=0,
            grid=(B, n_qt),
            in_specs=[
                q_spec,                      # q (f32, residual + projection input)
                kv_spec,                     # kv (mm dtype)
                w_in_spec, b_in_spec,        # Wq, bq
                w_in_spec, b_in_spec,        # Wk, bk
                w_in_spec, b_in_spec,        # Wv, bv
                w_out_spec, row_d_spec,      # Wo, bo
                row_d_spec, row_d_spec,      # ln gamma, ln beta
            ],
            out_specs=q_spec,
        ),
        compiler_params=pltpu.CompilerParams(
            # No reduction axis in the grid anymore: both batch and q-tile
            # axes are independent, so both may shard across TensorCores.
            dimension_semantics=("parallel", "parallel"),
            vmem_limit_bytes=_vmem_limit_bytes(),
        ),
    )(q, kv_mm,
      wq, params["bq"], wk, params["bk"], wv, params["bv"],
      wo, params["bo"], params["gamma"], params["beta"])


def _reference(q, kv, params, n_heads, d_head, scale=True, ln_eps=1e-5):
    """Plain-JAX reference mirroring the PyTorch module (dropout p=0)."""
    B, S, D = q.shape

    def lin(x, w, b):
        return jnp.einsum("bsd,dh->bsh", x, w) + b

    Q = lin(q, params["wq"], params["bq"]).reshape(B, S, n_heads, d_head).transpose(0, 2, 1, 3)
    K = lin(kv, params["wk"], params["bk"]).reshape(B, S, n_heads, d_head).transpose(0, 2, 1, 3)
    V = lin(kv, params["wv"], params["bv"]).reshape(B, S, n_heads, d_head).transpose(0, 2, 1, 3)
    scores = jnp.einsum("bhqd,bhkd->bhqk", Q, K)
    if scale:
        scores = scores / math.sqrt(d_head)
    probs = jax.nn.softmax(scores, axis=-1)
    attn = jnp.einsum("bhqk,bhkd->bhqd", probs, V).transpose(0, 2, 1, 3).reshape(B, S, -1)
    out = jnp.einsum("bsh,hd->bsd", attn, params["wo"]) + params["bo"]
    res = q + out
    mu = jnp.mean(res, axis=-1, keepdims=True)
    var = jnp.mean((res - mu) ** 2, axis=-1, keepdims=True)
    return (res - mu) / jnp.sqrt(var + ln_eps) * params["gamma"] + params["beta"]


def init_params(key, d_model, n_heads, d_head):
    H = n_heads * d_head
    keys = jax.random.split(key, 8)

    # Deterministic synthetic init, roughly matching nn.Linear's uniform scale.
    def u(k, shape, fan_in):
        bound = 1.0 / math.sqrt(fan_in)
        return jax.random.uniform(k, shape, jnp.float32, -bound, bound)

    return {
        "wq": u(keys[0], (d_model, H), d_model), "bq": u(keys[1], (1, H), d_model),
        "wk": u(keys[2], (d_model, H), d_model), "bk": u(keys[3], (1, H), d_model),
        "wv": u(keys[4], (d_model, H), d_model), "bv": u(keys[5], (1, H), d_model),
        "wo": u(keys[6], (H, d_model), H),       "bo": u(keys[7], (1, d_model), H),
        "gamma": jnp.ones((1, d_model), jnp.float32),
        "beta": jnp.zeros((1, d_model), jnp.float32),
    }


if __name__ == "__main__":
    # Lane-friendly small shapes: D = H = 128 (no masked partial stores),
    # Sq = 256 so the q-tile grid axis is exercised with tq = 128.
    B, S, D = 2, 256, 128
    n_heads = 4
    d_head = D // n_heads

    key = jax.random.PRNGKey(0)
    kq, kkv, kp = jax.random.split(key, 3)
    q = jax.random.normal(kq, (B, S, D), jnp.float32)
    kv = jax.random.normal(kkv, (B, S, D), jnp.float32)
    params = init_params(kp, D, n_heads, d_head)

    ref = _reference(q, kv, params, n_heads, d_head, scale=True)

    # Exact mode (f32 MXU inputs, exact softmax reciprocal), 2 q-tiles per batch.
    out_f32 = jax.block_until_ready(
        multi_head_attention(q, kv, params, n_heads, d_head, scale=True,
                             matmul_dtype=jnp.float32, tq=128))
    assert out_f32.shape == (B, S, D)
    assert jnp.allclose(out_f32, ref, atol=1e-3, rtol=1e-3), "f32 kernel mismatch"

    # Fast mode (bf16 MXU inputs + f32 accumulation, EUP approx reciprocal),
    # default (largest) q tile.
    out_bf16 = jax.block_until_ready(
        multi_head_attention(q, kv, params, n_heads, d_head, scale=True,
                             matmul_dtype=jnp.bfloat16))
    assert out_bf16.shape == (B, S, D)
    assert jnp.allclose(out_bf16, ref, atol=5e-2, rtol=5e-2), "bf16 kernel mismatch"

    print("KERNEL_OK")
</pallas_src>

<mosaic_0001>
module attributes {stable_mosaic.version = 11 : i64} {
  func.func @_mha_kernel(%arg0: i32, %arg1: i32, %arg2: memref<1x128x128xf32, #tpu.memory_space<vmem>>, %arg3: memref<1x256x128xf32, #tpu.memory_space<vmem>>, %arg4: memref<128x128xf32, #tpu.memory_space<vmem>>, %arg5: memref<1x128xf32, #tpu.memory_space<vmem>>, %arg6: memref<128x128xf32, #tpu.memory_space<vmem>>, %arg7: memref<1x128xf32, #tpu.memory_space<vmem>>, %arg8: memref<128x128xf32, #tpu.memory_space<vmem>>, %arg9: memref<1x128xf32, #tpu.memory_space<vmem>>, %arg10: memref<128x128xf32, #tpu.memory_space<vmem>>, %arg11: memref<1x128xf32, #tpu.memory_space<vmem>>, %arg12: memref<1x128xf32, #tpu.memory_space<vmem>>, %arg13: memref<1x128xf32, #tpu.memory_space<vmem>>, %arg14: memref<1x128x128xf32, #tpu.memory_space<vmem>>) attributes {dimension_semantics = [#tpu.dimension_semantics<parallel>, #tpu.dimension_semantics<parallel>], iteration_bounds = array<i64: 2, 2>, scalar_prefetch = 0 : i64, scratch_operands = 0 : i64, tpu.core_type = #tpu.core_type<tc>, window_params = [{transform_indices = @transform_0, window_bounds = array<i64: 1, 128, 128>}, {transform_indices = @transform_1, window_bounds = array<i64: 1, 256, 128>}, {pipeline_mode = #tpu.pipeline_mode<synchronous>, transform_indices = @transform_2, window_bounds = array<i64: 128, 128>}, {pipeline_mode = #tpu.pipeline_mode<synchronous>, transform_indices = @transform_3, window_bounds = array<i64: 1, 128>}, {pipeline_mode = #tpu.pipeline_mode<synchronous>, transform_indices = @transform_4, window_bounds = array<i64: 128, 128>}, {pipeline_mode = #tpu.pipeline_mode<synchronous>, transform_indices = @transform_5, window_bounds = array<i64: 1, 128>}, {pipeline_mode = #tpu.pipeline_mode<synchronous>, transform_indices = @transform_6, window_bounds = array<i64: 128, 128>}, {pipeline_mode = #tpu.pipeline_mode<synchronous>, transform_indices = @transform_7, window_bounds = array<i64: 1, 128>}, {pipeline_mode = #tpu.pipeline_mode<synchronous>, transform_indices = @transform_8, window_bounds = array<i64: 128, 128>}, {pipeline_mode = #tpu.pipeline_mode<synchronous>, transform_indices = @transform_9, window_bounds = array<i64: 1, 128>}, {pipeline_mode = #tpu.pipeline_mode<synchronous>, transform_indices = @transform_10, window_bounds = array<i64: 1, 128>}, {pipeline_mode = #tpu.pipeline_mode<synchronous>, transform_indices = @transform_11, window_bounds = array<i64: 1, 128>}, {transform_indices = @transform_12, window_bounds = array<i64: 1, 128, 128>}]} {
    %c0 = arith.constant 0 : index
    %c0_0 = arith.constant 0 : index
    %c0_1 = arith.constant 0 : index
    %0 = vector.load %arg2[%c0, %c0_0, %c0_1] : memref<1x128x128xf32, #tpu.memory_space<vmem>>, vector<1x128x128xf32>
    %1 = vector.shape_cast %0 : vector<1x128x128xf32> to vector<128x128xf32>
    %c0_2 = arith.constant 0 : index
    %c0_3 = arith.constant 0 : index
    %c0_4 = arith.constant 0 : index
    %2 = vector.load %arg3[%c0_2, %c0_3, %c0_4] : memref<1x256x128xf32, #tpu.memory_space<vmem>>, vector<1x256x128xf32>
    %3 = vector.shape_cast %2 : vector<1x256x128xf32> to vector<256x128xf32>
    %c0_5 = arith.constant 0 : index
    %c0_6 = arith.constant 0 : index
    %4 = vector.load %arg4[%c0_5, %c0_6] : memref<128x128xf32, #tpu.memory_space<vmem>>, vector<128x128xf32>
    %cst = arith.constant dense<0.000000e+00> : vector<128x128xf32>
    %5 = tpu.matmul %1, %4, %cst {dimension_numbers = #tpu.dot_dimension_numbers<[1], [0], [0], [1], [0, 0, 1, 1], [], []>} : vector<128x128xf32>, vector<128x128xf32>, vector<128x128xf32> -> vector<128x128xf32>
    %c0_7 = arith.constant 0 : index
    %c0_8 = arith.constant 0 : index
    %6 = vector.load %arg5[%c0_7, %c0_8] : memref<1x128xf32, #tpu.memory_space<vmem>>, vector<1x128xf32>
    %7 = vector.broadcast %6 : vector<1x128xf32> to vector<128x128xf32>
    %8 = arith.addf %5, %7 : vector<128x128xf32>
    %cst_9 = arith.constant 0.176776692 : f32
    %9 = vector.broadcast %cst_9 : f32 to vector<128x128xf32>
    %10 = arith.mulf %8, %9 : vector<128x128xf32>
    %c0_10 = arith.constant 0 : index
    %c0_11 = arith.constant 0 : index
    %11 = vector.load %arg6[%c0_10, %c0_11] : memref<128x128xf32, #tpu.memory_space<vmem>>, vector<128x128xf32>
    %cst_12 = arith.constant dense<0.000000e+00> : vector<256x128xf32>
    %12 = tpu.matmul %3, %11, %cst_12 {dimension_numbers = #tpu.dot_dimension_numbers<[1], [0], [0], [1], [0, 0, 1, 1], [], []>} : vector<256x128xf32>, vector<128x128xf32>, vector<256x128xf32> -> vector<256x128xf32>
    %c0_13 = arith.constant 0 : index
    %c0_14 = arith.constant 0 : index
    %13 = vector.load %arg7[%c0_13, %c0_14] : memref<1x128xf32, #tpu.memory_space<vmem>>, vector<1x128xf32>
    %14 = vector.broadcast %13 : vector<1x128xf32> to vector<256x128xf32>
    %15 = arith.addf %12, %14 : vector<256x128xf32>
    %c0_15 = arith.constant 0 : index
    %c0_16 = arith.constant 0 : index
    %16 = vector.load %arg8[%c0_15, %c0_16] : memref<128x128xf32, #tpu.memory_space<vmem>>, vector<128x128xf32>
    %cst_17 = arith.constant dense<0.000000e+00> : vector<256x128xf32>
    %17 = tpu.matmul %3, %16, %cst_17 {dimension_numbers = #tpu.dot_dimension_numbers<[1], [0], [0], [1], [0, 0, 1, 1], [], []>} : vector<256x128xf32>, vector<128x128xf32>, vector<256x128xf32> -> vector<256x128xf32>
    %c0_18 = arith.constant 0 : index
    %c0_19 = arith.constant 0 : index
    %18 = vector.load %arg9[%c0_18, %c0_19] : memref<1x128xf32, #tpu.memory_space<vmem>>, vector<1x128xf32>
    %19 = vector.broadcast %18 : vector<1x128xf32> to vector<256x128xf32>
    %20 = arith.addf %17, %19 : vector<256x128xf32>
    %21 = vector.extract_strided_slice %10 {offsets = [0, 0], sizes = [128, 32], strides = [1, 1]} : vector<128x128xf32> to vector<128x32xf32>
    %22 = vector.extract_strided_slice %15 {offsets = [0, 0], sizes = [256, 32], strides = [1, 1]} : vector<256x128xf32> to vector<256x32xf32>
    %23 = vector.extract_strided_slice %20 {offsets = [0, 0], sizes = [256, 32], strides = [1, 1]} : vector<256x128xf32> to vector<256x32xf32>
    %cst_20 = arith.constant dense<0.000000e+00> : vector<128x256xf32>
    %24 = tpu.matmul %21, %22, %cst_20 {dimension_numbers = #tpu.dot_dimension_numbers<[1], [1], [0], [0], [0, 0, 1, 0], [], []>} : vector<128x32xf32>, vector<256x32xf32>, vector<128x256xf32> -> vector<128x256xf32>
    %cst_21 = arith.constant dense<0xFF800000> : vector<128xf32>
    %25 = vector.multi_reduction <maximumf>, %24, %cst_21 [1] : vector<128x256xf32> to vector<128xf32>
    %26 = vector.shape_cast %25 : vector<128xf32> to vector<128x1xf32>
    %27 = vector.broadcast %26 : vector<128x1xf32> to vector<128x256xf32>
    %28 = arith.subf %24, %27 : vector<128x256xf32>
    %29 = math.exp %28 : vector<128x256xf32>
    %cst_22 = arith.constant dense<0.000000e+00> : vector<128xf32>
    %30 = vector.multi_reduction <add>, %29, %cst_22 [1] : vector<128x256xf32> to vector<128xf32>
    %31 = vector.shape_cast %30 : vector<128xf32> to vector<128x1xf32>
    %32 = tpu.reciprocal %31 : vector<128x1xf32> -> vector<128x1xf32>
    %33 = vector.broadcast %32 : vector<128x1xf32> to vector<128x256xf32>
    %34 = arith.mulf %29, %33 : vector<128x256xf32>
    %cst_23 = arith.constant dense<0.000000e+00> : vector<128x32xf32>
    %35 = tpu.matmul %34, %23, %cst_23 {dimension_numbers = #tpu.dot_dimension_numbers<[1], [0], [0], [1], [0, 0, 1, 1], [], []>} : vector<128x256xf32>, vector<256x32xf32>, vector<128x32xf32> -> vector<128x32xf32>
    %36 = vector.extract_strided_slice %10 {offsets = [0, 32], sizes = [128, 32], strides = [1, 1]} : vector<128x128xf32> to vector<128x32xf32>
    %37 = vector.extract_strided_slice %15 {offsets = [0, 32], sizes = [256, 32], strides = [1, 1]} : vector<256x128xf32> to vector<256x32xf32>
    %38 = vector.extract_strided_slice %20 {offsets = [0, 32], sizes = [256, 32], strides = [1, 1]} : vector<256x128xf32> to vector<256x32xf32>
    %cst_24 = arith.constant dense<0.000000e+00> : vector<128x256xf32>
    %39 = tpu.matmul %36, %37, %cst_24 {dimension_numbers = #tpu.dot_dimension_numbers<[1], [1], [0], [0], [0, 0, 1, 0], [], []>} : vector<128x32xf32>, vector<256x32xf32>, vector<128x256xf32> -> vector<128x256xf32>
    %cst_25 = arith.constant dense<0xFF800000> : vector<128xf32>
    %40 = vector.multi_reduction <maximumf>, %39, %cst_25 [1] : vector<128x256xf32> to vector<128xf32>
    %41 = vector.shape_cast %40 : vector<128xf32> to vector<128x1xf32>
    %42 = vector.broadcast %41 : vector<128x1xf32> to vector<128x256xf32>
    %43 = arith.subf %39, %42 : vector<128x256xf32>
    %44 = math.exp %43 : vector<128x256xf32>
    %cst_26 = arith.constant dense<0.000000e+00> : vector<128xf32>
    %45 = vector.multi_reduction <add>, %44, %cst_26 [1] : vector<128x256xf32> to vector<128xf32>
    %46 = vector.shape_cast %45 : vector<128xf32> to vector<128x1xf32>
    %47 = tpu.reciprocal %46 : vector<128x1xf32> -> vector<128x1xf32>
    %48 = vector.broadcast %47 : vector<128x1xf32> to vector<128x256xf32>
    %49 = arith.mulf %44, %48 : vector<128x256xf32>
    %cst_27 = arith.constant dense<0.000000e+00> : vector<128x32xf32>
    %50 = tpu.matmul %49, %38, %cst_27 {dimension_numbers = #tpu.dot_dimension_numbers<[1], [0], [0], [1], [0, 0, 1, 1], [], []>} : vector<128x256xf32>, vector<256x32xf32>, vector<128x32xf32> -> vector<128x32xf32>
    %51 = vector.extract_strided_slice %10 {offsets = [0, 64], sizes = [128, 32], strides = [1, 1]} : vector<128x128xf32> to vector<128x32xf32>
    %52 = vector.extract_strided_slice %15 {offsets = [0, 64], sizes = [256, 32], strides = [1, 1]} : vector<256x128xf32> to vector<256x32xf32>
    %53 = vector.extract_strided_slice %20 {offsets = [0, 64], sizes = [256, 32], strides = [1, 1]} : vector<256x128xf32> to vector<256x32xf32>
    %cst_28 = arith.constant dense<0.000000e+00> : vector<128x256xf32>
    %54 = tpu.matmul %51, %52, %cst_28 {dimension_numbers = #tpu.dot_dimension_numbers<[1], [1], [0], [0], [0, 0, 1, 0], [], []>} : vector<128x32xf32>, vector<256x32xf32>, vector<128x256xf32> -> vector<128x256xf32>
    %cst_29 = arith.constant dense<0xFF800000> : vector<128xf32>
    %55 = vector.multi_reduction <maximumf>, %54, %cst_29 [1] : vector<128x256xf32> to vector<128xf32>
    %56 = vector.shape_cast %55 : vector<128xf32> to vector<128x1xf32>
    %57 = vector.broadcast %56 : vector<128x1xf32> to vector<128x256xf32>
    %58 = arith.subf %54, %57 : vector<128x256xf32>
    %59 = math.exp %58 : vector<128x256xf32>
    %cst_30 = arith.constant dense<0.000000e+00> : vector<128xf32>
    %60 = vector.multi_reduction <add>, %59, %cst_30 [1] : vector<128x256xf32> to vector<128xf32>
    %61 = vector.shape_cast %60 : vector<128xf32> to vector<128x1xf32>
    %62 = tpu.reciprocal %61 : vector<128x1xf32> -> vector<128x1xf32>
    %63 = vector.broadcast %62 : vector<128x1xf32> to vector<128x256xf32>
    %64 = arith.mulf %59, %63 : vector<128x256xf32>
    %cst_31 = arith.constant dense<0.000000e+00> : vector<128x32xf32>
    %65 = tpu.matmul %64, %53, %cst_31 {dimension_numbers = #tpu.dot_dimension_numbers<[1], [0], [0], [1], [0, 0, 1, 1], [], []>} : vector<128x256xf32>, vector<256x32xf32>, vector<128x32xf32> -> vector<128x32xf32>
    %66 = vector.extract_strided_slice %10 {offsets = [0, 96], sizes = [128, 32], strides = [1, 1]} : vector<128x128xf32> to vector<128x32xf32>
    %67 = vector.extract_strided_slice %15 {offsets = [0, 96], sizes = [256, 32], strides = [1, 1]} : vector<256x128xf32> to vector<256x32xf32>
    %68 = vector.extract_strided_slice %20 {offsets = [0, 96], sizes = [256, 32], strides = [1, 1]} : vector<256x128xf32> to vector<256x32xf32>
    %cst_32 = arith.constant dense<0.000000e+00> : vector<128x256xf32>
    %69 = tpu.matmul %66, %67, %cst_32 {dimension_numbers = #tpu.dot_dimension_numbers<[1], [1], [0], [0], [0, 0, 1, 0], [], []>} : vector<128x32xf32>, vector<256x32xf32>, vector<128x256xf32> -> vector<128x256xf32>
    %cst_33 = arith.constant dense<0xFF800000> : vector<128xf32>
    %70 = vector.multi_reduction <maximumf>, %69, %cst_33 [1] : vector<128x256xf32> to vector<128xf32>
    %71 = vector.shape_cast %70 : vector<128xf32> to vector<128x1xf32>
    %72 = vector.broadcast %71 : vector<128x1xf32> to vector<128x256xf32>
    %73 = arith.subf %69, %72 : vector<128x256xf32>
    %74 = math.exp %73 : vector<128x256xf32>
    %cst_34 = arith.constant dense<0.000000e+00> : vector<128xf32>
    %75 = vector.multi_reduction <add>, %74, %cst_34 [1] : vector<128x256xf32> to vector<128xf32>
    %76 = vector.shape_cast %75 : vector<128xf32> to vector<128x1xf32>
    %77 = tpu.reciprocal %76 : vector<128x1xf32> -> vector<128x1xf32>
    %78 = vector.broadcast %77 : vector<128x1xf32> to vector<128x256xf32>
    %79 = arith.mulf %74, %78 : vector<128x256xf32>
    %cst_35 = arith.constant dense<0.000000e+00> : vector<128x32xf32>
    %80 = tpu.matmul %79, %68, %cst_35 {dimension_numbers = #tpu.dot_dimension_numbers<[1], [0], [0], [1], [0, 0, 1, 1], [], []>} : vector<128x256xf32>, vector<256x32xf32>, vector<128x32xf32> -> vector<128x32xf32>
    %81 = tpu.concatenate %35, %50, %65, %80 in 1 : vector<128x32xf32>, vector<128x32xf32>, vector<128x32xf32>, vector<128x32xf32> -> vector<128x128xf32>
    %c0_36 = arith.constant 0 : index
    %c0_37 = arith.constant 0 : index
    %82 = vector.load %arg10[%c0_36, %c0_37] : memref<128x128xf32, #tpu.memory_space<vmem>>, vector<128x128xf32>
    %cst_38 = arith.constant dense<0.000000e+00> : vector<128x128xf32>
    %83 = tpu.matmul %81, %82, %cst_38 {dimension_numbers = #tpu.dot_dimension_numbers<[1], [0], [0], [1], [0, 0, 1, 1], [], []>} : vector<128x128xf32>, vector<128x128xf32>, vector<128x128xf32> -> vector<128x128xf32>
    %c0_39 = arith.constant 0 : index
    %c0_40 = arith.constant 0 : index
    %84 = vector.load %arg11[%c0_39, %c0_40] : memref<1x128xf32, #tpu.memory_space<vmem>>, vector<1x128xf32>
    %85 = vector.broadcast %84 : vector<1x128xf32> to vector<128x128xf32>
    %86 = arith.addf %83, %85 : vector<128x128xf32>
    %87 = arith.addf %1, %86 : vector<128x128xf32>
    %cst_41 = arith.constant dense<0.000000e+00> : vector<128xf32>
    %88 = vector.multi_reduction <add>, %87, %cst_41 [1] : vector<128x128xf32> to vector<128xf32>
    %89 = vector.shape_cast %88 : vector<128xf32> to vector<128x1xf32>
    %cst_42 = arith.constant 1.280000e+02 : f32
    %90 = vector.broadcast %cst_42 : f32 to vector<128x1xf32>
    %91 = arith.divf %89, %90 : vector<128x1xf32>
    %92 = vector.broadcast %91 : vector<128x1xf32> to vector<128x128xf32>
    %93 = arith.subf %87, %92 : vector<128x128xf32>
    %94 = arith.mulf %93, %93 : vector<128x128xf32>
    %cst_43 = arith.constant dense<0.000000e+00> : vector<128xf32>
    %95 = vector.multi_reduction <add>, %94, %cst_43 [1] : vector<128x128xf32> to vector<128xf32>
    %96 = vector.shape_cast %95 : vector<128xf32> to vector<128x1xf32>
    %cst_44 = arith.constant 1.280000e+02 : f32
    %97 = vector.broadcast %cst_44 : f32 to vector<128x1xf32>
    %98 = arith.divf %96, %97 : vector<128x1xf32>
    %cst_45 = arith.constant 9.99999974E-6 : f32
    %99 = vector.broadcast %cst_45 : f32 to vector<128x1xf32>
    %100 = arith.addf %98, %99 : vector<128x1xf32>
    %101 = math.rsqrt %100 : vector<128x1xf32>
    %102 = vector.broadcast %101 : vector<128x1xf32> to vector<128x128xf32>
    %103 = arith.mulf %93, %102 : vector<128x128xf32>
    %c0_46 = arith.constant 0 : index
    %c0_47 = arith.constant 0 : index
    %104 = vector.load %arg12[%c0_46, %c0_47] : memref<1x128xf32, #tpu.memory_space<vmem>>, vector<1x128xf32>
    %105 = vector.broadcast %104 : vector<1x128xf32> to vector<128x128xf32>
    %106 = arith.mulf %103, %105 : vector<128x128xf32>
    %c0_48 = arith.constant 0 : index
    %c0_49 = arith.constant 0 : index
    %107 = vector.load %arg13[%c0_48, %c0_49] : memref<1x128xf32, #tpu.memory_space<vmem>>, vector<1x128xf32>
    %108 = vector.broadcast %107 : vector<1x128xf32> to vector<128x128xf32>
    %109 = arith.addf %106, %108 : vector<128x128xf32>
    %c0_50 = arith.constant 0 : index
    %c0_51 = arith.constant 0 : index
    %c0_52 = arith.constant 0 : index
    %110 = vector.load %arg14[%c0_50, %c0_51, %c0_52] : memref<1x128x128xf32, #tpu.memory_space<vmem>>, vector<1x128x128xf32>
    %111 = vector.shape_cast %110 : vector<1x128x128xf32> to vector<128x128xf32>
    %112 = vector.shape_cast %109 : vector<128x128xf32> to vector<1x128x128xf32>
    tpu.vector_store %arg14[%c0_50, %c0_51, %c0_52], %112 {strides = array<i32>} : memref<1x128x128xf32, #tpu.memory_space<vmem>>, vector<1x128x128xf32>,
    return
  }
  func.func @transform_0(%arg0: i32, %arg1: i32) -> (i32, i32, i32) {
    %c0_i32 = arith.constant 0 : i32
    %c0_i32_0 = arith.constant 0 : i32
    return %arg0, %arg1, %c0_i32 : i32, i32, i32
  }
  func.func @transform_1(%arg0: i32, %arg1: i32) -> (i32, i32, i32) {
    %c0_i32 = arith.constant 0 : i32
    %c0_i32_0 = arith.constant 0 : i32
    %c0_i32_1 = arith.constant 0 : i32
    return %arg0, %c0_i32, %c0_i32_0 : i32, i32, i32
  }
  func.func @transform_2(%arg0: i32, %arg1: i32) -> (i32, i32) {
    %c0_i32 = arith.constant 0 : i32
    %c0_i32_0 = arith.constant 0 : i32
    %c0_i32_1 = arith.constant 0 : i32
    return %c0_i32, %c0_i32_0 : i32, i32
  }
  func.func @transform_3(%arg0: i32, %arg1: i32) -> (i32, i32) {
    %c0_i32 = arith.constant 0 : i32
    %c0_i32_0 = arith.constant 0 : i32
    %c0_i32_1 = arith.constant 0 : i32
    return %c0_i32, %c0_i32_0 : i32, i32
  }
  func.func @transform_4(%arg0: i32, %arg1: i32) -> (i32, i32) {
    %c0_i32 = arith.constant 0 : i32
    %c0_i32_0 = arith.constant 0 : i32
    %c0_i32_1 = arith.constant 0 : i32
    return %c0_i32, %c0_i32_0 : i32, i32
  }
  func.func @transform_5(%arg0: i32, %arg1: i32) -> (i32, i32) {
    %c0_i32 = arith.constant 0 : i32
    %c0_i32_0 = arith.constant 0 : i32
    %c0_i32_1 = arith.constant 0 : i32
    return %c0_i32, %c0_i32_0 : i32, i32
  }
  func.func @transform_6(%arg0: i32, %arg1: i32) -> (i32, i32) {
    %c0_i32 = arith.constant 0 : i32
    %c0_i32_0 = arith.constant 0 : i32
    %c0_i32_1 = arith.constant 0 : i32
    return %c0_i32, %c0_i32_0 : i32, i32
  }
  func.func @transform_7(%arg0: i32, %arg1: i32) -> (i32, i32) {
    %c0_i32 = arith.constant 0 : i32
    %c0_i32_0 = arith.constant 0 : i32
    %c0_i32_1 = arith.constant 0 : i32
    return %c0_i32, %c0_i32_0 : i32, i32
  }
  func.func @transform_8(%arg0: i32, %arg1: i32) -> (i32, i32) {
    %c0_i32 = arith.constant 0 : i32
    %c0_i32_0 = arith.constant 0 : i32
    %c0_i32_1 = arith.constant 0 : i32
    return %c0_i32, %c0_i32_0 : i32, i32
  }
  func.func @transform_9(%arg0: i32, %arg1: i32) -> (i32, i32) {
    %c0_i32 = arith.constant 0 : i32
    %c0_i32_0 = arith.constant 0 : i32
    %c0_i32_1 = arith.constant 0 : i32
    return %c0_i32, %c0_i32_0 : i32, i32
  }
  func.func @transform_10(%arg0: i32, %arg1: i32) -> (i32, i32) {
    %c0_i32 = arith.constant 0 : i32
    %c0_i32_0 = arith.constant 0 : i32
    %c0_i32_1 = arith.constant 0 : i32
    return %c0_i32, %c0_i32_0 : i32, i32
  }
  func.func @transform_11(%arg0: i32, %arg1: i32) -> (i32, i32) {
    %c0_i32 = arith.constant 0 : i32
    %c0_i32_0 = arith.constant 0 : i32
    %c0_i32_1 = arith.constant 0 : i32
    return %c0_i32, %c0_i32_0 : i32, i32
  }
  func.func @transform_12(%arg0: i32, %arg1: i32) -> (i32, i32, i32) {
    %c0_i32 = arith.constant 0 : i32
    %c0_i32_0 = arith.constant 0 : i32
    return %arg0, %arg1, %c0_i32 : i32, i32, i32
  }
}

</mosaic_0001>

<llo_original>
// kernel: tpu_custom_call.1
$region0: #{tpu_custom_call.1}
  #allocation0 [shape = 'u32[]', space=smem, size = 0x4, offset = 0x4, fixed_abs, tag = 'smem constant byte address 0x4 - core index']
  #allocation1 [shape = 'u32[72,128]{1,0:T(1,128)}', space=vmem, size = 0x9000, scoped, tag = 'internal scratch']
  %s0 = inlined_call_operand.hbm [shape: f32[2,256,128], index: 0, kind: input, shape index: {}]
  %s1 = inlined_call_operand.hbm [shape: f32[2,256,128], index: 1, kind: input, shape index: {}]
  %s2 = inlined_call_operand.hbm [shape: f32[128,128], index: 2, kind: input, shape index: {}]
  %s3 = inlined_call_operand.vmem [shape: f32[1,128], index: 3, kind: input, shape index: {}]
  %s4 = inlined_call_operand.hbm [shape: f32[128,128], index: 4, kind: input, shape index: {}]
  %s5 = inlined_call_operand.vmem [shape: f32[1,128], index: 5, kind: input, shape index: {}]
  %s6 = inlined_call_operand.hbm [shape: f32[128,128], index: 6, kind: input, shape index: {}]
  %s7 = inlined_call_operand.vmem [shape: f32[1,128], index: 7, kind: input, shape index: {}]
  %s8 = inlined_call_operand.hbm [shape: f32[128,128], index: 8, kind: input, shape index: {}]
  %s9 = inlined_call_operand.vmem [shape: f32[1,128], index: 9, kind: input, shape index: {}]
  %s10 = inlined_call_operand.vmem [shape: f32[1,128], index: 10, kind: input, shape index: {}]
  %s11 = inlined_call_operand.vmem [shape: f32[1,128], index: 11, kind: input, shape index: {}]
  %s12 = inlined_call_operand.hbm [shape: f32[2,256,128], index: 12, kind: output, shape index: {}]
  %s13 = sld [smem:[#allocation0]]
  $region105: #{tpu_custom_call.1} parent=0
    _
  %s15 = ssub.s32 1, %s13
  %s16 = scalar_select 0, %s15, %s13
  $region1: #{tpu_custom_call.1} parent=0
    #allocation2 [shape = 'u8[131072]{0}', space=vmem, size = 0x20000, scoped, tag = 'input window, operand 0']
    #allocation3 [shape = 's32[2]{0}', space=sflag, size = 0x8, scoped, tag = 'scoped memory for tpu_custom_call.1']
    #allocation4 [shape = 's32[2]{0}', space=sflag, size = 0x8, scoped, tag = 'scoped memory for tpu_custom_call.1']
    #allocation5 [shape = 'u8[262144]{0}', space=vmem, size = 0x40000, scoped, tag = 'input window, operand 1']
    #allocation6 [shape = 's32[2]{0}', space=sflag, size = 0x8, scoped, tag = 'scoped memory for tpu_custom_call.1']
    #allocation7 [shape = 'u8[65536]{0}', space=vmem, size = 0x10000, scoped, tag = 'input window, operand 2, single buffered']
    #allocation8 [shape = 'u8[65536]{0}', space=vmem, size = 0x10000, scoped, tag = 'input window, operand 4, single buffered']
    #allocation9 [shape = 's32[1]{0}', space=sflag, size = 0x4, scoped, tag = 'scoped memory for tpu_custom_call.1']
    #allocation10 [shape = 'u8[65536]{0}', space=vmem, size = 0x10000, scoped, tag = 'input window, operand 6, single buffered']
    #allocation11 [shape = 'u8[65536]{0}', space=vmem, size = 0x10000, scoped, tag = 'input window, operand 8, single buffered']
    #allocation12 [shape = 's32[1]{0}', space=sflag, size = 0x4, scoped, tag = 'scoped memory for tpu_custom_call.1']
    #allocation13 [shape = 'u8[131072]{0}', space=vmem, size = 0x20000, scoped, tag = 'output window, operand 0']
    %17 = vsyncpa [#allocation3], 0
    %s18 = scalar_lea.sflag [#allocation3], 1
    %19 = vsyncpa %s18, 0
    %20 = vsyncpa [#allocation6], 0
    %s21 = scalar_lea.sflag [#allocation6], 1
    %22 = vsyncpa %s21, 0
    %23 = vsyncpa [#allocation9], 0
    %24 = vsyncpa [#allocation12], 0
    %25 = vsyncpa [#allocation4], 0
    %s26 = scalar_lea.sflag [#allocation4], 1
    %27 = vsyncpa %s26, 0
    loop: start=0, step=1, limit=6
    $region2: #{tpu_custom_call.1} parent=1 // loop_pre_header
      _
    $region3: #{tpu_custom_call.1} parent=1 // loop_header
      %s29 = sphi 0, %s33
      %p30 = scmp.ge.s32.totalorder %s29, 6
      %s36 = sphi 0, %s48
      %s37 = sphi 0, %s44
      %s38 = sphi 0, %s36
      %s39 = sphi 0, %s37
      %s40 = sphi 0, %s38
      %s41 = sphi 0, %s39
      %s53 = sphi 0, %s55
      %s56 = sphi 0, %s53
      %s57 = sphi 0, %s56
      %s73 = sphi 0, %s57
      %s79 = sphi 0, %s81
      %s82 = sphi 0, %s79
      %s83 = sphi 0, %s82
      %s99 = sphi 0, %s83
      %s103 = sphi 0, %s103
      %s105 = sphi 0, %s103
      %s106 = sphi 0, %s105
      %s120 = sphi 0, %s106
      %s124 = sphi 0, %s124
      %s126 = sphi 0, %s124
      %s127 = sphi 0, %s126
      %s141 = sphi 0, %s127
      %s145 = sphi 0, %s145
      %s147 = sphi 0, %s145
      %s148 = sphi 0, %s147
      %s162 = sphi 0, %s148
      %s166 = sphi 0, %s166
      %s168 = sphi 0, %s166
      %s169 = sphi 0, %s168
      %s183 = sphi 0, %s169
      %s187 = sphi 0, %s187
      %s189 = sphi 0, %s187
      %s190 = sphi 0, %s189
      %s204 = sphi 0, %s190
      %s208 = sphi 0, %s208
      %s210 = sphi 0, %s208
      %s211 = sphi 0, %s210
      %s225 = sphi 0, %s211
      %s229 = sphi 0, %s229
      %s231 = sphi 0, %s229
      %s232 = sphi 0, %s231
      %s246 = sphi 0, %s232
      %s250 = sphi 0, %s250
      %s252 = sphi 0, %s250
      %s253 = sphi 0, %s252
      %s267 = sphi 0, %s253
      %s271 = sphi 0, %s271
      %s273 = sphi 0, %s271
      %s274 = sphi 0, %s273
      %s288 = sphi 0, %s274
      %s292 = sphi 0, %s292
      %s294 = sphi 0, %s292
      %s295 = sphi 0, %s294
      %s309 = sphi 0, %s295
      %s317 = sphi 0, %s319
      %s320 = sphi 0, %s317
      %s321 = sphi 0, %s320
      %s337 = sphi 0, %s321
    $region4: #{tpu_custom_call.1} parent=1 // loop_header_branch
      %32 = sbr.rel (%p30) target = $region8
    $region5: #{tpu_custom_call.1} parent=1 // loop_body
      %s34 = ssub.s32 %s29, 1
      %s35 = ssub.s32 %s29, 2
      %s42 = sadd.s32 1, %s37
      %p43 = scmp.ge.s32.totalorder %s42, 2
      %s44 = scalar_select %p43, 0, %s42
      %s45 = sadd.s32 1, %s36
      %s46 = scalar_select %p43, %s45, %s36
      %p47 = scmp.ge.s32.totalorder %s46, 2
      %s48 = scalar_select %p47, 0, %s46
      %s49 = ssub.s32 %s36, %s48
      %s50 = ssub.s32 %s37, %s44
      %s51 = sor.u32 %s49, %s50
      %p52 = scmp.eq.s32.totalorder %s51, 0
      %s54 = sadd.s32 %s53, 1
      %s55 = scalar_select %p52, %s53, %s54
      %p58 = pneg %p52
      %p59 = scmp.eq.s32.totalorder %s29, 3
      %p60 = por %p58, %p59
      %p61 = scmp.ne.s32.totalorder %s53, %s56
      %p62 = scmp.eq.s32.totalorder %s29, 0
      %p63 = por %p61, %p62
      %p64 = scmp.ne.s32.totalorder %s53, %s56
      %p65 = scmp.eq.s32.totalorder %s34, 3
      %p66 = por %p64, %p65
      %p67 = scmp.ne.s32.totalorder %s56, %s57
      %p68 = scmp.eq.s32.totalorder %s34, 0
      %p69 = por %p67, %p68
      %p70 = scmp.ne.s32.totalorder %s56, %s57
      %p71 = scmp.eq.s32.totalorder %s35, 3
      %p72 = por %p70, %p71
      %p74 = scmp.ne.s32.totalorder %s57, %s73
      %p75 = scmp.eq.s32.totalorder %s35, 0
      %p76 = por %p74, %p75
      %s77 = ssub.s32 %s36, %s48
      %p78 = scmp.eq.s32.totalorder %s77, 0
      %s80 = sadd.s32 %s79, 1
      %s81 = scalar_select %p78, %s79, %s80
      %p84 = pneg %p78
      %p85 = scmp.eq.s32.totalorder %s29, 3
      %p86 = por %p84, %p85
      %p87 = scmp.ne.s32.totalorder %s79, %s82
      %p88 = scmp.eq.s32.totalorder %s29, 0
      %p89 = por %p87, %p88
      %p90 = scmp.ne.s32.totalorder %s79, %s82
      %p91 = scmp.eq.s32.totalorder %s34, 3
      %p92 = por %p90, %p91
      %p93 = scmp.ne.s32.totalorder %s82, %s83
      %p94 = scmp.eq.s32.totalorder %s34, 0
      %p95 = por %p93, %p94
      %p96 = scmp.ne.s32.totalorder %s82, %s83
      %p97 = scmp.eq.s32.totalorder %s35, 3
      %p98 = por %p96, %p97
      %p100 = scmp.ne.s32.totalorder %s83, %s99
      %p101 = scmp.eq.s32.totalorder %s35, 0
      %p102 = por %p100, %p101
      %s104 = sadd.s32 %s103, 1
      %p107 = scmp.eq.s32.totalorder %s29, 3
      %p108 = scmp.ne.s32.totalorder %s103, %s105
      %p109 = scmp.eq.s32.totalorder %s29, 0
      %p110 = por %p108, %p109
      %p111 = scmp.ne.s32.totalorder %s103, %s105
      %p112 = scmp.eq.s32.totalorder %s34, 3
      %p113 = por %p111, %p112
      %p114 = scmp.ne.s32.totalorder %s105, %s106
      %p115 = scmp.eq.s32.totalorder %s34, 0
      %p116 = por %p114, %p115
      %p117 = scmp.ne.s32.totalorder %s105, %s106
      %p118 = scmp.eq.s32.totalorder %s35, 3
      %p119 = por %p117, %p118
      %p121 = scmp.ne.s32.totalorder %s106, %s120
      %p122 = scmp.eq.s32.totalorder %s35, 0
      %p123 = por %p121, %p122
      %s125 = sadd.s32 %s124, 1
      %p128 = scmp.eq.s32.totalorder %s29, 3
      %p129 = scmp.ne.s32.totalorder %s124, %s126
      %p130 = scmp.eq.s32.totalorder %s29, 0
      %p131 = por %p129, %p130
      %p132 = scmp.ne.s32.totalorder %s124, %s126
      %p133 = scmp.eq.s32.totalorder %s34, 3
      %p134 = por %p132, %p133
      %p135 = scmp.ne.s32.totalorder %s126, %s127
      %p136 = scmp.eq.s32.totalorder %s34, 0
      %p137 = por %p135, %p136
      %p138 = scmp.ne.s32.totalorder %s126, %s127
      %p139 = scmp.eq.s32.totalorder %s35, 3
      %p140 = por %p138, %p139
      %p142 = scmp.ne.s32.totalorder %s127, %s141
      %p143 = scmp.eq.s32.totalorder %s35, 0
      %p144 = por %p142, %p143
      %s146 = sadd.s32 %s145, 1
      %p149 = scmp.eq.s32.totalorder %s29, 3
      %p150 = scmp.ne.s32.totalorder %s145, %s147
      %p151 = scmp.eq.s32.totalorder %s29, 0
      %p152 = por %p150, %p151
      %p153 = scmp.ne.s32.totalorder %s145, %s147
      %p154 = scmp.eq.s32.totalorder %s34, 3
      %p155 = por %p153, %p154
      %p156 = scmp.ne.s32.totalorder %s147, %s148
      %p157 = scmp.eq.s32.totalorder %s34, 0
      %p158 = por %p156, %p157
      %p159 = scmp.ne.s32.totalorder %s147, %s148
      %p160 = scmp.eq.s32.totalorder %s35, 3
      %p161 = por %p159, %p160
      %p163 = scmp.ne.s32.totalorder %s148, %s162
      %p164 = scmp.eq.s32.totalorder %s35, 0
      %p165 = por %p163, %p164
      %s167 = sadd.s32 %s166, 1
      %p170 = scmp.eq.s32.totalorder %s29, 3
      %p171 = scmp.ne.s32.totalorder %s166, %s168
      %p172 = scmp.eq.s32.totalorder %s29, 0
      %p173 = por %p171, %p172
      %p174 = scmp.ne.s32.totalorder %s166, %s168
      %p175 = scmp.eq.s32.totalorder %s34, 3
      %p176 = por %p174, %p175
      %p177 = scmp.ne.s32.totalorder %s168, %s169
      %p178 = scmp.eq.s32.totalorder %s34, 0
      %p179 = por %p177, %p178
      %p180 = scmp.ne.s32.totalorder %s168, %s169
      %p181 = scmp.eq.s32.totalorder %s35, 3
      %p182 = por %p180, %p181
      %p184 = scmp.ne.s32.totalorder %s169, %s183
      %p185 = scmp.eq.s32.totalorder %s35, 0
      %p186 = por %p184, %p185
      %s188 = sadd.s32 %s187, 1
      %p191 = scmp.eq.s32.totalorder %s29, 3
      %p192 = scmp.ne.s32.totalorder %s187, %s189
      %p193 = scmp.eq.s32.totalorder %s29, 0
      %p194 = por %p192, %p193
      %p195 = scmp.ne.s32.totalorder %s187, %s189
      %p196 = scmp.eq.s32.totalorder %s34, 3
      %p197 = por %p195, %p196
      %p198 = scmp.ne.s32.totalorder %s189, %s190
      %p199 = scmp.eq.s32.totalorder %s34, 0
      %p200 = por %p198, %p199
      %p201 = scmp.ne.s32.totalorder %s189, %s190
      %p202 = scmp.eq.s32.totalorder %s35, 3
      %p203 = por %p201, %p202
      %p205 = scmp.ne.s32.totalorder %s190, %s204
      %p206 = scmp.eq.s32.totalorder %s35, 0
      %p207 = por %p205, %p206
      %s209 = sadd.s32 %s208, 1
      %p212 = scmp.eq.s32.totalorder %s29, 3
      %p213 = scmp.ne.s32.totalorder %s208, %s210
      %p214 = scmp.eq.s32.totalorder %s29, 0
      %p215 = por %p213, %p214
      %p216 = scmp.ne.s32.totalorder %s208, %s210
      %p217 = scmp.eq.s32.totalorder %s34, 3
      %p218 = por %p216, %p217
      %p219 = scmp.ne.s32.totalorder %s210, %s211
      %p220 = scmp.eq.s32.totalorder %s34, 0
      %p221 = por %p219, %p220
      %p222 = scmp.ne.s32.totalorder %s210, %s211
      %p223 = scmp.eq.s32.totalorder %s35, 3
      %p224 = por %p222, %p223
      %p226 = scmp.ne.s32.totalorder %s211, %s225
      %p227 = scmp.eq.s32.totalorder %s35, 0
      %p228 = por %p226, %p227
      %s230 = sadd.s32 %s229, 1
      %p233 = scmp.eq.s32.totalorder %s29, 3
      %p234 = scmp.ne.s32.totalorder %s229, %s231
      %p235 = scmp.eq.s32.totalorder %s29, 0
      %p236 = por %p234, %p235
      %p237 = scmp.ne.s32.totalorder %s229, %s231
      %p238 = scmp.eq.s32.totalorder %s34, 3
      %p239 = por %p237, %p238
      %p240 = scmp.ne.s32.totalorder %s231, %s232
      %p241 = scmp.eq.s32.totalorder %s34, 0
      %p242 = por %p240, %p241
      %p243 = scmp.ne.s32.totalorder %s231, %s232
      %p244 = scmp.eq.s32.totalorder %s35, 3
      %p245 = por %p243, %p244
      %p247 = scmp.ne.s32.totalorder %s232, %s246
      %p248 = scmp.eq.s32.totalorder %s35, 0
      %p249 = por %p247, %p248
      %s251 = sadd.s32 %s250, 1
      %p254 = scmp.eq.s32.totalorder %s29, 3
      %p255 = scmp.ne.s32.totalorder %s250, %s252
      %p256 = scmp.eq.s32.totalorder %s29, 0
      %p257 = por %p255, %p256
      %p258 = scmp.ne.s32.totalorder %s250, %s252
      %p259 = scmp.eq.s32.totalorder %s34, 3
      %p260 = por %p258, %p259
      %p261 = scmp.ne.s32.totalorder %s252, %s253
      %p262 = scmp.eq.s32.totalorder %s34, 0
      %p263 = por %p261, %p262
      %p264 = scmp.ne.s32.totalorder %s252, %s253
      %p265 = scmp.eq.s32.totalorder %s35, 3
      %p266 = por %p264, %p265
      %p268 = scmp.ne.s32.totalorder %s253, %s267
      %p269 = scmp.eq.s32.totalorder %s35, 0
      %p270 = por %p268, %p269
      %s272 = sadd.s32 %s271, 1
      %p275 = scmp.eq.s32.totalorder %s29, 3
      %p276 = scmp.ne.s32.totalorder %s271, %s273
      %p277 = scmp.eq.s32.totalorder %s29, 0
      %p278 = por %p276, %p277
      %p279 = scmp.ne.s32.totalorder %s271, %s273
      %p280 = scmp.eq.s32.totalorder %s34, 3
      %p281 = por %p279, %p280
      %p282 = scmp.ne.s32.totalorder %s273, %s274
      %p283 = scmp.eq.s32.totalorder %s34, 0
      %p284 = por %p282, %p283
      %p285 = scmp.ne.s32.totalorder %s273, %s274
      %p286 = scmp.eq.s32.totalorder %s35, 3
      %p287 = por %p285, %p286
      %p289 = scmp.ne.s32.totalorder %s274, %s288
      %p290 = scmp.eq.s32.totalorder %s35, 0
      %p291 = por %p289, %p290
      %s293 = sadd.s32 %s292, 1
      %p296 = scmp.eq.s32.totalorder %s29, 3
      %p297 = scmp.ne.s32.totalorder %s292, %s294
      %p298 = scmp.eq.s32.totalorder %s29, 0
      %p299 = por %p297, %p298
      %p300 = scmp.ne.s32.totalorder %s292, %s294
      %p301 = scmp.eq.s32.totalorder %s34, 3
      %p302 = por %p300, %p301
      %p303 = scmp.ne.s32.totalorder %s294, %s295
      %p304 = scmp.eq.s32.totalorder %s34, 0
      %p305 = por %p303, %p304
      %p306 = scmp.ne.s32.totalorder %s294, %s295
      %p307 = scmp.eq.s32.totalorder %s35, 3
      %p308 = por %p306, %p307
      %p310 = scmp.ne.s32.totalorder %s295, %s309
      %p311 = scmp.eq.s32.totalorder %s35, 0
      %p312 = por %p310, %p311
      %s313 = ssub.s32 %s36, %s48
      %s314 = ssub.s32 %s37, %s44
      %s315 = sor.u32 %s313, %s314
      %p316 = scmp.eq.s32.totalorder %s315, 0
      %s318 = sadd.s32 %s317, 1
      %s319 = scalar_select %p316, %s317, %s318
      %p322 = pneg %p316
      %p323 = scmp.eq.s32.totalorder %s29, 3
      %p324 = por %p322, %p323
      %p325 = scmp.ne.s32.totalorder %s317, %s320
      %p326 = scmp.eq.s32.totalorder %s29, 0
      %p327 = por %p325, %p326
      %p328 = scmp.ne.s32.totalorder %s317, %s320
      %p329 = scmp.eq.s32.totalorder %s34, 3
      %p330 = por %p328, %p329
      %p331 = scmp.ne.s32.totalorder %s320, %s321
      %p332 = scmp.eq.s32.totalorder %s34, 0
      %p333 = por %p331, %p332
      %p334 = scmp.ne.s32.totalorder %s320, %s321
      %p335 = scmp.eq.s32.totalorder %s35, 3
      %p336 = por %p334, %p335
      %p338 = scmp.ne.s32.totalorder %s321, %s337
      %p339 = scmp.eq.s32.totalorder %s35, 0
      %p340 = por %p338, %p339
      %p341 = scmp.le.s32.totalorder 1, %s29
      %p342 = scmp.lt.s32.totalorder %s29, 5
      %p343 = pnand %p341, %p342
      %p344 = pneg %p343
      // Predicated region
      $region9: #{tpu_custom_call.1} parent=5 // pred_check
        _
      $region10: #{tpu_custom_call.1} parent=5 // pred_check_branch
        %346 = sbr.rel (%p343) target = $region12
      $region11: #{tpu_custom_call.1} parent=5 // pred_region
        %s347 = ssub.s32 %s29, 1
        // Predicated region
        $region13: #{tpu_custom_call.1} parent=11 // pred_check
          %p348 = pneg %p116
        $region14: #{tpu_custom_call.1} parent=11 // pred_check_branch
          %350 = sbr.rel (%p348) target = $region16
        $region15: #{tpu_custom_call.1} parent=11 // pred_region
          %352 = vsyncadd [#allocation6], 0
          %s353 = sshll.u32 %s2, 4
          %s354 = int_to_ptr.hbm [resolvable:$true] %s353
          %s355 = sshll.u32 [#allocation7], 4
          %s356 = int_to_ptr.vmem [resolvable:$true] %s355
          %361 = dma.hbm_to_vmem [thread:$0]  %s354, 2048, %s356, [#allocation6], 128, 128, 8
        $region16: #{tpu_custom_call.1} parent=11 // pred_fallthru
          _
        // Predicated region
        $region17: #{tpu_custom_call.1} parent=11 // pred_check
          %p362 = pneg %p137
        $region18: #{tpu_custom_call.1} parent=11 // pred_check_branch
          %364 = sbr.rel (%p362) target = $region20
        $region19: #{tpu_custom_call.1} parent=11 // pred_region
          _
        $region20: #{tpu_custom_call.1} parent=11 // pred_fallthru
          _
        // Predicated region
        $region21: #{tpu_custom_call.1} parent=11 // pred_check
          %p365 = pneg %p158
        $region22: #{tpu_custom_call.1} parent=11 // pred_check_branch
          %367 = sbr.rel (%p365) target = $region24
        $region23: #{tpu_custom_call.1} parent=11 // pred_region
          %369 = vsyncadd [#allocation9], 0
          %s370 = sshll.u32 %s4, 4
          %s371 = int_to_ptr.hbm [resolvable:$true] %s370
          %s372 = sshll.u32 [#allocation8], 4
          %s373 = int_to_ptr.vmem [resolvable:$true] %s372
          %378 = dma.hbm_to_vmem [thread:$0]  %s371, 2048, %s373, [#allocation9], 128, 128, 8
        $region24: #{tpu_custom_call.1} parent=11 // pred_fallthru
          _
        // Predicated region
        $region25: #{tpu_custom_call.1} parent=11 // pred_check
          %p379 = pneg %p179
        $region26: #{tpu_custom_call.1} parent=11 // pred_check_branch
          %381 = sbr.rel (%p379) target = $region28
        $region27: #{tpu_custom_call.1} parent=11 // pred_region
          _
        $region28: #{tpu_custom_call.1} parent=11 // pred_fallthru
          _
        // Predicated region
        $region29: #{tpu_custom_call.1} parent=11 // pred_check
          %p382 = pneg %p200
        $region30: #{tpu_custom_call.1} parent=11 // pred_check_branch
          %384 = sbr.rel (%p382) target = $region32
        $region31: #{tpu_custom_call.1} parent=11 // pred_region
          %386 = vsyncadd [#allocation9], 0
          %s387 = sshll.u32 %s6, 4
          %s388 = int_to_ptr.hbm [resolvable:$true] %s387
          %s389 = sshll.u32 [#allocation10], 4
          %s390 = int_to_ptr.vmem [resolvable:$true] %s389
          %395 = dma.hbm_to_vmem [thread:$0]  %s388, 2048, %s390, [#allocation9], 128, 128, 8
        $region32: #{tpu_custom_call.1} parent=11 // pred_fallthru
          _
        // Predicated region
        $region33: #{tpu_custom_call.1} parent=11 // pred_check
          %p396 = pneg %p221
        $region34: #{tpu_custom_call.1} parent=11 // pred_check_branch
          %398 = sbr.rel (%p396) target = $region36
        $region35: #{tpu_custom_call.1} parent=11 // pred_region
          _
        $region36: #{tpu_custom_call.1} parent=11 // pred_fallthru
          _
        // Predicated region
        $region37: #{tpu_custom_call.1} parent=11 // pred_check
          %p399 = pneg %p242
        $region38: #{tpu_custom_call.1} parent=11 // pred_check_branch
          %401 = sbr.rel (%p399) target = $region40
        $region39: #{tpu_custom_call.1} parent=11 // pred_region
          %403 = vsyncadd [#allocation12], 0
          %s404 = sshll.u32 %s8, 4
          %s405 = int_to_ptr.hbm [resolvable:$true] %s404
          %s406 = sshll.u32 [#allocation11], 4
          %s407 = int_to_ptr.vmem [resolvable:$true] %s406
          %412 = dma.hbm_to_vmem [thread:$0]  %s405, 2048, %s407, [#allocation12], 128, 128, 8
        $region40: #{tpu_custom_call.1} parent=11 // pred_fallthru
          _
        // Predicated region
        $region41: #{tpu_custom_call.1} parent=11 // pred_check
          %p413 = pneg %p263
        $region42: #{tpu_custom_call.1} parent=11 // pred_check_branch
          %415 = sbr.rel (%p413) target = $region44
        $region43: #{tpu_custom_call.1} parent=11 // pred_region
          _
        $region44: #{tpu_custom_call.1} parent=11 // pred_fallthru
          _
        // Predicated region
        $region45: #{tpu_custom_call.1} parent=11 // pred_check
          %p416 = pneg %p284
        $region46: #{tpu_custom_call.1} parent=11 // pred_check_branch
          %418 = sbr.rel (%p416) target = $region48
        $region47: #{tpu_custom_call.1} parent=11 // pred_region
          _
        $region48: #{tpu_custom_call.1} parent=11 // pred_fallthru
          _
        // Predicated region
        $region49: #{tpu_custom_call.1} parent=11 // pred_check
          %p419 = pneg %p305
        $region50: #{tpu_custom_call.1} parent=11 // pred_check_branch
          %421 = sbr.rel (%p419) target = $region52
        $region51: #{tpu_custom_call.1} parent=11 // pred_region
          _
        $region52: #{tpu_custom_call.1} parent=11 // pred_fallthru
          _
      $region12: #{tpu_custom_call.1} parent=5 // pred_fallthru
        _
      %p422 = scmp.lt.s32.totalorder %s29, 4
      // Predicated region
      $region53: #{tpu_custom_call.1} parent=5 // pred_check
        %p423 = pneg %p422
      $region54: #{tpu_custom_call.1} parent=5 // pred_check_branch
        %425 = sbr.rel (%p423) target = $region56
      $region55: #{tpu_custom_call.1} parent=5 // pred_region
        // Predicated region
        $region57: #{tpu_custom_call.1} parent=55 // pred_check
          %p426 = pneg %p63
        $region58: #{tpu_custom_call.1} parent=55 // pred_check_branch
          %428 = sbr.rel (%p426) target = $region60
        $region59: #{tpu_custom_call.1} parent=55 // pred_region
          %s429 = sand.u32 %s53, 1
          %s430 = scalar_lea.sflag [#allocation3], %s429
          %s431 = sand.u32 %s53, 1
          %s432 = smul.addr %s431, 128
          %s433 = scalar_lea.vmem [#allocation2], %s432
          %s434 = smul.u32 16, %s37
          %436 = vsyncadd %s430, 0
          %s437 = smul.addr %s36, 32
          %s438 = sadd.s32 %s434, %s437
          %s439 = smul.addr %s438, 8
          %s440 = scalar_lea.hbm %s0, %s439
          %s441 = sshll.u32 %s440, 4
          %s442 = int_to_ptr.hbm [resolvable:$true] %s441
          %s443 = sshll.u32 %s433, 4
          %s444 = int_to_ptr.vmem [resolvable:$true] %s443
          %449 = dma.hbm_to_vmem [thread:$0]  %s442, 2048, %s444, %s430, 128, 128, 8
        $region60: #{tpu_custom_call.1} parent=55 // pred_fallthru
          _
        // Predicated region
        $region61: #{tpu_custom_call.1} parent=55 // pred_check
          %p450 = pneg %p89
        $region62: #{tpu_custom_call.1} parent=55 // pred_check_branch
          %452 = sbr.rel (%p450) target = $region64
        $region63: #{tpu_custom_call.1} parent=55 // pred_region
          %s453 = sand.u32 %s29, 1
          %s454 = scalar_lea.sflag [#allocation6], %s453
          %s455 = sand.u32 %s79, 1
          %s456 = smul.addr %s455, 256
          %s457 = scalar_lea.vmem [#allocation5], %s456
          %459 = vsyncadd %s454, 0
          %s460 = smul.addr %s36, 32
          %s461 = smul.addr %s460, 8
          %s462 = scalar_lea.hbm %s1, %s461
          %s463 = sshll.u32 %s462, 4
          %s464 = int_to_ptr.hbm [resolvable:$true] %s463
          %s465 = sshll.u32 %s457, 4
          %s466 = int_to_ptr.vmem [resolvable:$true] %s465
          %471 = dma.hbm_to_vmem [thread:$0]  %s464, 4096, %s466, %s454, 128, 128, 8
        $region64: #{tpu_custom_call.1} parent=55 // pred_fallthru
          _
      $region56: #{tpu_custom_call.1} parent=5 // pred_fallthru
        _
      %p472 = scmp.le.s32.totalorder 1, %s29
      %p473 = scmp.lt.s32.totalorder %s29, 5
      %p474 = pnand %p472, %p473
      %p475 = pneg %p474
      // Predicated region
      $region65: #{tpu_custom_call.1} parent=5 // pred_check
        _
      $region66: #{tpu_custom_call.1} parent=5 // pred_check_branch
        %477 = sbr.rel (%p474) target = $region68
      $region67: #{tpu_custom_call.1} parent=5 // pred_region
        %s478 = ssub.s32 %s29, 1
        %s479 = sand.u32 %s56, 1
        %s480 = scalar_lea.sflag [#allocation3], %s479
        %s481 = sand.u32 %s56, 1
        %s482 = smul.addr %s481, 128
        %s483 = scalar_lea.vmem [#allocation2], %s482
        // Predicated region
        $region69: #{tpu_custom_call.1} parent=67 // pred_check
          %p484 = pneg %p69
        $region70: #{tpu_custom_call.1} parent=67 // pred_check_branch
          %486 = sbr.rel (%p484) target = $region72
        $region71: #{tpu_custom_call.1} parent=67 // pred_region
          %488 = dma.done %s480, 2048
        $region72: #{tpu_custom_call.1} parent=67 // pred_fallthru
          _
        %s489 = sand.u32 %s34, 1
        %s490 = scalar_lea.sflag [#allocation6], %s489
        %s491 = sand.u32 %s82, 1
        %s492 = smul.addr %s491, 256
        %s493 = scalar_lea.vmem [#allocation5], %s492
        // Predicated region
        $region73: #{tpu_custom_call.1} parent=67 // pred_check
          %p494 = pneg %p95
        $region74: #{tpu_custom_call.1} parent=67 // pred_check_branch
          %496 = sbr.rel (%p494) target = $region76
        $region75: #{tpu_custom_call.1} parent=67 // pred_region
          %498 = dma.done %s490, 4096
        $region76: #{tpu_custom_call.1} parent=67 // pred_fallthru
          _
        // Predicated region
        $region77: #{tpu_custom_call.1} parent=67 // pred_check
          %p499 = pneg %p116
        $region78: #{tpu_custom_call.1} parent=67 // pred_check_branch
          %501 = sbr.rel (%p499) target = $region80
        $region79: #{tpu_custom_call.1} parent=67 // pred_region
          %503 = dma.done [#allocation6], 2048
        $region80: #{tpu_custom_call.1} parent=67 // pred_fallthru
          _
        // Predicated region
        $region81: #{tpu_custom_call.1} parent=67 // pred_check
          %p504 = pneg %p158
        $region82: #{tpu_custom_call.1} parent=67 // pred_check_branch
          %506 = sbr.rel (%p504) target = $region84
        $region83: #{tpu_custom_call.1} parent=67 // pred_region
          %508 = dma.done [#allocation9], 2048
        $region84: #{tpu_custom_call.1} parent=67 // pred_fallthru
          _
        // Predicated region
        $region85: #{tpu_custom_call.1} parent=67 // pred_check
          %p509 = pneg %p200
        $region86: #{tpu_custom_call.1} parent=67 // pred_check_branch
          %511 = sbr.rel (%p509) target = $region88
        $region87: #{tpu_custom_call.1} parent=67 // pred_region
          %513 = dma.done [#allocation9], 2048
        $region88: #{tpu_custom_call.1} parent=67 // pred_fallthru
          _
        // Predicated region
        $region89: #{tpu_custom_call.1} parent=67 // pred_check
          %p514 = pneg %p242
        $region90: #{tpu_custom_call.1} parent=67 // pred_check_branch
          %516 = sbr.rel (%p514) target = $region92
        $region91: #{tpu_custom_call.1} parent=67 // pred_region
          %518 = dma.done [#allocation12], 2048
        $region92: #{tpu_custom_call.1} parent=67 // pred_fallthru
          _
        %s519 = sand.u32 %s56, 1
        %s520 = scalar_lea.sflag [#allocation3], %s519
        %s521 = sand.u32 %s56, 1
        %s522 = smul.addr %s521, 128
        %s523 = scalar_lea.vmem [#allocation2], %s522
        %p524 = pneg %p69
        %p525 = pneg %p66
        %s526 = sand.u32 %s34, 1
        %s527 = scalar_lea.sflag [#allocation6], %s526
        %s528 = sand.u32 %s82, 1
        %s529 = smul.addr %s528, 256
        %s530 = scalar_lea.vmem [#allocation5], %s529
        %p531 = pneg %p95
        %p532 = pneg %p92
        %p533 = pneg %p116
        %p534 = pneg %p113
        %p535 = pneg %p137
        %p536 = pneg %p134
        %p537 = pneg %p158
        %p538 = pneg %p155
        %p539 = pneg %p179
        %p540 = pneg %p176
        %p541 = pneg %p200
        %p542 = pneg %p197
        %p543 = pneg %p221
        %p544 = pneg %p218
        %p545 = pneg %p242
        %p546 = pneg %p239
        %p547 = pneg %p263
        %p548 = pneg %p260
        %p549 = pneg %p284
        %p550 = pneg %p281
        %p551 = pneg %p305
        %p552 = pneg %p302
        %p553 = pneg %p333
        %p554 = pneg %p330
        %s555 = sand.u32 %s320, 1
        %s556 = scalar_lea.sflag [#allocation4], %s555
        %s557 = sand.u32 %s320, 1
        %s558 = smul.addr %s557, 128
        %s559 = scalar_lea.vmem [#allocation13], %s558
        %s560 = smul.u32 16, %s39
        %s561 = smul.u32 16, %s39
        %v562 = vld [vmem:[%s483] sm:$0xff]
        %v563 = vld [vmem:[%s483 + $0x8] sm:$0xff]
        %v564 = vld [vmem:[%s483 + $0x10] sm:$0xff]
        %v565 = vld [vmem:[%s483 + $0x18] sm:$0xff]
        %v566 = vld [vmem:[%s483 + $0x20] sm:$0xff]
        %v567 = vld [vmem:[%s483 + $0x28] sm:$0xff]
        %v568 = vld [vmem:[%s483 + $0x30] sm:$0xff]
        %v569 = vld [vmem:[%s483 + $0x38] sm:$0xff]
        %v570 = vld [vmem:[%s483 + $0x40] sm:$0xff]
        %v571 = vld [vmem:[%s483 + $0x48] sm:$0xff]
        %v572 = vld [vmem:[%s483 + $0x50] sm:$0xff]
        %v573 = vld [vmem:[%s483 + $0x58] sm:$0xff]
        %v574 = vld [vmem:[%s483 + $0x60] sm:$0xff]
        %v575 = vld [vmem:[%s483 + $0x68] sm:$0xff]
        %v576 = vld [vmem:[%s483 + $0x70] sm:$0xff]
        %v577 = vld [vmem:[%s483 + $0x78] sm:$0xff]
        %v578 = vld [vmem:[%s493] sm:$0xff]
        %v579 = vld [vmem:[%s493 + $0x8] sm:$0xff]
        %v580 = vld [vmem:[%s493 + $0x10] sm:$0xff]
        %v581 = vld [vmem:[%s493 + $0x18] sm:$0xff]
        %v582 = vld [vmem:[%s493 + $0x20] sm:$0xff]
        %v583 = vld [vmem:[%s493 + $0x28] sm:$0xff]
        %v584 = vld [vmem:[%s493 + $0x30] sm:$0xff]
        %v585 = vld [vmem:[%s493 + $0x38] sm:$0xff]
        %v586 = vld [vmem:[%s493 + $0x40] sm:$0xff]
        %v587 = vld [vmem:[%s493 + $0x48] sm:$0xff]
        %v588 = vld [vmem:[%s493 + $0x50] sm:$0xff]
        %v589 = vld [vmem:[%s493 + $0x58] sm:$0xff]
        %v590 = vld [vmem:[%s493 + $0x60] sm:$0xff]
        %v591 = vld [vmem:[%s493 + $0x68] sm:$0xff]
        %v592 = vld [vmem:[%s493 + $0x70] sm:$0xff]
        %v593 = vld [vmem:[%s493 + $0x78] sm:$0xff]
        %v594 = vld [vmem:[%s493 + $0x80] sm:$0xff]
        %v595 = vld [vmem:[%s493 + $0x88] sm:$0xff]
        %v596 = vld [vmem:[%s493 + $0x90] sm:$0xff]
        %v597 = vld [vmem:[%s493 + $0x98] sm:$0xff]
        %v598 = vld [vmem:[%s493 + $0xa0] sm:$0xff]
        %v599 = vld [vmem:[%s493 + $0xa8] sm:$0xff]
        %v600 = vld [vmem:[%s493 + $0xb0] sm:$0xff]
        %v601 = vld [vmem:[%s493 + $0xb8] sm:$0xff]
        %v602 = vld [vmem:[%s493 + $0xc0] sm:$0xff]
        %v603 = vld [vmem:[%s493 + $0xc8] sm:$0xff]
        %v604 = vld [vmem:[%s493 + $0xd0] sm:$0xff]
        %v605 = vld [vmem:[%s493 + $0xd8] sm:$0xff]
        %v606 = vld [vmem:[%s493 + $0xe0] sm:$0xff]
        %v607 = vld [vmem:[%s493 + $0xe8] sm:$0xff]
        %v608 = vld [vmem:[%s493 + $0xf0] sm:$0xff]
        %v609 = vld [vmem:[%s493 + $0xf8] sm:$0xff]
        %v610 = vld [vmem:[#allocation7] sm:$0xff]
        %v611 = vld [vmem:[#allocation7 + $0x8] sm:$0xff]
        %v612 = vld [vmem:[#allocation7 + $0x10] sm:$0xff]
        %v613 = vld [vmem:[#allocation7 + $0x18] sm:$0xff]
        %v614 = vld [vmem:[#allocation7 + $0x20] sm:$0xff]
        %v615 = vld [vmem:[#allocation7 + $0x28] sm:$0xff]
        %v616 = vld [vmem:[#allocation7 + $0x30] sm:$0xff]
        %v617 = vld [vmem:[#allocation7 + $0x38] sm:$0xff]
        %v618 = vld [vmem:[#allocation7 + $0x40] sm:$0xff]
        %v619 = vld [vmem:[#allocation7 + $0x48] sm:$0xff]
        %v620 = vld [vmem:[#allocation7 + $0x50] sm:$0xff]
        %v621 = vld [vmem:[#allocation7 + $0x58] sm:$0xff]
        %v622 = vld [vmem:[#allocation7 + $0x60] sm:$0xff]
        %v623 = vld [vmem:[#allocation7 + $0x68] sm:$0xff]
        %v624 = vld [vmem:[#allocation7 + $0x70] sm:$0xff]
        %v625 = vld [vmem:[#allocation7 + $0x78] sm:$0xff]
        %v626 = vld [vmem:[%s3] sm:$0x1]
        %v628 = vperm.slane %v626, 0
        %630 = vmatpush.msra.mxu0 %v625
        %631 = vmatpush.msra.mxu0 %v624
        %632 = vmatpush.msra.mxu0 %v623
        %633 = vmatpush.msra.mxu0 %v622
        %634 = vmatpush.msra.mxu0 %v621
        %635 = vmatpush.msra.mxu0 %v620
        %636 = vmatpush.msra.mxu0 %v619
        %637 = vmatpush.msra.mxu0 %v618
        %638 = vmatpush.msra.mxu0 %v617
        %639 = vmatpush.msra.mxu0 %v616
        %640 = vmatpush.msra.mxu0 %v615
        %641 = vmatpush.msra.mxu0 %v614
        %642 = vmatpush.msra.mxu0 %v613
        %643 = vmatpush.msra.mxu0 %v612
        %644 = vmatpush.msra.mxu0 %v611
        %645 = vmatpush.msra.mxu0 %v610
        %646 = vmatmul.f32.gmra.mxu0 %v562
        %v647 = vpop.f32.mrf.mxu0
        %v648 = vadd.f32 %v628, %v647
        %649 = vmatmul.f32.gmra.mxu0 %v563
        %v650 = vpop.f32.mrf.mxu0
        %v651 = vadd.f32 %v628, %v650
        %652 = vmatmul.f32.gmra.mxu0 %v564
        %v653 = vpop.f32.mrf.mxu0
        %v654 = vadd.f32 %v628, %v653
        %655 = vmatmul.f32.gmra.mxu0 %v565
        %v656 = vpop.f32.mrf.mxu0
        %v657 = vadd.f32 %v628, %v656
        %658 = vmatmul.f32.gmra.mxu0 %v566
        %v659 = vpop.f32.mrf.mxu0
        %v660 = vadd.f32 %v628, %v659
        %661 = vmatmul.f32.gmra.mxu0 %v567
        %v662 = vpop.f32.mrf.mxu0
        %v663 = vadd.f32 %v628, %v662
        %664 = vmatmul.f32.gmra.mxu0 %v568
        %v665 = vpop.f32.mrf.mxu0
        %v666 = vadd.f32 %v628, %v665
        %667 = vmatmul.f32.gmra.mxu0 %v569
        %v668 = vpop.f32.mrf.mxu0
        %v669 = vadd.f32 %v628, %v668
        %670 = vmatmul.f32.gmra.mxu0 %v570
        %v671 = vpop.f32.mrf.mxu0
        %v672 = vadd.f32 %v628, %v671
        %673 = vmatmul.f32.gmra.mxu0 %v571
        %v674 = vpop.f32.mrf.mxu0
        %v675 = vadd.f32 %v628, %v674
        %676 = vmatmul.f32.gmra.mxu0 %v572
        %v677 = vpop.f32.mrf.mxu0
        %v678 = vadd.f32 %v628, %v677
        %679 = vmatmul.f32.gmra.mxu0 %v573
        %v680 = vpop.f32.mrf.mxu0
        %v681 = vadd.f32 %v628, %v680
        %682 = vmatmul.f32.gmra.mxu0 %v574
        %v683 = vpop.f32.mrf.mxu0
        %v684 = vadd.f32 %v628, %v683
        %685 = vmatmul.f32.gmra.mxu0 %v575
        %v686 = vpop.f32.mrf.mxu0
        %v687 = vadd.f32 %v628, %v686
        %688 = vmatmul.f32.gmra.mxu0 %v576
        %v689 = vpop.f32.mrf.mxu0
        %v690 = vadd.f32 %v628, %v689
        %691 = vmatmul.f32.gmra.mxu0 %v577
        %v692 = vpop.f32.mrf.mxu0
        %v693 = vadd.f32 %v628, %v692
        %694 = vdwg.mxu0
        %v695 = vmul.f32 %v648, 0.17677669
        %v696 = vmul.f32 %v651, 0.17677669
        %v697 = vmul.f32 %v654, 0.17677669
        %v698 = vmul.f32 %v657, 0.17677669
        %v699 = vmul.f32 %v660, 0.17677669
        %v700 = vmul.f32 %v663, 0.17677669
        %v701 = vmul.f32 %v666, 0.17677669
        %v702 = vmul.f32 %v669, 0.17677669
        %v703 = vmul.f32 %v672, 0.17677669
        %v704 = vmul.f32 %v675, 0.17677669
        %v705 = vmul.f32 %v678, 0.17677669
        %v706 = vmul.f32 %v681, 0.17677669
        %v707 = vmul.f32 %v684, 0.17677669
        %v708 = vmul.f32 %v687, 0.17677669
        %v709 = vmul.f32 %v690, 0.17677669
        %v710 = vmul.f32 %v693, 0.17677669
        %v711 = vld [vmem:[#allocation8] sm:$0xff]
        %v712 = vld [vmem:[#allocation8 + $0x8] sm:$0xff]
        %v713 = vld [vmem:[#allocation8 + $0x10] sm:$0xff]
        %v714 = vld [vmem:[#allocation8 + $0x18] sm:$0xff]
        %v715 = vld [vmem:[#allocation8 + $0x20] sm:$0xff]
        %v716 = vld [vmem:[#allocation8 + $0x28] sm:$0xff]
        %v717 = vld [vmem:[#allocation8 + $0x30] sm:$0xff]
        %v718 = vld [vmem:[#allocation8 + $0x38] sm:$0xff]
        %v719 = vld [vmem:[#allocation8 + $0x40] sm:$0xff]
        %v720 = vld [vmem:[#allocation8 + $0x48] sm:$0xff]
        %v721 = vld [vmem:[#allocation8 + $0x50] sm:$0xff]
        %v722 = vld [vmem:[#allocation8 + $0x58] sm:$0xff]
        %v723 = vld [vmem:[#allocation8 + $0x60] sm:$0xff]
        %v724 = vld [vmem:[#allocation8 + $0x68] sm:$0xff]
        %v725 = vld [vmem:[#allocation8 + $0x70] sm:$0xff]
        %v726 = vld [vmem:[#allocation8 + $0x78] sm:$0xff]
        %v727 = vld [vmem:[%s5] sm:$0x1]
        %v729 = vperm.slane %v727, 0
        %731 = vmatpush.msra.mxu0 %v726
        %732 = vmatpush.msra.mxu0 %v725
        %733 = vmatpush.msra.mxu0 %v724
        %734 = vmatpush.msra.mxu0 %v723
        %735 = vmatpush.msra.mxu0 %v722
        %736 = vmatpush.msra.mxu0 %v721
        %737 = vmatpush.msra.mxu0 %v720
        %738 = vmatpush.msra.mxu0 %v719
        %739 = vmatpush.msra.mxu0 %v718
        %740 = vmatpush.msra.mxu0 %v717
        %741 = vmatpush.msra.mxu0 %v716
        %742 = vmatpush.msra.mxu0 %v715
        %743 = vmatpush.msra.mxu0 %v714
        %744 = vmatpush.msra.mxu0 %v713
        %745 = vmatpush.msra.mxu0 %v712
        %746 = vmatpush.msra.mxu0 %v711
        %747 = vmatmul.f32.gmra.mxu0 %v578
        %v748 = vpop.f32.mrf.mxu0
        %v749 = vadd.f32 %v729, %v748
        %750 = vmatmul.f32.gmra.mxu0 %v579
        %v751 = vpop.f32.mrf.mxu0
        %v752 = vadd.f32 %v729, %v751
        %753 = vmatmul.f32.gmra.mxu0 %v580
        %v754 = vpop.f32.mrf.mxu0
        %v755 = vadd.f32 %v729, %v754
        %756 = vmatmul.f32.gmra.mxu0 %v581
        %v757 = vpop.f32.mrf.mxu0
        %v758 = vadd.f32 %v729, %v757
        %759 = vmatmul.f32.gmra.mxu0 %v582
        %v760 = vpop.f32.mrf.mxu0
        %v761 = vadd.f32 %v729, %v760
        %762 = vmatmul.f32.gmra.mxu0 %v583
        %v763 = vpop.f32.mrf.mxu0
        %v764 = vadd.f32 %v729, %v763
        %765 = vmatmul.f32.gmra.mxu0 %v584
        %v766 = vpop.f32.mrf.mxu0
        %v767 = vadd.f32 %v729, %v766
        %768 = vmatmul.f32.gmra.mxu0 %v585
        %v769 = vpop.f32.mrf.mxu0
        %v770 = vadd.f32 %v729, %v769
        %771 = vmatmul.f32.gmra.mxu0 %v586
        %v772 = vpop.f32.mrf.mxu0
        %v773 = vadd.f32 %v729, %v772
        %774 = vmatmul.f32.gmra.mxu0 %v587
        %v775 = vpop.f32.mrf.mxu0
        %v776 = vadd.f32 %v729, %v775
        %777 = vmatmul.f32.gmra.mxu0 %v588
        %v778 = vpop.f32.mrf.mxu0
        %v779 = vadd.f32 %v729, %v778
        %780 = vmatmul.f32.gmra.mxu0 %v589
        %v781 = vpop.f32.mrf.mxu0
        %v782 = vadd.f32 %v729, %v781
        %783 = vmatmul.f32.gmra.mxu0 %v590
        %v784 = vpop.f32.mrf.mxu0
        %v785 = vadd.f32 %v729, %v784
        %786 = vmatmul.f32.gmra.mxu0 %v591
        %v787 = vpop.f32.mrf.mxu0
        %v788 = vadd.f32 %v729, %v787
        %789 = vmatmul.f32.gmra.mxu0 %v592
        %v790 = vpop.f32.mrf.mxu0
        %v791 = vadd.f32 %v729, %v790
        %792 = vmatmul.f32.gmra.mxu0 %v593
        %v793 = vpop.f32.mrf.mxu0
        %v794 = vadd.f32 %v729, %v793
        %795 = vmatmul.f32.gmra.mxu0 %v594
        %v796 = vpop.f32.mrf.mxu0
        %v797 = vadd.f32 %v729, %v796
        %798 = vmatmul.f32.gmra.mxu0 %v595
        %v799 = vpop.f32.mrf.mxu0
        %v800 = vadd.f32 %v729, %v799
        %801 = vmatmul.f32.gmra.mxu0 %v596
        %v802 = vpop.f32.mrf.mxu0
        %v803 = vadd.f32 %v729, %v802
        %804 = vmatmul.f32.gmra.mxu0 %v597
        %v805 = vpop.f32.mrf.mxu0
        %v806 = vadd.f32 %v729, %v805
        %807 = vmatmul.f32.gmra.mxu0 %v598
        %v808 = vpop.f32.mrf.mxu0
        %v809 = vadd.f32 %v729, %v808
        %810 = vmatmul.f32.gmra.mxu0 %v599
        %v811 = vpop.f32.mrf.mxu0
        %v812 = vadd.f32 %v729, %v811
        %813 = vmatmul.f32.gmra.mxu0 %v600
        %v814 = vpop.f32.mrf.mxu0
        %v815 = vadd.f32 %v729, %v814
        %816 = vmatmul.f32.gmra.mxu0 %v601
        %v817 = vpop.f32.mrf.mxu0
        %v818 = vadd.f32 %v729, %v817
        %819 = vmatmul.f32.gmra.mxu0 %v602
        %v820 = vpop.f32.mrf.mxu0
        %v821 = vadd.f32 %v729, %v820
        %822 = vmatmul.f32.gmra.mxu0 %v603
        %v823 = vpop.f32.mrf.mxu0
        %v824 = vadd.f32 %v729, %v823
        %825 = vmatmul.f32.gmra.mxu0 %v604
        %v826 = vpop.f32.mrf.mxu0
        %v827 = vadd.f32 %v729, %v826
        %828 = vmatmul.f32.gmra.mxu0 %v605
        %v829 = vpop.f32.mrf.mxu0
        %v830 = vadd.f32 %v729, %v829
        %831 = vmatmul.f32.gmra.mxu0 %v606
        %v832 = vpop.f32.mrf.mxu0
        %v833 = vadd.f32 %v729, %v832
        %834 = vmatmul.f32.gmra.mxu0 %v607
        %v835 = vpop.f32.mrf.mxu0
        %v836 = vadd.f32 %v729, %v835
        %837 = vmatmul.f32.gmra.mxu0 %v608
        %v838 = vpop.f32.mrf.mxu0
        %v839 = vadd.f32 %v729, %v838
        %840 = vmatmul.f32.gmra.mxu0 %v609
        %v841 = vpop.f32.mrf.mxu0
        %v842 = vadd.f32 %v729, %v841
        %843 = vdwg.mxu0
        %v844 = vld [vmem:[#allocation10] sm:$0xff]
        %v845 = vld [vmem:[#allocation10 + $0x8] sm:$0xff]
        %v846 = vld [vmem:[#allocation10 + $0x10] sm:$0xff]
        %v847 = vld [vmem:[#allocation10 + $0x18] sm:$0xff]
        %v848 = vld [vmem:[#allocation10 + $0x20] sm:$0xff]
        %v849 = vld [vmem:[#allocation10 + $0x28] sm:$0xff]
        %v850 = vld [vmem:[#allocation10 + $0x30] sm:$0xff]
        %v851 = vld [vmem:[#allocation10 + $0x38] sm:$0xff]
        %v852 = vld [vmem:[#allocation10 + $0x40] sm:$0xff]
        %v853 = vld [vmem:[#allocation10 + $0x48] sm:$0xff]
        %v854 = vld [vmem:[#allocation10 + $0x50] sm:$0xff]
        %v855 = vld [vmem:[#allocation10 + $0x58] sm:$0xff]
        %v856 = vld [vmem:[#allocation10 + $0x60] sm:$0xff]
        %v857 = vld [vmem:[#allocation10 + $0x68] sm:$0xff]
        %v858 = vld [vmem:[#allocation10 + $0x70] sm:$0xff]
        %v859 = vld [vmem:[#allocation10 + $0x78] sm:$0xff]
        %v860 = vld [vmem:[%s7] sm:$0x1]
        %v862 = vperm.slane %v860, 0
        %864 = vmatpush.msra.mxu0 %v859
        %865 = vmatpush.msra.mxu0 %v858
        %866 = vmatpush.msra.mxu0 %v857
        %867 = vmatpush.msra.mxu0 %v856
        %868 = vmatpush.msra.mxu0 %v855
        %869 = vmatpush.msra.mxu0 %v854
        %870 = vmatpush.msra.mxu0 %v853
        %871 = vmatpush.msra.mxu0 %v852
        %872 = vmatpush.msra.mxu0 %v851
        %873 = vmatpush.msra.mxu0 %v850
        %874 = vmatpush.msra.mxu0 %v849
        %875 = vmatpush.msra.mxu0 %v848
        %876 = vmatpush.msra.mxu0 %v847
        %877 = vmatpush.msra.mxu0 %v846
        %878 = vmatpush.msra.mxu0 %v845
        %879 = vmatpush.msra.mxu0 %v844
        %880 = vmatmul.f32.gmra.mxu0 %v578
        %v881 = vpop.f32.mrf.mxu0
        %v882 = vadd.f32 %v862, %v881
        %883 = vmatmul.f32.gmra.mxu0 %v579
        %v884 = vpop.f32.mrf.mxu0
        %v885 = vadd.f32 %v862, %v884
        %886 = vmatmul.f32.gmra.mxu0 %v580
        %v887 = vpop.f32.mrf.mxu0
        %v888 = vadd.f32 %v862, %v887
        %889 = vmatmul.f32.gmra.mxu0 %v581
        %v890 = vpop.f32.mrf.mxu0
        %v891 = vadd.f32 %v862, %v890
        %892 = vmatmul.f32.gmra.mxu0 %v582
        %v893 = vpop.f32.mrf.mxu0
        %v894 = vadd.f32 %v862, %v893
        %895 = vmatmul.f32.gmra.mxu0 %v583
        %v896 = vpop.f32.mrf.mxu0
        %v897 = vadd.f32 %v862, %v896
        %898 = vmatmul.f32.gmra.mxu0 %v584
        %v899 = vpop.f32.mrf.mxu0
        %v900 = vadd.f32 %v862, %v899
        %901 = vmatmul.f32.gmra.mxu0 %v585
        %v902 = vpop.f32.mrf.mxu0
        %v903 = vadd.f32 %v862, %v902
        %904 = vmatmul.f32.gmra.mxu0 %v586
        %v905 = vpop.f32.mrf.mxu0
        %v906 = vadd.f32 %v862, %v905
        %907 = vmatmul.f32.gmra.mxu0 %v587
        %v908 = vpop.f32.mrf.mxu0
        %v909 = vadd.f32 %v862, %v908
        %910 = vmatmul.f32.gmra.mxu0 %v588
        %v911 = vpop.f32.mrf.mxu0
        %v912 = vadd.f32 %v862, %v911
        %913 = vmatmul.f32.gmra.mxu0 %v589
        %v914 = vpop.f32.mrf.mxu0
        %v915 = vadd.f32 %v862, %v914
        %916 = vmatmul.f32.gmra.mxu0 %v590
        %v917 = vpop.f32.mrf.mxu0
        %v918 = vadd.f32 %v862, %v917
        %919 = vmatmul.f32.gmra.mxu0 %v591
        %v920 = vpop.f32.mrf.mxu0
        %v921 = vadd.f32 %v862, %v920
        %922 = vmatmul.f32.gmra.mxu0 %v592
        %v923 = vpop.f32.mrf.mxu0
        %v924 = vadd.f32 %v862, %v923
        %925 = vmatmul.f32.gmra.mxu0 %v593
        %v926 = vpop.f32.mrf.mxu0
        %v927 = vadd.f32 %v862, %v926
        %928 = vmatmul.f32.gmra.mxu0 %v594
        %v929 = vpop.f32.mrf.mxu0
        %v930 = vadd.f32 %v862, %v929
        %931 = vmatmul.f32.gmra.mxu0 %v595
        %v932 = vpop.f32.mrf.mxu0
        %v933 = vadd.f32 %v862, %v932
        %934 = vmatmul.f32.gmra.mxu0 %v596
        %v935 = vpop.f32.mrf.mxu0
        %v936 = vadd.f32 %v862, %v935
        %937 = vmatmul.f32.gmra.mxu0 %v597
        %v938 = vpop.f32.mrf.mxu0
        %v939 = vadd.f32 %v862, %v938
        %940 = vmatmul.f32.gmra.mxu0 %v598
        %v941 = vpop.f32.mrf.mxu0
        %v942 = vadd.f32 %v862, %v941
        %943 = vmatmul.f32.gmra.mxu0 %v599
        %v944 = vpop.f32.mrf.mxu0
        %v945 = vadd.f32 %v862, %v944
        %946 = vmatmul.f32.gmra.mxu0 %v600
        %v947 = vpop.f32.mrf.mxu0
        %v948 = vadd.f32 %v862, %v947
        %949 = vmatmul.f32.gmra.mxu0 %v601
        %v950 = vpop.f32.mrf.mxu0
        %v951 = vadd.f32 %v862, %v950
        %952 = vmatmul.f32.gmra.mxu0 %v602
        %v953 = vpop.f32.mrf.mxu0
        %v954 = vadd.f32 %v862, %v953
        %955 = vmatmul.f32.gmra.mxu0 %v603
        %v956 = vpop.f32.mrf.mxu0
        %v957 = vadd.f32 %v862, %v956
        %958 = vmatmul.f32.gmra.mxu0 %v604
        %v959 = vpop.f32.mrf.mxu0
        %v960 = vadd.f32 %v862, %v959
        %961 = vmatmul.f32.gmra.mxu0 %v605
        %v962 = vpop.f32.mrf.mxu0
        %v963 = vadd.f32 %v862, %v962
        %964 = vmatmul.f32.gmra.mxu0 %v606
        %v965 = vpop.f32.mrf.mxu0
        %v966 = vadd.f32 %v862, %v965
        %967 = vmatmul.f32.gmra.mxu0 %v607
        %v968 = vpop.f32.mrf.mxu0
        %v969 = vadd.f32 %v862, %v968
        %970 = vmatmul.f32.gmra.mxu0 %v608
        %v971 = vpop.f32.mrf.mxu0
        %v972 = vadd.f32 %v862, %v971
        %973 = vmatmul.f32.gmra.mxu0 %v609
        %v974 = vpop.f32.mrf.mxu0
        %v975 = vadd.f32 %v862, %v974
        %976 = vdwg.mxu0
        %vm977 = vcmask 261120
        %v979 = vsel %vm977, %v695, 0
        %v982 = vsel %vm977, %v696, 0
        %v985 = vsel %vm977, %v697, 0
        %v988 = vsel %vm977, %v698, 0
        %v991 = vsel %vm977, %v699, 0
        %v994 = vsel %vm977, %v700, 0
        %v997 = vsel %vm977, %v701, 0
        %v1000 = vsel %vm977, %v702, 0
        %v1003 = vsel %vm977, %v703, 0
        %v1006 = vsel %vm977, %v704, 0
        %v1009 = vsel %vm977, %v705, 0
        %v1012 = vsel %vm977, %v706, 0
        %v1015 = vsel %vm977, %v707, 0
        %v1018 = vsel %vm977, %v708, 0
        %v1021 = vsel %vm977, %v709, 0
        %v1024 = vsel %vm977, %v710, 0
        %v1027 = vsel %vm977, %v749, 0
        %v1030 = vsel %vm977, %v752, 0
        %v1033 = vsel %vm977, %v755, 0
        %v1036 = vsel %vm977, %v758, 0
        %v1039 = vsel %vm977, %v761, 0
        %v1042 = vsel %vm977, %v764, 0
        %v1045 = vsel %vm977, %v767, 0
        %v1048 = vsel %vm977, %v770, 0
        %v1051 = vsel %vm977, %v773, 0
        %v1054 = vsel %vm977, %v776, 0
        %v1057 = vsel %vm977, %v779, 0
        %v1060 = vsel %vm977, %v782, 0
        %v1063 = vsel %vm977, %v785, 0
        %v1066 = vsel %vm977, %v788, 0
        %v1069 = vsel %vm977, %v791, 0
        %v1072 = vsel %vm977, %v794, 0
        %v1075 = vsel %vm977, %v797, 0
        %v1078 = vsel %vm977, %v800, 0
        %v1081 = vsel %vm977, %v803, 0
        %v1084 = vsel %vm977, %v806, 0
        %v1087 = vsel %vm977, %v809, 0
        %v1090 = vsel %vm977, %v812, 0
        %v1093 = vsel %vm977, %v815, 0
        %v1096 = vsel %vm977, %v818, 0
        %v1099 = vsel %vm977, %v821, 0
        %v1102 = vsel %vm977, %v824, 0
        %v1105 = vsel %vm977, %v827, 0
        %v1108 = vsel %vm977, %v830, 0
        %v1111 = vsel %vm977, %v833, 0
        %v1114 = vsel %vm977, %v836, 0
        %v1117 = vsel %vm977, %v839, 0
        %v1120 = vsel %vm977, %v842, 0
        %1122 = vmatpush.xpose.msra.mxu0 %v1072
        %1123 = vmatpush.xpose.msra.mxu0 %v1069
        %1124 = vmatpush.xpose.msra.mxu0 %v1066
        %1125 = vmatpush.xpose.msra.mxu0 %v1063
        %1126 = vmatpush.xpose.msra.mxu0 %v1060
        %1127 = vmatpush.xpose.msra.mxu0 %v1057
        %1128 = vmatpush.xpose.msra.mxu0 %v1054
        %1129 = vmatpush.xpose.msra.mxu0 %v1051
        %1130 = vmatpush.xpose.msra.mxu0 %v1048
        %1131 = vmatpush.xpose.msra.mxu0 %v1045
        %1132 = vmatpush.xpose.msra.mxu0 %v1042
        %1133 = vmatpush.xpose.msra.mxu0 %v1039
        %1134 = vmatpush.xpose.msra.mxu0 %v1036
        %1135 = vmatpush.xpose.msra.mxu0 %v1033
        %1136 = vmatpush.xpose.msra.mxu0 %v1030
        %1137 = vmatpush.xpose.msra.mxu0 %v1027
        %1138 = vmatmul.f32.gmra.mxu0 %v979
        %v1139 = vpop.f32.mrf.mxu0
        %v1140 = vadd.f32 0.0, %v1139
        %1141 = vmatmul.f32.gmra.mxu0 %v982
        %v1142 = vpop.f32.mrf.mxu0
        %v1143 = vadd.f32 0.0, %v1142
        %1144 = vmatmul.f32.gmra.mxu0 %v985
        %v1145 = vpop.f32.mrf.mxu0
        %v1146 = vadd.f32 0.0, %v1145
        %1147 = vmatmul.f32.gmra.mxu0 %v988
        %v1148 = vpop.f32.mrf.mxu0
        %v1149 = vadd.f32 0.0, %v1148
        %1150 = vmatmul.f32.gmra.mxu0 %v991
        %v1151 = vpop.f32.mrf.mxu0
        %v1152 = vadd.f32 0.0, %v1151
        %1153 = vmatmul.f32.gmra.mxu0 %v994
        %v1154 = vpop.f32.mrf.mxu0
        %v1155 = vadd.f32 0.0, %v1154
        %1156 = vmatmul.f32.gmra.mxu0 %v997
        %v1157 = vpop.f32.mrf.mxu0
        %v1158 = vadd.f32 0.0, %v1157
        %1159 = vmatmul.f32.gmra.mxu0 %v1000
        %v1160 = vpop.f32.mrf.mxu0
        %v1161 = vadd.f32 0.0, %v1160
        %1162 = vmatmul.f32.gmra.mxu0 %v1003
        %v1163 = vpop.f32.mrf.mxu0
        %v1164 = vadd.f32 0.0, %v1163
        %1165 = vmatmul.f32.gmra.mxu0 %v1006
        %v1166 = vpop.f32.mrf.mxu0
        %v1167 = vadd.f32 0.0, %v1166
        %1168 = vmatmul.f32.gmra.mxu0 %v1009
        %v1169 = vpop.f32.mrf.mxu0
        %v1170 = vadd.f32 0.0, %v1169
        %1171 = vmatmul.f32.gmra.mxu0 %v1012
        %v1172 = vpop.f32.mrf.mxu0
        %v1173 = vadd.f32 0.0, %v1172
        %1174 = vmatmul.f32.gmra.mxu0 %v1015
        %v1175 = vpop.f32.mrf.mxu0
        %v1176 = vadd.f32 0.0, %v1175
        %1177 = vmatmul.f32.gmra.mxu0 %v1018
        %v1178 = vpop.f32.mrf.mxu0
        %v1179 = vadd.f32 0.0, %v1178
        %1180 = vmatmul.f32.gmra.mxu0 %v1021
        %v1181 = vpop.f32.mrf.mxu0
        %v1182 = vadd.f32 0.0, %v1181
        %1183 = vmatmul.f32.gmra.mxu0 %v1024
        %v1184 = vpop.f32.mrf.mxu0
        %v1185 = vadd.f32 0.0, %v1184
        %1186 = vdwg.mxu0
        %1187 = vmatpush.xpose.msra.mxu0 %v1120
        %1188 = vmatpush.xpose.msra.mxu0 %v1117
        %1189 = vmatpush.xpose.msra.mxu0 %v1114
        %1190 = vmatpush.xpose.msra.mxu0 %v1111
        %1191 = vmatpush.xpose.msra.mxu0 %v1108
        %1192 = vmatpush.xpose.msra.mxu0 %v1105
        %1193 = vmatpush.xpose.msra.mxu0 %v1102
        %1194 = vmatpush.xpose.msra.mxu0 %v1099
        %1195 = vmatpush.xpose.msra.mxu0 %v1096
        %1196 = vmatpush.xpose.msra.mxu0 %v1093
        %1197 = vmatpush.xpose.msra.mxu0 %v1090
        %1198 = vmatpush.xpose.msra.mxu0 %v1087
        %1199 = vmatpush.xpose.msra.mxu0 %v1084
        %1200 = vmatpush.xpose.msra.mxu0 %v1081
        %1201 = vmatpush.xpose.msra.mxu0 %v1078
        %1202 = vmatpush.xpose.msra.mxu0 %v1075
        %1203 = vmatmul.f32.gmra.mxu0 %v979
        %v1204 = vpop.f32.mrf.mxu0
        %v1205 = vadd.f32 0.0, %v1204
        %1206 = vmatmul.f32.gmra.mxu0 %v982
        %v1207 = vpop.f32.mrf.mxu0
        %v1208 = vadd.f32 0.0, %v1207
        %1209 = vmatmul.f32.gmra.mxu0 %v985
        %v1210 = vpop.f32.mrf.mxu0
        %v1211 = vadd.f32 0.0, %v1210
        %1212 = vmatmul.f32.gmra.mxu0 %v988
        %v1213 = vpop.f32.mrf.mxu0
        %v1214 = vadd.f32 0.0, %v1213
        %1215 = vmatmul.f32.gmra.mxu0 %v991
        %v1216 = vpop.f32.mrf.mxu0
        %v1217 = vadd.f32 0.0, %v1216
        %1218 = vmatmul.f32.gmra.mxu0 %v994
        %v1219 = vpop.f32.mrf.mxu0
        %v1220 = vadd.f32 0.0, %v1219
        %1221 = vmatmul.f32.gmra.mxu0 %v997
        %v1222 = vpop.f32.mrf.mxu0
        %v1223 = vadd.f32 0.0, %v1222
        %1224 = vmatmul.f32.gmra.mxu0 %v1000
        %v1225 = vpop.f32.mrf.mxu0
        %v1226 = vadd.f32 0.0, %v1225
        %1227 = vmatmul.f32.gmra.mxu0 %v1003
        %v1228 = vpop.f32.mrf.mxu0
        %v1229 = vadd.f32 0.0, %v1228
        %1230 = vmatmul.f32.gmra.mxu0 %v1006
        %v1231 = vpop.f32.mrf.mxu0
        %v1232 = vadd.f32 0.0, %v1231
        %1233 = vmatmul.f32.gmra.mxu0 %v1009
        %v1234 = vpop.f32.mrf.mxu0
        %v1235 = vadd.f32 0.0, %v1234
        %1236 = vmatmul.f32.gmra.mxu0 %v1012
        %v1237 = vpop.f32.mrf.mxu0
        %v1238 = vadd.f32 0.0, %v1237
        %1239 = vmatmul.f32.gmra.mxu0 %v1015
        %v1240 = vpop.f32.mrf.mxu0
        %v1241 = vadd.f32 0.0, %v1240
        %1242 = vmatmul.f32.gmra.mxu0 %v1018
        %v1243 = vpop.f32.mrf.mxu0
        %v1244 = vadd.f32 0.0, %v1243
        %1245 = vmatmul.f32.gmra.mxu0 %v1021
        %v1246 = vpop.f32.mrf.mxu0
        %v1247 = vadd.f32 0.0, %v1246
        %1248 = vmatmul.f32.gmra.mxu0 %v1024
        %v1249 = vpop.f32.mrf.mxu0
        %v1250 = vadd.f32 0.0, %v1249
        %1251 = vdwg.mxu0
        %v1252 = vmax.f32 %v1140, %v1205
        %1253 = vmax.xlane.f32.xlu0 %v1252
        %v1254 = vpop.xlane.xlu0 %1253
        %v1255 = vmax.f32 %v1143, %v1208
        %1256 = vmax.xlane.f32.xlu0 %v1255
        %v1257 = vpop.xlane.xlu0 %1256
        %v1258 = vmax.f32 %v1146, %v1211
        %1259 = vmax.xlane.f32.xlu0 %v1258
        %v1260 = vpop.xlane.xlu0 %1259
        %v1261 = vmax.f32 %v1149, %v1214
        %1262 = vmax.xlane.f32.xlu0 %v1261
        %v1263 = vpop.xlane.xlu0 %1262
        %v1264 = vmax.f32 %v1152, %v1217
        %1265 = vmax.xlane.f32.xlu0 %v1264
        %v1266 = vpop.xlane.xlu0 %1265
        %v1267 = vmax.f32 %v1155, %v1220
        %1268 = vmax.xlane.f32.xlu0 %v1267
        %v1269 = vpop.xlane.xlu0 %1268
        %v1270 = vmax.f32 %v1158, %v1223
        %1271 = vmax.xlane.f32.xlu0 %v1270
        %v1272 = vpop.xlane.xlu0 %1271
        %v1273 = vmax.f32 %v1161, %v1226
        %1274 = vmax.xlane.f32.xlu0 %v1273
        %v1275 = vpop.xlane.xlu0 %1274
        %v1276 = vmax.f32 %v1164, %v1229
        %1277 = vmax.xlane.f32.xlu0 %v1276
        %v1278 = vpop.xlane.xlu0 %1277
        %v1279 = vmax.f32 %v1167, %v1232
        %1280 = vmax.xlane.f32.xlu0 %v1279
        %v1281 = vpop.xlane.xlu0 %1280
        %v1282 = vmax.f32 %v1170, %v1235
        %1283 = vmax.xlane.f32.xlu0 %v1282
        %v1284 = vpop.xlane.xlu0 %1283
        %v1285 = vmax.f32 %v1173, %v1238
        %1286 = vmax.xlane.f32.xlu0 %v1285
        %v1287 = vpop.xlane.xlu0 %1286
        %v1288 = vmax.f32 %v1176, %v1241
        %1289 = vmax.xlane.f32.xlu0 %v1288
        %v1290 = vpop.xlane.xlu0 %1289
        %v1291 = vmax.f32 %v1179, %v1244
        %1292 = vmax.xlane.f32.xlu0 %v1291
        %v1293 = vpop.xlane.xlu0 %1292
        %v1294 = vmax.f32 %v1182, %v1247
        %1295 = vmax.xlane.f32.xlu0 %v1294
        %v1296 = vpop.xlane.xlu0 %1295
        %v1297 = vmax.f32 %v1185, %v1250
        %1298 = vmax.xlane.f32.xlu0 %v1297
        %v1299 = vpop.xlane.xlu0 %1298
        %v1300 = vsub.f32 %v1140, %v1254
        %v1301 = vsub.f32 %v1205, %v1254
        %v1302 = vsub.f32 %v1143, %v1257
        %v1303 = vsub.f32 %v1208, %v1257
        %v1304 = vsub.f32 %v1146, %v1260
        %v1305 = vsub.f32 %v1211, %v1260
        %v1306 = vsub.f32 %v1149, %v1263
        %v1307 = vsub.f32 %v1214, %v1263
        %v1308 = vsub.f32 %v1152, %v1266
        %v1309 = vsub.f32 %v1217, %v1266
        %v1310 = vsub.f32 %v1155, %v1269
        %v1311 = vsub.f32 %v1220, %v1269
        %v1312 = vsub.f32 %v1158, %v1272
        %v1313 = vsub.f32 %v1223, %v1272
        %v1314 = vsub.f32 %v1161, %v1275
        %v1315 = vsub.f32 %v1226, %v1275
        %v1316 = vsub.f32 %v1164, %v1278
        %v1317 = vsub.f32 %v1229, %v1278
        %v1318 = vsub.f32 %v1167, %v1281
        %v1319 = vsub.f32 %v1232, %v1281
        %v1320 = vsub.f32 %v1170, %v1284
        %v1321 = vsub.f32 %v1235, %v1284
        %v1322 = vsub.f32 %v1173, %v1287
        %v1323 = vsub.f32 %v1238, %v1287
        %v1324 = vsub.f32 %v1176, %v1290
        %v1325 = vsub.f32 %v1241, %v1290
        %v1326 = vsub.f32 %v1179, %v1293
        %v1327 = vsub.f32 %v1244, %v1293
        %v1328 = vsub.f32 %v1182, %v1296
        %v1329 = vsub.f32 %v1247, %v1296
        %v1330 = vsub.f32 %v1185, %v1299
        %v1331 = vsub.f32 %v1250, %v1299
        %v1332 = vmul.f32 %v1300, 1.442695
        %v1333 = vpow.pop %v1332
        %v1334 = vmul.f32 %v1301, 1.442695
        %v1335 = vpow.pop %v1334
        %v1336 = vmul.f32 %v1302, 1.442695
        %v1337 = vpow.pop %v1336
        %v1338 = vmul.f32 %v1303, 1.442695
        %v1339 = vpow.pop %v1338
        %v1340 = vmul.f32 %v1304, 1.442695
        %v1341 = vpow.pop %v1340
        %v1342 = vmul.f32 %v1305, 1.442695
        %v1343 = vpow.pop %v1342
        %v1344 = vmul.f32 %v1306, 1.442695
        %v1345 = vpow.pop %v1344
        %v1346 = vmul.f32 %v1307, 1.442695
        %v1347 = vpow.pop %v1346
        %v1348 = vmul.f32 %v1308, 1.442695
        %v1349 = vpow.pop %v1348
        %v1350 = vmul.f32 %v1309, 1.442695
        %v1351 = vpow.pop %v1350
        %v1352 = vmul.f32 %v1310, 1.442695
        %v1353 = vpow.pop %v1352
        %v1354 = vmul.f32 %v1311, 1.442695
        %v1355 = vpow.pop %v1354
        %v1356 = vmul.f32 %v1312, 1.442695
        %v1357 = vpow.pop %v1356
        %v1358 = vmul.f32 %v1313, 1.442695
        %v1359 = vpow.pop %v1358
        %v1360 = vmul.f32 %v1314, 1.442695
        %v1361 = vpow.pop %v1360
        %v1362 = vmul.f32 %v1315, 1.442695
        %v1363 = vpow.pop %v1362
        %v1364 = vmul.f32 %v1316, 1.442695
        %v1365 = vpow.pop %v1364
        %v1366 = vmul.f32 %v1317, 1.442695
        %v1367 = vpow.pop %v1366
        %v1368 = vmul.f32 %v1318, 1.442695
        %v1369 = vpow.pop %v1368
        %v1370 = vmul.f32 %v1319, 1.442695
        %v1371 = vpow.pop %v1370
        %v1372 = vmul.f32 %v1320, 1.442695
        %v1373 = vpow.pop %v1372
        %v1374 = vmul.f32 %v1321, 1.442695
        %v1375 = vpow.pop %v1374
        %v1376 = vmul.f32 %v1322, 1.442695
        %v1377 = vpow.pop %v1376
        %v1378 = vmul.f32 %v1323, 1.442695
        %v1379 = vpow.pop %v1378
        %v1380 = vmul.f32 %v1324, 1.442695
        %v1381 = vpow.pop %v1380
        %v1382 = vmul.f32 %v1325, 1.442695
        %v1383 = vpow.pop %v1382
        %v1384 = vmul.f32 %v1326, 1.442695
        %v1385 = vpow.pop %v1384
        %v1386 = vmul.f32 %v1327, 1.442695
        %v1387 = vpow.pop %v1386
        %v1388 = vmul.f32 %v1328, 1.442695
        %v1389 = vpow.pop %v1388
        %v1390 = vmul.f32 %v1329, 1.442695
        %v1391 = vpow.pop %v1390
        %v1392 = vmul.f32 %v1330, 1.442695
        %v1393 = vpow.pop %v1392
        %v1394 = vmul.f32 %v1331, 1.442695
        %v1395 = vpow.pop %v1394
        %v1396 = vadd.f32 %v1333, %v1335
        %1397 = vadd.xlane.f32.xlu0 %v1396
        %v1398 = vpop.xlane.xlu0 %1397
        %v1399 = vadd.f32 %v1337, %v1339
        %1400 = vadd.xlane.f32.xlu0 %v1399
        %v1401 = vpop.xlane.xlu0 %1400
        %v1402 = vadd.f32 %v1341, %v1343
        %1403 = vadd.xlane.f32.xlu0 %v1402
        %v1404 = vpop.xlane.xlu0 %1403
        %v1405 = vadd.f32 %v1345, %v1347
        %1406 = vadd.xlane.f32.xlu0 %v1405
        %v1407 = vpop.xlane.xlu0 %1406
        %v1408 = vadd.f32 %v1349, %v1351
        %1409 = vadd.xlane.f32.xlu0 %v1408
        %v1410 = vpop.xlane.xlu0 %1409
        %v1411 = vadd.f32 %v1353, %v1355
        %1412 = vadd.xlane.f32.xlu0 %v1411
        %v1413 = vpop.xlane.xlu0 %1412
        %v1414 = vadd.f32 %v1357, %v1359
        %1415 = vadd.xlane.f32.xlu0 %v1414
        %v1416 = vpop.xlane.xlu0 %1415
        %v1417 = vadd.f32 %v1361, %v1363
        %1418 = vadd.xlane.f32.xlu0 %v1417
        %v1419 = vpop.xlane.xlu0 %1418
        %v1420 = vadd.f32 %v1365, %v1367
        %1421 = vadd.xlane.f32.xlu0 %v1420
        %v1422 = vpop.xlane.xlu0 %1421
        %v1423 = vadd.f32 %v1369, %v1371
        %1424 = vadd.xlane.f32.xlu0 %v1423
        %v1425 = vpop.xlane.xlu0 %1424
        %v1426 = vadd.f32 %v1373, %v1375
        %1427 = vadd.xlane.f32.xlu0 %v1426
        %v1428 = vpop.xlane.xlu0 %1427
        %v1429 = vadd.f32 %v1377, %v1379
        %1430 = vadd.xlane.f32.xlu0 %v1429
        %v1431 = vpop.xlane.xlu0 %1430
        %v1432 = vadd.f32 %v1381, %v1383
        %1433 = vadd.xlane.f32.xlu0 %v1432
        %v1434 = vpop.xlane.xlu0 %1433
        %v1435 = vadd.f32 %v1385, %v1387
        %1436 = vadd.xlane.f32.xlu0 %v1435
        %v1437 = vpop.xlane.xlu0 %1436
        %v1438 = vadd.f32 %v1389, %v1391
        %1439 = vadd.xlane.f32.xlu0 %v1438
        %v1440 = vpop.xlane.xlu0 %1439
        %v1441 = vadd.f32 %v1393, %v1395
        %1442 = vadd.xlane.f32.xlu0 %v1441
        %v1443 = vpop.xlane.xlu0 %1442
        %v1444 = vrcp.pop %v1398
        %v1445 = vmul.f32 %v1398, %v1444
        %v1446 = vsub.f32 1.0, %v1445
        %v1447 = vmul.f32 %v1444, %v1446
        %v1448 = vadd.f32 %v1444, %v1447
        %vm1449 = vweird.f32 %v1398
        %vm1450 = vweird.f32 %v1444
        %vm1451 = vmor %vm1449, %vm1450
        %v1452 = vsel %vm1451, %v1444, %v1448
        %v1453 = vand.u32 2147483647, %v1398
        %vm1454 = vcmp.eq.f32.partialorder %v1453, 8.507059e+37
        %v1455 = vand.u32 %v1398, 2147483648
        %v1456 = vor.u32 1.1754944e-38, %v1455
        %v1457 = vsel %vm1454, %v1456, %v1452
        %v1458 = vrcp.pop %v1401
        %v1459 = vmul.f32 %v1401, %v1458
        %v1460 = vsub.f32 1.0, %v1459
        %v1461 = vmul.f32 %v1458, %v1460
        %v1462 = vadd.f32 %v1458, %v1461
        %vm1463 = vweird.f32 %v1401
        %vm1464 = vweird.f32 %v1458
        %vm1465 = vmor %vm1463, %vm1464
        %v1466 = vsel %vm1465, %v1458, %v1462
        %v1467 = vand.u32 2147483647, %v1401
        %vm1468 = vcmp.eq.f32.partialorder %v1467, 8.507059e+37
        %v1469 = vand.u32 %v1401, 2147483648
        %v1470 = vor.u32 1.1754944e-38, %v1469
        %v1471 = vsel %vm1468, %v1470, %v1466
        %v1472 = vrcp.pop %v1404
        %v1473 = vmul.f32 %v1404, %v1472
        %v1474 = vsub.f32 1.0, %v1473
        %v1475 = vmul.f32 %v1472, %v1474
        %v1476 = vadd.f32 %v1472, %v1475
        %vm1477 = vweird.f32 %v1404
        %vm1478 = vweird.f32 %v1472
        %vm1479 = vmor %vm1477, %vm1478
        %v1480 = vsel %vm1479, %v1472, %v1476
        %v1481 = vand.u32 2147483647, %v1404
        %vm1482 = vcmp.eq.f32.partialorder %v1481, 8.507059e+37
        %v1483 = vand.u32 %v1404, 2147483648
        %v1484 = vor.u32 1.1754944e-38, %v1483
        %v1485 = vsel %vm1482, %v1484, %v1480
        %v1486 = vrcp.pop %v1407
        %v1487 = vmul.f32 %v1407, %v1486
        %v1488 = vsub.f32 1.0, %v1487
        %v1489 = vmul.f32 %v1486, %v1488
        %v1490 = vadd.f32 %v1486, %v1489
        %vm1491 = vweird.f32 %v1407
        %vm1492 = vweird.f32 %v1486
        %vm1493 = vmor %vm1491, %vm1492
        %v1494 = vsel %vm1493, %v1486, %v1490
        %v1495 = vand.u32 2147483647, %v1407
        %vm1496 = vcmp.eq.f32.partialorder %v1495, 8.507059e+37
        %v1497 = vand.u32 %v1407, 2147483648
        %v1498 = vor.u32 1.1754944e-38, %v1497
        %v1499 = vsel %vm1496, %v1498, %v1494
        %v1500 = vrcp.pop %v1410
        %v1501 = vmul.f32 %v1410, %v1500
        %v1502 = vsub.f32 1.0, %v1501
        %v1503 = vmul.f32 %v1500, %v1502
        %v1504 = vadd.f32 %v1500, %v1503
        %vm1505 = vweird.f32 %v1410
        %vm1506 = vweird.f32 %v1500
        %vm1507 = vmor %vm1505, %vm1506
        %v1508 = vsel %vm1507, %v1500, %v1504
        %v1509 = vand.u32 2147483647, %v1410
        %vm1510 = vcmp.eq.f32.partialorder %v1509, 8.507059e+37
        %v1511 = vand.u32 %v1410, 2147483648
        %v1512 = vor.u32 1.1754944e-38, %v1511
        %v1513 = vsel %vm1510, %v1512, %v1508
        %v1514 = vrcp.pop %v1413
        %v1515 = vmul.f32 %v1413, %v1514
        %v1516 = vsub.f32 1.0, %v1515
        %v1517 = vmul.f32 %v1514, %v1516
        %v1518 = vadd.f32 %v1514, %v1517
        %vm1519 = vweird.f32 %v1413
        %vm1520 = vweird.f32 %v1514
        %vm1521 = vmor %vm1519, %vm1520
        %v1522 = vsel %vm1521, %v1514, %v1518
        %v1523 = vand.u32 2147483647, %v1413
        %vm1524 = vcmp.eq.f32.partialorder %v1523, 8.507059e+37
        %v1525 = vand.u32 %v1413, 2147483648
        %v1526 = vor.u32 1.1754944e-38, %v1525
        %v1527 = vsel %vm1524, %v1526, %v1522
        %v1528 = vrcp.pop %v1416
        %v1529 = vmul.f32 %v1416, %v1528
        %v1530 = vsub.f32 1.0, %v1529
        %v1531 = vmul.f32 %v1528, %v1530
        %v1532 = vadd.f32 %v1528, %v1531
        %vm1533 = vweird.f32 %v1416
        %vm1534 = vweird.f32 %v1528
        %vm1535 = vmor %vm1533, %vm1534
        %v1536 = vsel %vm1535, %v1528, %v1532
        %v1537 = vand.u32 2147483647, %v1416
        %vm1538 = vcmp.eq.f32.partialorder %v1537, 8.507059e+37
        %v1539 = vand.u32 %v1416, 2147483648
        %v1540 = vor.u32 1.1754944e-38, %v1539
        %v1541 = vsel %vm1538, %v1540, %v1536
        %v1542 = vrcp.pop %v1419
        %v1543 = vmul.f32 %v1419, %v1542
        %v1544 = vsub.f32 1.0, %v1543
        %v1545 = vmul.f32 %v1542, %v1544
        %v1546 = vadd.f32 %v1542, %v1545
        %vm1547 = vweird.f32 %v1419
        %vm1548 = vweird.f32 %v1542
        %vm1549 = vmor %vm1547, %vm1548
        %v1550 = vsel %vm1549, %v1542, %v1546
        %v1551 = vand.u32 2147483647, %v1419
        %vm1552 = vcmp.eq.f32.partialorder %v1551, 8.507059e+37
        %v1553 = vand.u32 %v1419, 2147483648
        %v1554 = vor.u32 1.1754944e-38, %v1553
        %v1555 = vsel %vm1552, %v1554, %v1550
        %v1556 = vrcp.pop %v1422
        %v1557 = vmul.f32 %v1422, %v1556
        %v1558 = vsub.f32 1.0, %v1557
        %v1559 = vmul.f32 %v1556, %v1558
        %v1560 = vadd.f32 %v1556, %v1559
        %vm1561 = vweird.f32 %v1422
        %vm1562 = vweird.f32 %v1556
        %vm1563 = vmor %vm1561, %vm1562
        %v1564 = vsel %vm1563, %v1556, %v1560
        %v1565 = vand.u32 2147483647, %v1422
        %vm1566 = vcmp.eq.f32.partialorder %v1565, 8.507059e+37
        %v1567 = vand.u32 %v1422, 2147483648
        %v1568 = vor.u32 1.1754944e-38, %v1567
        %v1569 = vsel %vm1566, %v1568, %v1564
        %v1570 = vrcp.pop %v1425
        %v1571 = vmul.f32 %v1425, %v1570
        %v1572 = vsub.f32 1.0, %v1571
        %v1573 = vmul.f32 %v1570, %v1572
        %v1574 = vadd.f32 %v1570, %v1573
        %vm1575 = vweird.f32 %v1425
        %vm1576 = vweird.f32 %v1570
        %vm1577 = vmor %vm1575, %vm1576
        %v1578 = vsel %vm1577, %v1570, %v1574
        %v1579 = vand.u32 2147483647, %v1425
        %vm1580 = vcmp.eq.f32.partialorder %v1579, 8.507059e+37
        %v1581 = vand.u32 %v1425, 2147483648
        %v1582 = vor.u32 1.1754944e-38, %v1581
        %v1583 = vsel %vm1580, %v1582, %v1578
        %v1584 = vrcp.pop %v1428
        %v1585 = vmul.f32 %v1428, %v1584
        %v1586 = vsub.f32 1.0, %v1585
        %v1587 = vmul.f32 %v1584, %v1586
        %v1588 = vadd.f32 %v1584, %v1587
        %vm1589 = vweird.f32 %v1428
        %vm1590 = vweird.f32 %v1584
        %vm1591 = vmor %vm1589, %vm1590
        %v1592 = vsel %vm1591, %v1584, %v1588
        %v1593 = vand.u32 2147483647, %v1428
        %vm1594 = vcmp.eq.f32.partialorder %v1593, 8.507059e+37
        %v1595 = vand.u32 %v1428, 2147483648
        %v1596 = vor.u32 1.1754944e-38, %v1595
        %v1597 = vsel %vm1594, %v1596, %v1592
        %v1598 = vrcp.pop %v1431
        %v1599 = vmul.f32 %v1431, %v1598
        %v1600 = vsub.f32 1.0, %v1599
        %v1601 = vmul.f32 %v1598, %v1600
        %v1602 = vadd.f32 %v1598, %v1601
        %vm1603 = vweird.f32 %v1431
        %vm1604 = vweird.f32 %v1598
        %vm1605 = vmor %vm1603, %vm1604
        %v1606 = vsel %vm1605, %v1598, %v1602
        %v1607 = vand.u32 2147483647, %v1431
        %vm1608 = vcmp.eq.f32.partialorder %v1607, 8.507059e+37
        %v1609 = vand.u32 %v1431, 2147483648
        %v1610 = vor.u32 1.1754944e-38, %v1609
        %v1611 = vsel %vm1608, %v1610, %v1606
        %v1612 = vrcp.pop %v1434
        %v1613 = vmul.f32 %v1434, %v1612
        %v1614 = vsub.f32 1.0, %v1613
        %v1615 = vmul.f32 %v1612, %v1614
        %v1616 = vadd.f32 %v1612, %v1615
        %vm1617 = vweird.f32 %v1434
        %vm1618 = vweird.f32 %v1612
        %vm1619 = vmor %vm1617, %vm1618
        %v1620 = vsel %vm1619, %v1612, %v1616
        %v1621 = vand.u32 2147483647, %v1434
        %vm1622 = vcmp.eq.f32.partialorder %v1621, 8.507059e+37
        %v1623 = vand.u32 %v1434, 2147483648
        %v1624 = vor.u32 1.1754944e-38, %v1623
        %v1625 = vsel %vm1622, %v1624, %v1620
        %v1626 = vrcp.pop %v1437
        %v1627 = vmul.f32 %v1437, %v1626
        %v1628 = vsub.f32 1.0, %v1627
        %v1629 = vmul.f32 %v1626, %v1628
        %v1630 = vadd.f32 %v1626, %v1629
        %vm1631 = vweird.f32 %v1437
        %vm1632 = vweird.f32 %v1626
        %vm1633 = vmor %vm1631, %vm1632
        %v1634 = vsel %vm1633, %v1626, %v1630
        %v1635 = vand.u32 2147483647, %v1437
        %vm1636 = vcmp.eq.f32.partialorder %v1635, 8.507059e+37
        %v1637 = vand.u32 %v1437, 2147483648
        %v1638 = vor.u32 1.1754944e-38, %v1637
        %v1639 = vsel %vm1636, %v1638, %v1634
        %v1640 = vrcp.pop %v1440
        %v1641 = vmul.f32 %v1440, %v1640
        %v1642 = vsub.f32 1.0, %v1641
        %v1643 = vmul.f32 %v1640, %v1642
        %v1644 = vadd.f32 %v1640, %v1643
        %vm1645 = vweird.f32 %v1440
        %vm1646 = vweird.f32 %v1640
        %vm1647 = vmor %vm1645, %vm1646
        %v1648 = vsel %vm1647, %v1640, %v1644
        %v1649 = vand.u32 2147483647, %v1440
        %vm1650 = vcmp.eq.f32.partialorder %v1649, 8.507059e+37
        %v1651 = vand.u32 %v1440, 2147483648
        %v1652 = vor.u32 1.1754944e-38, %v1651
        %v1653 = vsel %vm1650, %v1652, %v1648
        %v1654 = vrcp.pop %v1443
        %v1655 = vmul.f32 %v1443, %v1654
        %v1656 = vsub.f32 1.0, %v1655
        %v1657 = vmul.f32 %v1654, %v1656
        %v1658 = vadd.f32 %v1654, %v1657
        %vm1659 = vweird.f32 %v1443
        %vm1660 = vweird.f32 %v1654
        %vm1661 = vmor %vm1659, %vm1660
        %v1662 = vsel %vm1661, %v1654, %v1658
        %v1663 = vand.u32 2147483647, %v1443
        %vm1664 = vcmp.eq.f32.partialorder %v1663, 8.507059e+37
        %v1665 = vand.u32 %v1443, 2147483648
        %v1666 = vor.u32 1.1754944e-38, %v1665
        %v1667 = vsel %vm1664, %v1666, %v1662
        %v1668 = vmul.f32 %v1333, %v1457
        %v1669 = vmul.f32 %v1335, %v1457
        %v1670 = vmul.f32 %v1337, %v1471
        %v1671 = vmul.f32 %v1339, %v1471
        %v1672 = vmul.f32 %v1341, %v1485
        %v1673 = vmul.f32 %v1343, %v1485
        %v1674 = vmul.f32 %v1345, %v1499
        %v1675 = vmul.f32 %v1347, %v1499
        %v1676 = vmul.f32 %v1349, %v1513
        %v1677 = vmul.f32 %v1351, %v1513
        %v1678 = vmul.f32 %v1353, %v1527
        %v1679 = vmul.f32 %v1355, %v1527
        %v1680 = vmul.f32 %v1357, %v1541
        %v1681 = vmul.f32 %v1359, %v1541
        %v1682 = vmul.f32 %v1361, %v1555
        %v1683 = vmul.f32 %v1363, %v1555
        %v1684 = vmul.f32 %v1365, %v1569
        %v1685 = vmul.f32 %v1367, %v1569
        %v1686 = vmul.f32 %v1369, %v1583
        %v1687 = vmul.f32 %v1371, %v1583
        %v1688 = vmul.f32 %v1373, %v1597
        %v1689 = vmul.f32 %v1375, %v1597
        %v1690 = vmul.f32 %v1377, %v1611
        %v1691 = vmul.f32 %v1379, %v1611
        %v1692 = vmul.f32 %v1381, %v1625
        %v1693 = vmul.f32 %v1383, %v1625
        %v1694 = vmul.f32 %v1385, %v1639
        %v1695 = vmul.f32 %v1387, %v1639
        %v1696 = vmul.f32 %v1389, %v1653
        %v1697 = vmul.f32 %v1391, %v1653
        %v1698 = vmul.f32 %v1393, %v1667
        %v1699 = vmul.f32 %v1395, %v1667
        %1700 = vmatpush.msra.mxu0 %v927
        %1701 = vmatpush.msra.mxu0 %v924
        %1702 = vmatpush.msra.mxu0 %v921
        %1703 = vmatpush.msra.mxu0 %v918
        %1704 = vmatpush.msra.mxu0 %v915
        %1705 = vmatpush.msra.mxu0 %v912
        %1706 = vmatpush.msra.mxu0 %v909
        %1707 = vmatpush.msra.mxu0 %v906
        %1708 = vmatpush.msra.mxu0 %v903
        %1709 = vmatpush.msra.mxu0 %v900
        %1710 = vmatpush.msra.mxu0 %v897
        %1711 = vmatpush.msra.mxu0 %v894
        %1712 = vmatpush.msra.mxu0 %v891
        %1713 = vmatpush.msra.mxu0 %v888
        %1714 = vmatpush.msra.mxu0 %v885
        %1715 = vmatpush.msra.mxu0 %v882
        %1716 = vmatmul.f32.gmra.mxu0 %v1668
        %v1717 = vpop.f32.mrf.mxu0
        %v1718 = vadd.f32 0.0, %v1717
        %1719 = vmatmul.f32.gmra.mxu0 %v1670
        %v1720 = vpop.f32.mrf.mxu0
        %v1721 = vadd.f32 0.0, %v1720
        %1722 = vmatmul.f32.gmra.mxu0 %v1672
        %v1723 = vpop.f32.mrf.mxu0
        %v1724 = vadd.f32 0.0, %v1723
        %1725 = vmatmul.f32.gmra.mxu0 %v1674
        %v1726 = vpop.f32.mrf.mxu0
        %v1727 = vadd.f32 0.0, %v1726
        %1728 = vmatmul.f32.gmra.mxu0 %v1676
        %v1729 = vpop.f32.mrf.mxu0
        %v1730 = vadd.f32 0.0, %v1729
        %1731 = vmatmul.f32.gmra.mxu0 %v1678
        %v1732 = vpop.f32.mrf.mxu0
        %v1733 = vadd.f32 0.0, %v1732
        %1734 = vmatmul.f32.gmra.mxu0 %v1680
        %v1735 = vpop.f32.mrf.mxu0
        %v1736 = vadd.f32 0.0, %v1735
        %1737 = vmatmul.f32.gmra.mxu0 %v1682
        %v1738 = vpop.f32.mrf.mxu0
        %v1739 = vadd.f32 0.0, %v1738
        %1740 = vmatmul.f32.gmra.mxu0 %v1684
        %v1741 = vpop.f32.mrf.mxu0
        %v1742 = vadd.f32 0.0, %v1741
        %1743 = vmatmul.f32.gmra.mxu0 %v1686
        %v1744 = vpop.f32.mrf.mxu0
        %v1745 = vadd.f32 0.0, %v1744
        %1746 = vmatmul.f32.gmra.mxu0 %v1688
        %v1747 = vpop.f32.mrf.mxu0
        %v1748 = vadd.f32 0.0, %v1747
        %1749 = vmatmul.f32.gmra.mxu0 %v1690
        %v1750 = vpop.f32.mrf.mxu0
        %v1751 = vadd.f32 0.0, %v1750
        %1752 = vmatmul.f32.gmra.mxu0 %v1692
        %v1753 = vpop.f32.mrf.mxu0
        %v1754 = vadd.f32 0.0, %v1753
        %1755 = vmatmul.f32.gmra.mxu0 %v1694
        %v1756 = vpop.f32.mrf.mxu0
        %v1757 = vadd.f32 0.0, %v1756
        %1758 = vmatmul.f32.gmra.mxu0 %v1696
        %v1759 = vpop.f32.mrf.mxu0
        %v1760 = vadd.f32 0.0, %v1759
        %1761 = vmatmul.f32.gmra.mxu0 %v1698
        %v1762 = vpop.f32.mrf.mxu0
        %v1763 = vadd.f32 0.0, %v1762
        %1764 = vdwg.mxu0
        %1765 = vmatpush.msra.mxu0 %v975
        %1766 = vmatpush.msra.mxu0 %v972
        %1767 = vmatpush.msra.mxu0 %v969
        %1768 = vmatpush.msra.mxu0 %v966
        %1769 = vmatpush.msra.mxu0 %v963
        %1770 = vmatpush.msra.mxu0 %v960
        %1771 = vmatpush.msra.mxu0 %v957
        %1772 = vmatpush.msra.mxu0 %v954
        %1773 = vmatpush.msra.mxu0 %v951
        %1774 = vmatpush.msra.mxu0 %v948
        %1775 = vmatpush.msra.mxu0 %v945
        %1776 = vmatpush.msra.mxu0 %v942
        %1777 = vmatpush.msra.mxu0 %v939
        %1778 = vmatpush.msra.mxu0 %v936
        %1779 = vmatpush.msra.mxu0 %v933
        %1780 = vmatpush.msra.mxu0 %v930
        %1781 = vmatmul.f32.gmra.mxu0 %v1669
        %v1782 = vpop.f32.mrf.mxu0
        %v1783 = vadd.f32 %v1718, %v1782
        %1784 = vmatmul.f32.gmra.mxu0 %v1671
        %v1785 = vpop.f32.mrf.mxu0
        %v1786 = vadd.f32 %v1721, %v1785
        %1787 = vmatmul.f32.gmra.mxu0 %v1673
        %v1788 = vpop.f32.mrf.mxu0
        %v1789 = vadd.f32 %v1724, %v1788
        %1790 = vmatmul.f32.gmra.mxu0 %v1675
        %v1791 = vpop.f32.mrf.mxu0
        %v1792 = vadd.f32 %v1727, %v1791
        %1793 = vmatmul.f32.gmra.mxu0 %v1677
        %v1794 = vpop.f32.mrf.mxu0
        %v1795 = vadd.f32 %v1730, %v1794
        %1796 = vmatmul.f32.gmra.mxu0 %v1679
        %v1797 = vpop.f32.mrf.mxu0
        %v1798 = vadd.f32 %v1733, %v1797
        %1799 = vmatmul.f32.gmra.mxu0 %v1681
        %v1800 = vpop.f32.mrf.mxu0
        %v1801 = vadd.f32 %v1736, %v1800
        %1802 = vmatmul.f32.gmra.mxu0 %v1683
        %v1803 = vpop.f32.mrf.mxu0
        %v1804 = vadd.f32 %v1739, %v1803
        %1805 = vmatmul.f32.gmra.mxu0 %v1685
        %v1806 = vpop.f32.mrf.mxu0
        %v1807 = vadd.f32 %v1742, %v1806
        %1808 = vmatmul.f32.gmra.mxu0 %v1687
        %v1809 = vpop.f32.mrf.mxu0
        %v1810 = vadd.f32 %v1745, %v1809
        %1811 = vmatmul.f32.gmra.mxu0 %v1689
        %v1812 = vpop.f32.mrf.mxu0
        %v1813 = vadd.f32 %v1748, %v1812
        %1814 = vmatmul.f32.gmra.mxu0 %v1691
        %v1815 = vpop.f32.mrf.mxu0
        %v1816 = vadd.f32 %v1751, %v1815
        %1817 = vmatmul.f32.gmra.mxu0 %v1693
        %v1818 = vpop.f32.mrf.mxu0
        %v1819 = vadd.f32 %v1754, %v1818
        %1820 = vmatmul.f32.gmra.mxu0 %v1695
        %v1821 = vpop.f32.mrf.mxu0
        %v1822 = vadd.f32 %v1757, %v1821
        %1823 = vmatmul.f32.gmra.mxu0 %v1697
        %v1824 = vpop.f32.mrf.mxu0
        %v1825 = vadd.f32 %v1760, %v1824
        %1826 = vmatmul.f32.gmra.mxu0 %v1699
        %v1827 = vpop.f32.mrf.mxu0
        %v1828 = vadd.f32 %v1763, %v1827
        %1829 = vdwg.mxu0
        %1830 = vrot.lane.b32.xlu0 %v695, 96
        %v1831 = vpop.permute.xlu0 %1830
        %1832 = vrot.lane.b32.xlu0 %v696, 96
        %v1833 = vpop.permute.xlu0 %1832
        %1834 = vrot.lane.b32.xlu0 %v697, 96
        %v1835 = vpop.permute.xlu0 %1834
        %1836 = vrot.lane.b32.xlu0 %v698, 96
        %v1837 = vpop.permute.xlu0 %1836
        %1838 = vrot.lane.b32.xlu0 %v699, 96
        %v1839 = vpop.permute.xlu0 %1838
        %1840 = vrot.lane.b32.xlu0 %v700, 96
        %v1841 = vpop.permute.xlu0 %1840
        %1842 = vrot.lane.b32.xlu0 %v701, 96
        %v1843 = vpop.permute.xlu0 %1842
        %1844 = vrot.lane.b32.xlu0 %v702, 96
        %v1845 = vpop.permute.xlu0 %1844
        %1846 = vrot.lane.b32.xlu0 %v703, 96
        %v1847 = vpop.permute.xlu0 %1846
        %1848 = vrot.lane.b32.xlu0 %v704, 96
        %v1849 = vpop.permute.xlu0 %1848
        %1850 = vrot.lane.b32.xlu0 %v705, 96
        %v1851 = vpop.permute.xlu0 %1850
        %1852 = vrot.lane.b32.xlu0 %v706, 96
        %v1853 = vpop.permute.xlu0 %1852
        %1854 = vrot.lane.b32.xlu0 %v707, 96
        %v1855 = vpop.permute.xlu0 %1854
        %1856 = vrot.lane.b32.xlu0 %v708, 96
        %v1857 = vpop.permute.xlu0 %1856
        %1858 = vrot.lane.b32.xlu0 %v709, 96
        %v1859 = vpop.permute.xlu0 %1858
        %1860 = vrot.lane.b32.xlu0 %v710, 96
        %v1861 = vpop.permute.xlu0 %1860
        %1862 = vrot.lane.b32.xlu0 %v749, 96
        %v1863 = vpop.permute.xlu0 %1862
        %1864 = vrot.lane.b32.xlu0 %v752, 96
        %v1865 = vpop.permute.xlu0 %1864
        %1866 = vrot.lane.b32.xlu0 %v755, 96
        %v1867 = vpop.permute.xlu0 %1866
        %1868 = vrot.lane.b32.xlu0 %v758, 96
        %v1869 = vpop.permute.xlu0 %1868
        %1870 = vrot.lane.b32.xlu0 %v761, 96
        %v1871 = vpop.permute.xlu0 %1870
        %1872 = vrot.lane.b32.xlu0 %v764, 96
        %v1873 = vpop.permute.xlu0 %1872
        %1874 = vrot.lane.b32.xlu0 %v767, 96
        %v1875 = vpop.permute.xlu0 %1874
        %1876 = vrot.lane.b32.xlu0 %v770, 96
        %v1877 = vpop.permute.xlu0 %1876
        %1878 = vrot.lane.b32.xlu0 %v773, 96
        %v1879 = vpop.permute.xlu0 %1878
        %1880 = vrot.lane.b32.xlu0 %v776, 96
        %v1881 = vpop.permute.xlu0 %1880
        %1882 = vrot.lane.b32.xlu0 %v779, 96
        %v1883 = vpop.permute.xlu0 %1882
        %1884 = vrot.lane.b32.xlu0 %v782, 96
        %v1885 = vpop.permute.xlu0 %1884
        %1886 = vrot.lane.b32.xlu0 %v785, 96
        %v1887 = vpop.permute.xlu0 %1886
        %1888 = vrot.lane.b32.xlu0 %v788, 96
        %v1889 = vpop.permute.xlu0 %1888
        %1890 = vrot.lane.b32.xlu0 %v791, 96
        %v1891 = vpop.permute.xlu0 %1890
        %1892 = vrot.lane.b32.xlu0 %v794, 96
        %v1893 = vpop.permute.xlu0 %1892
        %1894 = vrot.lane.b32.xlu0 %v797, 96
        %v1895 = vpop.permute.xlu0 %1894
        %1896 = vrot.lane.b32.xlu0 %v800, 96
        %v1897 = vpop.permute.xlu0 %1896
        %1898 = vrot.lane.b32.xlu0 %v803, 96
        %v1899 = vpop.permute.xlu0 %1898
        %1900 = vrot.lane.b32.xlu0 %v806, 96
        %v1901 = vpop.permute.xlu0 %1900
        %1902 = vrot.lane.b32.xlu0 %v809, 96
        %v1903 = vpop.permute.xlu0 %1902
        %1904 = vrot.lane.b32.xlu0 %v812, 96
        %v1905 = vpop.permute.xlu0 %1904
        %1906 = vrot.lane.b32.xlu0 %v815, 96
        %v1907 = vpop.permute.xlu0 %1906
        %1908 = vrot.lane.b32.xlu0 %v818, 96
        %v1909 = vpop.permute.xlu0 %1908
        %1910 = vrot.lane.b32.xlu0 %v821, 96
        %v1911 = vpop.permute.xlu0 %1910
        %1912 = vrot.lane.b32.xlu0 %v824, 96
        %v1913 = vpop.permute.xlu0 %1912
        %1914 = vrot.lane.b32.xlu0 %v827, 96
        %v1915 = vpop.permute.xlu0 %1914
        %1916 = vrot.lane.b32.xlu0 %v830, 96
        %v1917 = vpop.permute.xlu0 %1916
        %1918 = vrot.lane.b32.xlu0 %v833, 96
        %v1919 = vpop.permute.xlu0 %1918
        %1920 = vrot.lane.b32.xlu0 %v836, 96
        %v1921 = vpop.permute.xlu0 %1920
        %1922 = vrot.lane.b32.xlu0 %v839, 96
        %v1923 = vpop.permute.xlu0 %1922
        %1924 = vrot.lane.b32.xlu0 %v842, 96
        %v1925 = vpop.permute.xlu0 %1924
        %v1926 = vsel %vm977, %v1831, 0
        %v1928 = vsel %vm977, %v1833, 0
        %v1930 = vsel %vm977, %v1835, 0
        %v1932 = vsel %vm977, %v1837, 0
        %v1934 = vsel %vm977, %v1839, 0
        %v1936 = vsel %vm977, %v1841, 0
        %v1938 = vsel %vm977, %v1843, 0
        %v1940 = vsel %vm977, %v1845, 0
        %v1942 = vsel %vm977, %v1847, 0
        %v1944 = vsel %vm977, %v1849, 0
        %v1946 = vsel %vm977, %v1851, 0
        %v1948 = vsel %vm977, %v1853, 0
        %v1950 = vsel %vm977, %v1855, 0
        %v1952 = vsel %vm977, %v1857, 0
        %v1954 = vsel %vm977, %v1859, 0
        %v1956 = vsel %vm977, %v1861, 0
        %v1958 = vsel %vm977, %v1863, 0
        %v1960 = vsel %vm977, %v1865, 0
        %v1962 = vsel %vm977, %v1867, 0
        %v1964 = vsel %vm977, %v1869, 0
        %v1966 = vsel %vm977, %v1871, 0
        %v1968 = vsel %vm977, %v1873, 0
        %v1970 = vsel %vm977, %v1875, 0
        %v1972 = vsel %vm977, %v1877, 0
        %v1974 = vsel %vm977, %v1879, 0
        %v1976 = vsel %vm977, %v1881, 0
        %v1978 = vsel %vm977, %v1883, 0
        %v1980 = vsel %vm977, %v1885, 0
        %v1982 = vsel %vm977, %v1887, 0
        %v1984 = vsel %vm977, %v1889, 0
        %v1986 = vsel %vm977, %v1891, 0
        %v1988 = vsel %vm977, %v1893, 0
        %v1990 = vsel %vm977, %v1895, 0
        %v1992 = vsel %vm977, %v1897, 0
        %v1994 = vsel %vm977, %v1899, 0
        %v1996 = vsel %vm977, %v1901, 0
        %v1998 = vsel %vm977, %v1903, 0
        %v2000 = vsel %vm977, %v1905, 0
        %v2002 = vsel %vm977, %v1907, 0
        %v2004 = vsel %vm977, %v1909, 0
        %v2006 = vsel %vm977, %v1911, 0
        %v2008 = vsel %vm977, %v1913, 0
        %v2010 = vsel %vm977, %v1915, 0
        %v2012 = vsel %vm977, %v1917, 0
        %v2014 = vsel %vm977, %v1919, 0
        %v2016 = vsel %vm977, %v1921, 0
        %v2018 = vsel %vm977, %v1923, 0
        %v2020 = vsel %vm977, %v1925, 0
        %2022 = vmatpush.xpose.msra.mxu0 %v1988
        %2023 = vmatpush.xpose.msra.mxu0 %v1986
        %2024 = vmatpush.xpose.msra.mxu0 %v1984
        %2025 = vmatpush.xpose.msra.mxu0 %v1982
        %2026 = vmatpush.xpose.msra.mxu0 %v1980
        %2027 = vmatpush.xpose.msra.mxu0 %v1978
        %2028 = vmatpush.xpose.msra.mxu0 %v1976
        %2029 = vmatpush.xpose.msra.mxu0 %v1974
        %2030 = vmatpush.xpose.msra.mxu0 %v1972
        %2031 = vmatpush.xpose.msra.mxu0 %v1970
        %2032 = vmatpush.xpose.msra.mxu0 %v1968
        %2033 = vmatpush.xpose.msra.mxu0 %v1966
        %2034 = vmatpush.xpose.msra.mxu0 %v1964
        %2035 = vmatpush.xpose.msra.mxu0 %v1962
        %2036 = vmatpush.xpose.msra.mxu0 %v1960
        %2037 = vmatpush.xpose.msra.mxu0 %v1958
        %2038 = vmatmul.f32.gmra.mxu0 %v1926
        %v2039 = vpop.f32.mrf.mxu0
        %v2040 = vadd.f32 0.0, %v2039
        %2041 = vmatmul.f32.gmra.mxu0 %v1928
        %v2042 = vpop.f32.mrf.mxu0
        %v2043 = vadd.f32 0.0, %v2042
        %2044 = vmatmul.f32.gmra.mxu0 %v1930
        %v2045 = vpop.f32.mrf.mxu0
        %v2046 = vadd.f32 0.0, %v2045
        %2047 = vmatmul.f32.gmra.mxu0 %v1932
        %v2048 = vpop.f32.mrf.mxu0
        %v2049 = vadd.f32 0.0, %v2048
        %2050 = vmatmul.f32.gmra.mxu0 %v1934
        %v2051 = vpop.f32.mrf.mxu0
        %v2052 = vadd.f32 0.0, %v2051
        %2053 = vmatmul.f32.gmra.mxu0 %v1936
        %v2054 = vpop.f32.mrf.mxu0
        %v2055 = vadd.f32 0.0, %v2054
        %2056 = vmatmul.f32.gmra.mxu0 %v1938
        %v2057 = vpop.f32.mrf.mxu0
        %v2058 = vadd.f32 0.0, %v2057
        %2059 = vmatmul.f32.gmra.mxu0 %v1940
        %v2060 = vpop.f32.mrf.mxu0
        %v2061 = vadd.f32 0.0, %v2060
        %2062 = vmatmul.f32.gmra.mxu0 %v1942
        %v2063 = vpop.f32.mrf.mxu0
        %v2064 = vadd.f32 0.0, %v2063
        %2065 = vmatmul.f32.gmra.mxu0 %v1944
        %v2066 = vpop.f32.mrf.mxu0
        %v2067 = vadd.f32 0.0, %v2066
        %2068 = vmatmul.f32.gmra.mxu0 %v1946
        %v2069 = vpop.f32.mrf.mxu0
        %v2070 = vadd.f32 0.0, %v2069
        %2071 = vmatmul.f32.gmra.mxu0 %v1948
        %v2072 = vpop.f32.mrf.mxu0
        %v2073 = vadd.f32 0.0, %v2072
        %2074 = vmatmul.f32.gmra.mxu0 %v1950
        %v2075 = vpop.f32.mrf.mxu0
        %v2076 = vadd.f32 0.0, %v2075
        %2077 = vmatmul.f32.gmra.mxu0 %v1952
        %v2078 = vpop.f32.mrf.mxu0
        %v2079 = vadd.f32 0.0, %v2078
        %2080 = vmatmul.f32.gmra.mxu0 %v1954
        %v2081 = vpop.f32.mrf.mxu0
        %v2082 = vadd.f32 0.0, %v2081
        %2083 = vmatmul.f32.gmra.mxu0 %v1956
        %v2084 = vpop.f32.mrf.mxu0
        %v2085 = vadd.f32 0.0, %v2084
        %2086 = vdwg.mxu0
        %2087 = vmatpush.xpose.msra.mxu0 %v2020
        %2088 = vmatpush.xpose.msra.mxu0 %v2018
        %2089 = vmatpush.xpose.msra.mxu0 %v2016
        %2090 = vmatpush.xpose.msra.mxu0 %v2014
        %2091 = vmatpush.xpose.msra.mxu0 %v2012
        %2092 = vmatpush.xpose.msra.mxu0 %v2010
        %2093 = vmatpush.xpose.msra.mxu0 %v2008
        %2094 = vmatpush.xpose.msra.mxu0 %v2006
        %2095 = vmatpush.xpose.msra.mxu0 %v2004
        %2096 = vmatpush.xpose.msra.mxu0 %v2002
        %2097 = vmatpush.xpose.msra.mxu0 %v2000
        %2098 = vmatpush.xpose.msra.mxu0 %v1998
        %2099 = vmatpush.xpose.msra.mxu0 %v1996
        %2100 = vmatpush.xpose.msra.mxu0 %v1994
        %2101 = vmatpush.xpose.msra.mxu0 %v1992
        %2102 = vmatpush.xpose.msra.mxu0 %v1990
        %2103 = vmatmul.f32.gmra.mxu0 %v1926
        %v2104 = vpop.f32.mrf.mxu0
        %v2105 = vadd.f32 0.0, %v2104
        %2106 = vmatmul.f32.gmra.mxu0 %v1928
        %v2107 = vpop.f32.mrf.mxu0
        %v2108 = vadd.f32 0.0, %v2107
        %2109 = vmatmul.f32.gmra.mxu0 %v1930
        %v2110 = vpop.f32.mrf.mxu0
        %v2111 = vadd.f32 0.0, %v2110
        %2112 = vmatmul.f32.gmra.mxu0 %v1932
        %v2113 = vpop.f32.mrf.mxu0
        %v2114 = vadd.f32 0.0, %v2113
        %2115 = vmatmul.f32.gmra.mxu0 %v1934
        %v2116 = vpop.f32.mrf.mxu0
        %v2117 = vadd.f32 0.0, %v2116
        %2118 = vmatmul.f32.gmra.mxu0 %v1936
        %v2119 = vpop.f32.mrf.mxu0
        %v2120 = vadd.f32 0.0, %v2119
        %2121 = vmatmul.f32.gmra.mxu0 %v1938
        %v2122 = vpop.f32.mrf.mxu0
        %v2123 = vadd.f32 0.0, %v2122
        %2124 = vmatmul.f32.gmra.mxu0 %v1940
        %v2125 = vpop.f32.mrf.mxu0
        %v2126 = vadd.f32 0.0, %v2125
        %2127 = vmatmul.f32.gmra.mxu0 %v1942
        %v2128 = vpop.f32.mrf.mxu0
        %v2129 = vadd.f32 0.0, %v2128
        %2130 = vmatmul.f32.gmra.mxu0 %v1944
        %v2131 = vpop.f32.mrf.mxu0
        %v2132 = vadd.f32 0.0, %v2131
        %2133 = vmatmul.f32.gmra.mxu0 %v1946
        %v2134 = vpop.f32.mrf.mxu0
        %v2135 = vadd.f32 0.0, %v2134
        %2136 = vmatmul.f32.gmra.mxu0 %v1948
        %v2137 = vpop.f32.mrf.mxu0
        %v2138 = vadd.f32 0.0, %v2137
        %2139 = vmatmul.f32.gmra.mxu0 %v1950
        %v2140 = vpop.f32.mrf.mxu0
        %v2141 = vadd.f32 0.0, %v2140
        %2142 = vmatmul.f32.gmra.mxu0 %v1952
        %v2143 = vpop.f32.mrf.mxu0
        %v2144 = vadd.f32 0.0, %v2143
        %2145 = vmatmul.f32.gmra.mxu0 %v1954
        %v2146 = vpop.f32.mrf.mxu0
        %v2147 = vadd.f32 0.0, %v2146
        %2148 = vmatmul.f32.gmra.mxu0 %v1956
        %v2149 = vpop.f32.mrf.mxu0
        %v2150 = vadd.f32 0.0, %v2149
        %2151 = vdwg.mxu0
        %v2152 = vmax.f32 %v2040, %v2105
        %2153 = vmax.xlane.f32.xlu0 %v2152
        %v2154 = vpop.xlane.xlu0 %2153
        %v2155 = vmax.f32 %v2043, %v2108
        %2156 = vmax.xlane.f32.xlu0 %v2155
        %v2157 = vpop.xlane.xlu0 %2156
        %v2158 = vmax.f32 %v2046, %v2111
        %2159 = vmax.xlane.f32.xlu0 %v2158
        %v2160 = vpop.xlane.xlu0 %2159
        %v2161 = vmax.f32 %v2049, %v2114
        %2162 = vmax.xlane.f32.xlu0 %v2161
        %v2163 = vpop.xlane.xlu0 %2162
        %v2164 = vmax.f32 %v2052, %v2117
        %2165 = vmax.xlane.f32.xlu0 %v2164
        %v2166 = vpop.xlane.xlu0 %2165
        %v2167 = vmax.f32 %v2055, %v2120
        %2168 = vmax.xlane.f32.xlu0 %v2167
        %v2169 = vpop.xlane.xlu0 %2168
        %v2170 = vmax.f32 %v2058, %v2123
        %2171 = vmax.xlane.f32.xlu0 %v2170
        %v2172 = vpop.xlane.xlu0 %2171
        %v2173 = vmax.f32 %v2061, %v2126
        %2174 = vmax.xlane.f32.xlu0 %v2173
        %v2175 = vpop.xlane.xlu0 %2174
        %v2176 = vmax.f32 %v2064, %v2129
        %2177 = vmax.xlane.f32.xlu0 %v2176
        %v2178 = vpop.xlane.xlu0 %2177
        %v2179 = vmax.f32 %v2067, %v2132
        %2180 = vmax.xlane.f32.xlu0 %v2179
        %v2181 = vpop.xlane.xlu0 %2180
        %v2182 = vmax.f32 %v2070, %v2135
        %2183 = vmax.xlane.f32.xlu0 %v2182
        %v2184 = vpop.xlane.xlu0 %2183
        %v2185 = vmax.f32 %v2073, %v2138
        %2186 = vmax.xlane.f32.xlu0 %v2185
        %v2187 = vpop.xlane.xlu0 %2186
        %v2188 = vmax.f32 %v2076, %v2141
        %2189 = vmax.xlane.f32.xlu0 %v2188
        %v2190 = vpop.xlane.xlu0 %2189
        %v2191 = vmax.f32 %v2079, %v2144
        %2192 = vmax.xlane.f32.xlu0 %v2191
        %v2193 = vpop.xlane.xlu0 %2192
        %v2194 = vmax.f32 %v2082, %v2147
        %2195 = vmax.xlane.f32.xlu0 %v2194
        %v2196 = vpop.xlane.xlu0 %2195
        %v2197 = vmax.f32 %v2085, %v2150
        %2198 = vmax.xlane.f32.xlu0 %v2197
        %v2199 = vpop.xlane.xlu0 %2198
        %v2200 = vsub.f32 %v2040, %v2154
        %v2201 = vsub.f32 %v2105, %v2154
        %v2202 = vsub.f32 %v2043, %v2157
        %v2203 = vsub.f32 %v2108, %v2157
        %v2204 = vsub.f32 %v2046, %v2160
        %v2205 = vsub.f32 %v2111, %v2160
        %v2206 = vsub.f32 %v2049, %v2163
        %v2207 = vsub.f32 %v2114, %v2163
        %v2208 = vsub.f32 %v2052, %v2166
        %v2209 = vsub.f32 %v2117, %v2166
        %v2210 = vsub.f32 %v2055, %v2169
        %v2211 = vsub.f32 %v2120, %v2169
        %v2212 = vsub.f32 %v2058, %v2172
        %v2213 = vsub.f32 %v2123, %v2172
        %v2214 = vsub.f32 %v2061, %v2175
        %v2215 = vsub.f32 %v2126, %v2175
        %v2216 = vsub.f32 %v2064, %v2178
        %v2217 = vsub.f32 %v2129, %v2178
        %v2218 = vsub.f32 %v2067, %v2181
        %v2219 = vsub.f32 %v2132, %v2181
        %v2220 = vsub.f32 %v2070, %v2184
        %v2221 = vsub.f32 %v2135, %v2184
        %v2222 = vsub.f32 %v2073, %v2187
        %v2223 = vsub.f32 %v2138, %v2187
        %v2224 = vsub.f32 %v2076, %v2190
        %v2225 = vsub.f32 %v2141, %v2190
        %v2226 = vsub.f32 %v2079, %v2193
        %v2227 = vsub.f32 %v2144, %v2193
        %v2228 = vsub.f32 %v2082, %v2196
        %v2229 = vsub.f32 %v2147, %v2196
        %v2230 = vsub.f32 %v2085, %v2199
        %v2231 = vsub.f32 %v2150, %v2199
        %v2232 = vmul.f32 %v2200, 1.442695
        %v2233 = vpow.pop %v2232
        %v2234 = vmul.f32 %v2201, 1.442695
        %v2235 = vpow.pop %v2234
        %v2236 = vmul.f32 %v2202, 1.442695
        %v2237 = vpow.pop %v2236
        %v2238 = vmul.f32 %v2203, 1.442695
        %v2239 = vpow.pop %v2238
        %v2240 = vmul.f32 %v2204, 1.442695
        %v2241 = vpow.pop %v2240
        %v2242 = vmul.f32 %v2205, 1.442695
        %v2243 = vpow.pop %v2242
        %v2244 = vmul.f32 %v2206, 1.442695
        %v2245 = vpow.pop %v2244
        %v2246 = vmul.f32 %v2207, 1.442695
        %v2247 = vpow.pop %v2246
        %v2248 = vmul.f32 %v2208, 1.442695
        %v2249 = vpow.pop %v2248
        %v2250 = vmul.f32 %v2209, 1.442695
        %v2251 = vpow.pop %v2250
        %v2252 = vmul.f32 %v2210, 1.442695
        %v2253 = vpow.pop %v2252
        %v2254 = vmul.f32 %v2211, 1.442695
        %v2255 = vpow.pop %v2254
        %v2256 = vmul.f32 %v2212, 1.442695
        %v2257 = vpow.pop %v2256
        %v2258 = vmul.f32 %v2213, 1.442695
        %v2259 = vpow.pop %v2258
        %v2260 = vmul.f32 %v2214, 1.442695
        %v2261 = vpow.pop %v2260
        %v2262 = vmul.f32 %v2215, 1.442695
        %v2263 = vpow.pop %v2262
        %v2264 = vmul.f32 %v2216, 1.442695
        %v2265 = vpow.pop %v2264
        %v2266 = vmul.f32 %v2217, 1.442695
        %v2267 = vpow.pop %v2266
        %v2268 = vmul.f32 %v2218, 1.442695
        %v2269 = vpow.pop %v2268
        %v2270 = vmul.f32 %v2219, 1.442695
        %v2271 = vpow.pop %v2270
        %v2272 = vmul.f32 %v2220, 1.442695
        %v2273 = vpow.pop %v2272
        %v2274 = vmul.f32 %v2221, 1.442695
        %v2275 = vpow.pop %v2274
        %v2276 = vmul.f32 %v2222, 1.442695
        %v2277 = vpow.pop %v2276
        %v2278 = vmul.f32 %v2223, 1.442695
        %v2279 = vpow.pop %v2278
        %v2280 = vmul.f32 %v2224, 1.442695
        %v2281 = vpow.pop %v2280
        %v2282 = vmul.f32 %v2225, 1.442695
        %v2283 = vpow.pop %v2282
        %v2284 = vmul.f32 %v2226, 1.442695
        %v2285 = vpow.pop %v2284
        %v2286 = vmul.f32 %v2227, 1.442695
        %v2287 = vpow.pop %v2286
        %v2288 = vmul.f32 %v2228, 1.442695
        %v2289 = vpow.pop %v2288
        %v2290 = vmul.f32 %v2229, 1.442695
        %v2291 = vpow.pop %v2290
        %v2292 = vmul.f32 %v2230, 1.442695
        %v2293 = vpow.pop %v2292
        %v2294 = vmul.f32 %v2231, 1.442695
        %v2295 = vpow.pop %v2294
        %v2296 = vadd.f32 %v2233, %v2235
        %2297 = vadd.xlane.f32.xlu0 %v2296
        %v2298 = vpop.xlane.xlu0 %2297
        %v2299 = vadd.f32 %v2237, %v2239
        %2300 = vadd.xlane.f32.xlu0 %v2299
        %v2301 = vpop.xlane.xlu0 %2300
        %v2302 = vadd.f32 %v2241, %v2243
        %2303 = vadd.xlane.f32.xlu0 %v2302
        %v2304 = vpop.xlane.xlu0 %2303
        %v2305 = vadd.f32 %v2245, %v2247
        %2306 = vadd.xlane.f32.xlu0 %v2305
        %v2307 = vpop.xlane.xlu0 %2306
        %v2308 = vadd.f32 %v2249, %v2251
        %2309 = vadd.xlane.f32.xlu0 %v2308
        %v2310 = vpop.xlane.xlu0 %2309
        %v2311 = vadd.f32 %v2253, %v2255
        %2312 = vadd.xlane.f32.xlu0 %v2311
        %v2313 = vpop.xlane.xlu0 %2312
        %v2314 = vadd.f32 %v2257, %v2259
        %2315 = vadd.xlane.f32.xlu0 %v2314
        %v2316 = vpop.xlane.xlu0 %2315
        %v2317 = vadd.f32 %v2261, %v2263
        %2318 = vadd.xlane.f32.xlu0 %v2317
        %v2319 = vpop.xlane.xlu0 %2318
        %v2320 = vadd.f32 %v2265, %v2267
        %2321 = vadd.xlane.f32.xlu0 %v2320
        %v2322 = vpop.xlane.xlu0 %2321
        %v2323 = vadd.f32 %v2269, %v2271
        %2324 = vadd.xlane.f32.xlu0 %v2323
        %v2325 = vpop.xlane.xlu0 %2324
        %v2326 = vadd.f32 %v2273, %v2275
        %2327 = vadd.xlane.f32.xlu0 %v2326
        %v2328 = vpop.xlane.xlu0 %2327
        %v2329 = vadd.f32 %v2277, %v2279
        %2330 = vadd.xlane.f32.xlu0 %v2329
        %v2331 = vpop.xlane.xlu0 %2330
        %v2332 = vadd.f32 %v2281, %v2283
        %2333 = vadd.xlane.f32.xlu0 %v2332
        %v2334 = vpop.xlane.xlu0 %2333
        %v2335 = vadd.f32 %v2285, %v2287
        %2336 = vadd.xlane.f32.xlu0 %v2335
        %v2337 = vpop.xlane.xlu0 %2336
        %v2338 = vadd.f32 %v2289, %v2291
        %2339 = vadd.xlane.f32.xlu0 %v2338
        %v2340 = vpop.xlane.xlu0 %2339
        %v2341 = vadd.f32 %v2293, %v2295
        %2342 = vadd.xlane.f32.xlu0 %v2341
        %v2343 = vpop.xlane.xlu0 %2342
        %v2344 = vrcp.pop %v2298
        %v2345 = vmul.f32 %v2298, %v2344
        %v2346 = vsub.f32 1.0, %v2345
        %v2347 = vmul.f32 %v2344, %v2346
        %v2348 = vadd.f32 %v2344, %v2347
        %vm2349 = vweird.f32 %v2298
        %vm2350 = vweird.f32 %v2344
        %vm2351 = vmor %vm2349, %vm2350
        %v2352 = vsel %vm2351, %v2344, %v2348
        %v2353 = vand.u32 2147483647, %v2298
        %vm2354 = vcmp.eq.f32.partialorder %v2353, 8.507059e+37
        %v2355 = vand.u32 %v2298, 2147483648
        %v2356 = vor.u32 1.1754944e-38, %v2355
        %v2357 = vsel %vm2354, %v2356, %v2352
        %v2358 = vrcp.pop %v2301
        %v2359 = vmul.f32 %v2301, %v2358
        %v2360 = vsub.f32 1.0, %v2359
        %v2361 = vmul.f32 %v2358, %v2360
        %v2362 = vadd.f32 %v2358, %v2361
        %vm2363 = vweird.f32 %v2301
        %vm2364 = vweird.f32 %v2358
        %vm2365 = vmor %vm2363, %vm2364
        %v2366 = vsel %vm2365, %v2358, %v2362
        %v2367 = vand.u32 2147483647, %v2301
        %vm2368 = vcmp.eq.f32.partialorder %v2367, 8.507059e+37
        %v2369 = vand.u32 %v2301, 2147483648
        %v2370 = vor.u32 1.1754944e-38, %v2369
        %v2371 = vsel %vm2368, %v2370, %v2366
        %v2372 = vrcp.pop %v2304
        %v2373 = vmul.f32 %v2304, %v2372
        %v2374 = vsub.f32 1.0, %v2373
        %v2375 = vmul.f32 %v2372, %v2374
        %v2376 = vadd.f32 %v2372, %v2375
        %vm2377 = vweird.f32 %v2304
        %vm2378 = vweird.f32 %v2372
        %vm2379 = vmor %vm2377, %vm2378
        %v2380 = vsel %vm2379, %v2372, %v2376
        %v2381 = vand.u32 2147483647, %v2304
        %vm2382 = vcmp.eq.f32.partialorder %v2381, 8.507059e+37
        %v2383 = vand.u32 %v2304, 2147483648
        %v2384 = vor.u32 1.1754944e-38, %v2383
        %v2385 = vsel %vm2382, %v2384, %v2380
        %v2386 = vrcp.pop %v2307
        %v2387 = vmul.f32 %v2307, %v2386
        %v2388 = vsub.f32 1.0, %v2387
        %v2389 = vmul.f32 %v2386, %v2388
        %v2390 = vadd.f32 %v2386, %v2389
        %vm2391 = vweird.f32 %v2307
        %vm2392 = vweird.f32 %v2386
        %vm2393 = vmor %vm2391, %vm2392
        %v2394 = vsel %vm2393, %v2386, %v2390
        %v2395 = vand.u32 2147483647, %v2307
        %vm2396 = vcmp.eq.f32.partialorder %v2395, 8.507059e+37
        %v2397 = vand.u32 %v2307, 2147483648
        %v2398 = vor.u32 1.1754944e-38, %v2397
        %v2399 = vsel %vm2396, %v2398, %v2394
        %v2400 = vrcp.pop %v2310
        %v2401 = vmul.f32 %v2310, %v2400
        %v2402 = vsub.f32 1.0, %v2401
        %v2403 = vmul.f32 %v2400, %v2402
        %v2404 = vadd.f32 %v2400, %v2403
        %vm2405 = vweird.f32 %v2310
        %vm2406 = vweird.f32 %v2400
        %vm2407 = vmor %vm2405, %vm2406
        %v2408 = vsel %vm2407, %v2400, %v2404
        %v2409 = vand.u32 2147483647, %v2310
        %vm2410 = vcmp.eq.f32.partialorder %v2409, 8.507059e+37
        %v2411 = vand.u32 %v2310, 2147483648
        %v2412 = vor.u32 1.1754944e-38, %v2411
        %v2413 = vsel %vm2410, %v2412, %v2408
        %v2414 = vrcp.pop %v2313
        %v2415 = vmul.f32 %v2313, %v2414
        %v2416 = vsub.f32 1.0, %v2415
        %v2417 = vmul.f32 %v2414, %v2416
        %v2418 = vadd.f32 %v2414, %v2417
        %vm2419 = vweird.f32 %v2313
        %vm2420 = vweird.f32 %v2414
        %vm2421 = vmor %vm2419, %vm2420
        %v2422 = vsel %vm2421, %v2414, %v2418
        %v2423 = vand.u32 2147483647, %v2313
        %vm2424 = vcmp.eq.f32.partialorder %v2423, 8.507059e+37
        %v2425 = vand.u32 %v2313, 2147483648
        %v2426 = vor.u32 1.1754944e-38, %v2425
        %v2427 = vsel %vm2424, %v2426, %v2422
        %v2428 = vrcp.pop %v2316
        %v2429 = vmul.f32 %v2316, %v2428
        %v2430 = vsub.f32 1.0, %v2429
        %v2431 = vmul.f32 %v2428, %v2430
        %v2432 = vadd.f32 %v2428, %v2431
        %vm2433 = vweird.f32 %v2316
        %vm2434 = vweird.f32 %v2428
        %vm2435 = vmor %vm2433, %vm2434
        %v2436 = vsel %vm2435, %v2428, %v2432
        %v2437 = vand.u32 2147483647, %v2316
        %vm2438 = vcmp.eq.f32.partialorder %v2437, 8.507059e+37
        %v2439 = vand.u32 %v2316, 2147483648
        %v2440 = vor.u32 1.1754944e-38, %v2439
        %v2441 = vsel %vm2438, %v2440, %v2436
        %v2442 = vrcp.pop %v2319
        %v2443 = vmul.f32 %v2319, %v2442
        %v2444 = vsub.f32 1.0, %v2443
        %v2445 = vmul.f32 %v2442, %v2444
        %v2446 = vadd.f32 %v2442, %v2445
        %vm2447 = vweird.f32 %v2319
        %vm2448 = vweird.f32 %v2442
        %vm2449 = vmor %vm2447, %vm2448
        %v2450 = vsel %vm2449, %v2442, %v2446
        %v2451 = vand.u32 2147483647, %v2319
        %vm2452 = vcmp.eq.f32.partialorder %v2451, 8.507059e+37
        %v2453 = vand.u32 %v2319, 2147483648
        %v2454 = vor.u32 1.1754944e-38, %v2453
        %v2455 = vsel %vm2452, %v2454, %v2450
        %v2456 = vrcp.pop %v2322
        %v2457 = vmul.f32 %v2322, %v2456
        %v2458 = vsub.f32 1.0, %v2457
        %v2459 = vmul.f32 %v2456, %v2458
        %v2460 = vadd.f32 %v2456, %v2459
        %vm2461 = vweird.f32 %v2322
        %vm2462 = vweird.f32 %v2456
        %vm2463 = vmor %vm2461, %vm2462
        %v2464 = vsel %vm2463, %v2456, %v2460
        %v2465 = vand.u32 2147483647, %v2322
        %vm2466 = vcmp.eq.f32.partialorder %v2465, 8.507059e+37
        %v2467 = vand.u32 %v2322, 2147483648
        %v2468 = vor.u32 1.1754944e-38, %v2467
        %v2469 = vsel %vm2466, %v2468, %v2464
        %v2470 = vrcp.pop %v2325
        %v2471 = vmul.f32 %v2325, %v2470
        %v2472 = vsub.f32 1.0, %v2471
        %v2473 = vmul.f32 %v2470, %v2472
        %v2474 = vadd.f32 %v2470, %v2473
        %vm2475 = vweird.f32 %v2325
        %vm2476 = vweird.f32 %v2470
        %vm2477 = vmor %vm2475, %vm2476
        %v2478 = vsel %vm2477, %v2470, %v2474
        %v2479 = vand.u32 2147483647, %v2325
        %vm2480 = vcmp.eq.f32.partialorder %v2479, 8.507059e+37
        %v2481 = vand.u32 %v2325, 2147483648
        %v2482 = vor.u32 1.1754944e-38, %v2481
        %v2483 = vsel %vm2480, %v2482, %v2478
        %v2484 = vrcp.pop %v2328
        %v2485 = vmul.f32 %v2328, %v2484
        %v2486 = vsub.f32 1.0, %v2485
        %v2487 = vmul.f32 %v2484, %v2486
        %v2488 = vadd.f32 %v2484, %v2487
        %vm2489 = vweird.f32 %v2328
        %vm2490 = vweird.f32 %v2484
        %vm2491 = vmor %vm2489, %vm2490
        %v2492 = vsel %vm2491, %v2484, %v2488
        %v2493 = vand.u32 2147483647, %v2328
        %vm2494 = vcmp.eq.f32.partialorder %v2493, 8.507059e+37
        %v2495 = vand.u32 %v2328, 2147483648
        %v2496 = vor.u32 1.1754944e-38, %v2495
        %v2497 = vsel %vm2494, %v2496, %v2492
        %v2498 = vrcp.pop %v2331
        %v2499 = vmul.f32 %v2331, %v2498
        %v2500 = vsub.f32 1.0, %v2499
        %v2501 = vmul.f32 %v2498, %v2500
        %v2502 = vadd.f32 %v2498, %v2501
        %vm2503 = vweird.f32 %v2331
        %vm2504 = vweird.f32 %v2498
        %vm2505 = vmor %vm2503, %vm2504
        %v2506 = vsel %vm2505, %v2498, %v2502
        %v2507 = vand.u32 2147483647, %v2331
        %vm2508 = vcmp.eq.f32.partialorder %v2507, 8.507059e+37
        %v2509 = vand.u32 %v2331, 2147483648
        %v2510 = vor.u32 1.1754944e-38, %v2509
        %v2511 = vsel %vm2508, %v2510, %v2506
        %v2512 = vrcp.pop %v2334
        %v2513 = vmul.f32 %v2334, %v2512
        %v2514 = vsub.f32 1.0, %v2513
        %v2515 = vmul.f32 %v2512, %v2514
        %v2516 = vadd.f32 %v2512, %v2515
        %vm2517 = vweird.f32 %v2334
        %vm2518 = vweird.f32 %v2512
        %vm2519 = vmor %vm2517, %vm2518
        %v2520 = vsel %vm2519, %v2512, %v2516
        %v2521 = vand.u32 2147483647, %v2334
        %vm2522 = vcmp.eq.f32.partialorder %v2521, 8.507059e+37
        %v2523 = vand.u32 %v2334, 2147483648
        %v2524 = vor.u32 1.1754944e-38, %v2523
        %v2525 = vsel %vm2522, %v2524, %v2520
        %v2526 = vrcp.pop %v2337
        %v2527 = vmul.f32 %v2337, %v2526
        %v2528 = vsub.f32 1.0, %v2527
        %v2529 = vmul.f32 %v2526, %v2528
        %v2530 = vadd.f32 %v2526, %v2529
        %vm2531 = vweird.f32 %v2337
        %vm2532 = vweird.f32 %v2526
        %vm2533 = vmor %vm2531, %vm2532
        %v2534 = vsel %vm2533, %v2526, %v2530
        %v2535 = vand.u32 2147483647, %v2337
        %vm2536 = vcmp.eq.f32.partialorder %v2535, 8.507059e+37
        %v2537 = vand.u32 %v2337, 2147483648
        %v2538 = vor.u32 1.1754944e-38, %v2537
        %v2539 = vsel %vm2536, %v2538, %v2534
        %v2540 = vrcp.pop %v2340
        %v2541 = vmul.f32 %v2340, %v2540
        %v2542 = vsub.f32 1.0, %v2541
        %v2543 = vmul.f32 %v2540, %v2542
        %v2544 = vadd.f32 %v2540, %v2543
        %vm2545 = vweird.f32 %v2340
        %vm2546 = vweird.f32 %v2540
        %vm2547 = vmor %vm2545, %vm2546
        %v2548 = vsel %vm2547, %v2540, %v2544
        %v2549 = vand.u32 2147483647, %v2340
        %vm2550 = vcmp.eq.f32.partialorder %v2549, 8.507059e+37
        %v2551 = vand.u32 %v2340, 2147483648
        %v2552 = vor.u32 1.1754944e-38, %v2551
        %v2553 = vsel %vm2550, %v2552, %v2548
        %v2554 = vrcp.pop %v2343
        %v2555 = vmul.f32 %v2343, %v2554
        %v2556 = vsub.f32 1.0, %v2555
        %v2557 = vmul.f32 %v2554, %v2556
        %v2558 = vadd.f32 %v2554, %v2557
        %vm2559 = vweird.f32 %v2343
        %vm2560 = vweird.f32 %v2554
        %vm2561 = vmor %vm2559, %vm2560
        %v2562 = vsel %vm2561, %v2554, %v2558
        %v2563 = vand.u32 2147483647, %v2343
        %vm2564 = vcmp.eq.f32.partialorder %v2563, 8.507059e+37
        %v2565 = vand.u32 %v2343, 2147483648
        %v2566 = vor.u32 1.1754944e-38, %v2565
        %v2567 = vsel %vm2564, %v2566, %v2562
        %v2568 = vmul.f32 %v2233, %v2357
        %v2569 = vmul.f32 %v2235, %v2357
        %v2570 = vmul.f32 %v2237, %v2371
        %v2571 = vmul.f32 %v2239, %v2371
        %v2572 = vmul.f32 %v2241, %v2385
        %v2573 = vmul.f32 %v2243, %v2385
        %v2574 = vmul.f32 %v2245, %v2399
        %v2575 = vmul.f32 %v2247, %v2399
        %v2576 = vmul.f32 %v2249, %v2413
        %v2577 = vmul.f32 %v2251, %v2413
        %v2578 = vmul.f32 %v2253, %v2427
        %v2579 = vmul.f32 %v2255, %v2427
        %v2580 = vmul.f32 %v2257, %v2441
        %v2581 = vmul.f32 %v2259, %v2441
        %v2582 = vmul.f32 %v2261, %v2455
        %v2583 = vmul.f32 %v2263, %v2455
        %v2584 = vmul.f32 %v2265, %v2469
        %v2585 = vmul.f32 %v2267, %v2469
        %v2586 = vmul.f32 %v2269, %v2483
        %v2587 = vmul.f32 %v2271, %v2483
        %v2588 = vmul.f32 %v2273, %v2497
        %v2589 = vmul.f32 %v2275, %v2497
        %v2590 = vmul.f32 %v2277, %v2511
        %v2591 = vmul.f32 %v2279, %v2511
        %v2592 = vmul.f32 %v2281, %v2525
        %v2593 = vmul.f32 %v2283, %v2525
        %v2594 = vmul.f32 %v2285, %v2539
        %v2595 = vmul.f32 %v2287, %v2539
        %v2596 = vmul.f32 %v2289, %v2553
        %v2597 = vmul.f32 %v2291, %v2553
        %v2598 = vmul.f32 %v2293, %v2567
        %v2599 = vmul.f32 %v2295, %v2567
        %2632 = vrot.lane.b32.xlu0 %v882, 96
        %v2633 = vpop.permute.xlu0 %2632
        %2634 = vrot.lane.b32.xlu0 %v885, 96
        %v2635 = vpop.permute.xlu0 %2634
        %2636 = vrot.lane.b32.xlu0 %v888, 96
        %v2637 = vpop.permute.xlu0 %2636
        %2638 = vrot.lane.b32.xlu0 %v891, 96
        %v2639 = vpop.permute.xlu0 %2638
        %2640 = vrot.lane.b32.xlu0 %v894, 96
        %v2641 = vpop.permute.xlu0 %2640
        %2642 = vrot.lane.b32.xlu0 %v897, 96
        %v2643 = vpop.permute.xlu0 %2642
        %2644 = vrot.lane.b32.xlu0 %v900, 96
        %v2645 = vpop.permute.xlu0 %2644
        %2646 = vrot.lane.b32.xlu0 %v903, 96
        %v2647 = vpop.permute.xlu0 %2646
        %2648 = vrot.lane.b32.xlu0 %v906, 96
        %v2649 = vpop.permute.xlu0 %2648
        %2650 = vrot.lane.b32.xlu0 %v909, 96
        %v2651 = vpop.permute.xlu0 %2650
        %2652 = vrot.lane.b32.xlu0 %v912, 96
        %v2653 = vpop.permute.xlu0 %2652
        %2654 = vrot.lane.b32.xlu0 %v915, 96
        %v2655 = vpop.permute.xlu0 %2654
        %2656 = vrot.lane.b32.xlu0 %v918, 96
        %v2657 = vpop.permute.xlu0 %2656
        %2658 = vrot.lane.b32.xlu0 %v921, 96
        %v2659 = vpop.permute.xlu0 %2658
        %2660 = vrot.lane.b32.xlu0 %v924, 96
        %v2661 = vpop.permute.xlu0 %2660
        %2662 = vrot.lane.b32.xlu0 %v927, 96
        %v2663 = vpop.permute.xlu0 %2662
        %2664 = vrot.lane.b32.xlu0 %v930, 96
        %v2665 = vpop.permute.xlu0 %2664
        %2666 = vrot.lane.b32.xlu0 %v933, 96
        %v2667 = vpop.permute.xlu0 %2666
        %2668 = vrot.lane.b32.xlu0 %v936, 96
        %v2669 = vpop.permute.xlu0 %2668
        %2670 = vrot.lane.b32.xlu0 %v939, 96
        %v2671 = vpop.permute.xlu0 %2670
        %2672 = vrot.lane.b32.xlu0 %v942, 96
        %v2673 = vpop.permute.xlu0 %2672
        %2674 = vrot.lane.b32.xlu0 %v945, 96
        %v2675 = vpop.permute.xlu0 %2674
        %2676 = vrot.lane.b32.xlu0 %v948, 96
        %v2677 = vpop.permute.xlu0 %2676
        %2678 = vrot.lane.b32.xlu0 %v951, 96
        %v2679 = vpop.permute.xlu0 %2678
        %2680 = vrot.lane.b32.xlu0 %v954, 96
        %v2681 = vpop.permute.xlu0 %2680
        %2682 = vrot.lane.b32.xlu0 %v957, 96
        %v2683 = vpop.permute.xlu0 %2682
        %2684 = vrot.lane.b32.xlu0 %v960, 96
        %v2685 = vpop.permute.xlu0 %2684
        %2686 = vrot.lane.b32.xlu0 %v963, 96
        %v2687 = vpop.permute.xlu0 %2686
        %2688 = vrot.lane.b32.xlu0 %v966, 96
        %v2689 = vpop.permute.xlu0 %2688
        %2690 = vrot.lane.b32.xlu0 %v969, 96
        %v2691 = vpop.permute.xlu0 %2690
        %2692 = vrot.lane.b32.xlu0 %v972, 96
        %v2693 = vpop.permute.xlu0 %2692
        %2694 = vrot.lane.b32.xlu0 %v975, 96
        %v2695 = vpop.permute.xlu0 %2694
        %2728 = vmatpush.msra.mxu0 %v2663
        %2729 = vmatpush.msra.mxu0 %v2661
        %2730 = vmatpush.msra.mxu0 %v2659
        %2731 = vmatpush.msra.mxu0 %v2657
        %2732 = vmatpush.msra.mxu0 %v2655
        %2733 = vmatpush.msra.mxu0 %v2653
        %2734 = vmatpush.msra.mxu0 %v2651
        %2735 = vmatpush.msra.mxu0 %v2649
        %2736 = vmatpush.msra.mxu0 %v2647
        %2737 = vmatpush.msra.mxu0 %v2645
        %2738 = vmatpush.msra.mxu0 %v2643
        %2739 = vmatpush.msra.mxu0 %v2641
        %2740 = vmatpush.msra.mxu0 %v2639
        %2741 = vmatpush.msra.mxu0 %v2637
        %2742 = vmatpush.msra.mxu0 %v2635
        %2743 = vmatpush.msra.mxu0 %v2633
        %2744 = vmatmul.f32.gmra.mxu0 %v2568
        %v2745 = vpop.f32.mrf.mxu0
        %v2746 = vadd.f32 0.0, %v2745
        %2747 = vmatmul.f32.gmra.mxu0 %v2570
        %v2748 = vpop.f32.mrf.mxu0
        %v2749 = vadd.f32 0.0, %v2748
        %2750 = vmatmul.f32.gmra.mxu0 %v2572
        %v2751 = vpop.f32.mrf.mxu0
        %v2752 = vadd.f32 0.0, %v2751
        %2753 = vmatmul.f32.gmra.mxu0 %v2574
        %v2754 = vpop.f32.mrf.mxu0
        %v2755 = vadd.f32 0.0, %v2754
        %2756 = vmatmul.f32.gmra.mxu0 %v2576
        %v2757 = vpop.f32.mrf.mxu0
        %v2758 = vadd.f32 0.0, %v2757
        %2759 = vmatmul.f32.gmra.mxu0 %v2578
        %v2760 = vpop.f32.mrf.mxu0
        %v2761 = vadd.f32 0.0, %v2760
        %2762 = vmatmul.f32.gmra.mxu0 %v2580
        %v2763 = vpop.f32.mrf.mxu0
        %v2764 = vadd.f32 0.0, %v2763
        %2765 = vmatmul.f32.gmra.mxu0 %v2582
        %v2766 = vpop.f32.mrf.mxu0
        %v2767 = vadd.f32 0.0, %v2766
        %2768 = vmatmul.f32.gmra.mxu0 %v2584
        %v2769 = vpop.f32.mrf.mxu0
        %v2770 = vadd.f32 0.0, %v2769
        %2771 = vmatmul.f32.gmra.mxu0 %v2586
        %v2772 = vpop.f32.mrf.mxu0
        %v2773 = vadd.f32 0.0, %v2772
        %2774 = vmatmul.f32.gmra.mxu0 %v2588
        %v2775 = vpop.f32.mrf.mxu0
        %v2776 = vadd.f32 0.0, %v2775
        %2777 = vmatmul.f32.gmra.mxu0 %v2590
        %v2778 = vpop.f32.mrf.mxu0
        %v2779 = vadd.f32 0.0, %v2778
        %2780 = vmatmul.f32.gmra.mxu0 %v2592
        %v2781 = vpop.f32.mrf.mxu0
        %v2782 = vadd.f32 0.0, %v2781
        %2783 = vmatmul.f32.gmra.mxu0 %v2594
        %v2784 = vpop.f32.mrf.mxu0
        %v2785 = vadd.f32 0.0, %v2784
        %2786 = vmatmul.f32.gmra.mxu0 %v2596
        %v2787 = vpop.f32.mrf.mxu0
        %v2788 = vadd.f32 0.0, %v2787
        %2789 = vmatmul.f32.gmra.mxu0 %v2598
        %v2790 = vpop.f32.mrf.mxu0
        %v2791 = vadd.f32 0.0, %v2790
        %2792 = vdwg.mxu0
        %2793 = vmatpush.msra.mxu0 %v2695
        %2794 = vmatpush.msra.mxu0 %v2693
        %2795 = vmatpush.msra.mxu0 %v2691
        %2796 = vmatpush.msra.mxu0 %v2689
        %2797 = vmatpush.msra.mxu0 %v2687
        %2798 = vmatpush.msra.mxu0 %v2685
        %2799 = vmatpush.msra.mxu0 %v2683
        %2800 = vmatpush.msra.mxu0 %v2681
        %2801 = vmatpush.msra.mxu0 %v2679
        %2802 = vmatpush.msra.mxu0 %v2677
        %2803 = vmatpush.msra.mxu0 %v2675
        %2804 = vmatpush.msra.mxu0 %v2673
        %2805 = vmatpush.msra.mxu0 %v2671
        %2806 = vmatpush.msra.mxu0 %v2669
        %2807 = vmatpush.msra.mxu0 %v2667
        %2808 = vmatpush.msra.mxu0 %v2665
        %2809 = vmatmul.f32.gmra.mxu0 %v2569
        %v2810 = vpop.f32.mrf.mxu0
        %v2811 = vadd.f32 %v2746, %v2810
        %2812 = vmatmul.f32.gmra.mxu0 %v2571
        %v2813 = vpop.f32.mrf.mxu0
        %v2814 = vadd.f32 %v2749, %v2813
        %2815 = vmatmul.f32.gmra.mxu0 %v2573
        %v2816 = vpop.f32.mrf.mxu0
        %v2817 = vadd.f32 %v2752, %v2816
        %2818 = vmatmul.f32.gmra.mxu0 %v2575
        %v2819 = vpop.f32.mrf.mxu0
        %v2820 = vadd.f32 %v2755, %v2819
        %2821 = vmatmul.f32.gmra.mxu0 %v2577
        %v2822 = vpop.f32.mrf.mxu0
        %v2823 = vadd.f32 %v2758, %v2822
        %2824 = vmatmul.f32.gmra.mxu0 %v2579
        %v2825 = vpop.f32.mrf.mxu0
        %v2826 = vadd.f32 %v2761, %v2825
        %2827 = vmatmul.f32.gmra.mxu0 %v2581
        %v2828 = vpop.f32.mrf.mxu0
        %v2829 = vadd.f32 %v2764, %v2828
        %2830 = vmatmul.f32.gmra.mxu0 %v2583
        %v2831 = vpop.f32.mrf.mxu0
        %v2832 = vadd.f32 %v2767, %v2831
        %2833 = vmatmul.f32.gmra.mxu0 %v2585
        %v2834 = vpop.f32.mrf.mxu0
        %v2835 = vadd.f32 %v2770, %v2834
        %2836 = vmatmul.f32.gmra.mxu0 %v2587
        %v2837 = vpop.f32.mrf.mxu0
        %v2838 = vadd.f32 %v2773, %v2837
        %2839 = vmatmul.f32.gmra.mxu0 %v2589
        %v2840 = vpop.f32.mrf.mxu0
        %v2841 = vadd.f32 %v2776, %v2840
        %2842 = vmatmul.f32.gmra.mxu0 %v2591
        %v2843 = vpop.f32.mrf.mxu0
        %v2844 = vadd.f32 %v2779, %v2843
        %2845 = vmatmul.f32.gmra.mxu0 %v2593
        %v2846 = vpop.f32.mrf.mxu0
        %v2847 = vadd.f32 %v2782, %v2846
        %2848 = vmatmul.f32.gmra.mxu0 %v2595
        %v2849 = vpop.f32.mrf.mxu0
        %v2850 = vadd.f32 %v2785, %v2849
        %2851 = vmatmul.f32.gmra.mxu0 %v2597
        %v2852 = vpop.f32.mrf.mxu0
        %v2853 = vadd.f32 %v2788, %v2852
        %2854 = vmatmul.f32.gmra.mxu0 %v2599
        %v2855 = vpop.f32.mrf.mxu0
        %v2856 = vadd.f32 %v2791, %v2855
        %2857 = vdwg.mxu0
        %2858 = vrot.lane.b32.xlu0 %v695, 64
        %v2859 = vpop.permute.xlu0 %2858
        %2860 = vrot.lane.b32.xlu0 %v696, 64
        %v2861 = vpop.permute.xlu0 %2860
        %2862 = vrot.lane.b32.xlu0 %v697, 64
        %v2863 = vpop.permute.xlu0 %2862
        %2864 = vrot.lane.b32.xlu0 %v698, 64
        %v2865 = vpop.permute.xlu0 %2864
        %2866 = vrot.lane.b32.xlu0 %v699, 64
        %v2867 = vpop.permute.xlu0 %2866
        %2868 = vrot.lane.b32.xlu0 %v700, 64
        %v2869 = vpop.permute.xlu0 %2868
        %2870 = vrot.lane.b32.xlu0 %v701, 64
        %v2871 = vpop.permute.xlu0 %2870
        %2872 = vrot.lane.b32.xlu0 %v702, 64
        %v2873 = vpop.permute.xlu0 %2872
        %2874 = vrot.lane.b32.xlu0 %v703, 64
        %v2875 = vpop.permute.xlu0 %2874
        %2876 = vrot.lane.b32.xlu0 %v704, 64
        %v2877 = vpop.permute.xlu0 %2876
        %2878 = vrot.lane.b32.xlu0 %v705, 64
        %v2879 = vpop.permute.xlu0 %2878
        %2880 = vrot.lane.b32.xlu0 %v706, 64
        %v2881 = vpop.permute.xlu0 %2880
        %2882 = vrot.lane.b32.xlu0 %v707, 64
        %v2883 = vpop.permute.xlu0 %2882
        %2884 = vrot.lane.b32.xlu0 %v708, 64
        %v2885 = vpop.permute.xlu0 %2884
        %2886 = vrot.lane.b32.xlu0 %v709, 64
        %v2887 = vpop.permute.xlu0 %2886
        %2888 = vrot.lane.b32.xlu0 %v710, 64
        %v2889 = vpop.permute.xlu0 %2888
        %2890 = vrot.lane.b32.xlu0 %v749, 64
        %v2891 = vpop.permute.xlu0 %2890
        %2892 = vrot.lane.b32.xlu0 %v752, 64
        %v2893 = vpop.permute.xlu0 %2892
        %2894 = vrot.lane.b32.xlu0 %v755, 64
        %v2895 = vpop.permute.xlu0 %2894
        %2896 = vrot.lane.b32.xlu0 %v758, 64
        %v2897 = vpop.permute.xlu0 %2896
        %2898 = vrot.lane.b32.xlu0 %v761, 64
        %v2899 = vpop.permute.xlu0 %2898
        %2900 = vrot.lane.b32.xlu0 %v764, 64
        %v2901 = vpop.permute.xlu0 %2900
        %2902 = vrot.lane.b32.xlu0 %v767, 64
        %v2903 = vpop.permute.xlu0 %2902
        %2904 = vrot.lane.b32.xlu0 %v770, 64
        %v2905 = vpop.permute.xlu0 %2904
        %2906 = vrot.lane.b32.xlu0 %v773, 64
        %v2907 = vpop.permute.xlu0 %2906
        %2908 = vrot.lane.b32.xlu0 %v776, 64
        %v2909 = vpop.permute.xlu0 %2908
        %2910 = vrot.lane.b32.xlu0 %v779, 64
        %v2911 = vpop.permute.xlu0 %2910
        %2912 = vrot.lane.b32.xlu0 %v782, 64
        %v2913 = vpop.permute.xlu0 %2912
        %2914 = vrot.lane.b32.xlu0 %v785, 64
        %v2915 = vpop.permute.xlu0 %2914
        %2916 = vrot.lane.b32.xlu0 %v788, 64
        %v2917 = vpop.permute.xlu0 %2916
        %2918 = vrot.lane.b32.xlu0 %v791, 64
        %v2919 = vpop.permute.xlu0 %2918
        %2920 = vrot.lane.b32.xlu0 %v794, 64
        %v2921 = vpop.permute.xlu0 %2920
        %2922 = vrot.lane.b32.xlu0 %v797, 64
        %v2923 = vpop.permute.xlu0 %2922
        %2924 = vrot.lane.b32.xlu0 %v800, 64
        %v2925 = vpop.permute.xlu0 %2924
        %2926 = vrot.lane.b32.xlu0 %v803, 64
        %v2927 = vpop.permute.xlu0 %2926
        %2928 = vrot.lane.b32.xlu0 %v806, 64
        %v2929 = vpop.permute.xlu0 %2928
        %2930 = vrot.lane.b32.xlu0 %v809, 64
        %v2931 = vpop.permute.xlu0 %2930
        %2932 = vrot.lane.b32.xlu0 %v812, 64
        %v2933 = vpop.permute.xlu0 %2932
        %2934 = vrot.lane.b32.xlu0 %v815, 64
        %v2935 = vpop.permute.xlu0 %2934
        %2936 = vrot.lane.b32.xlu0 %v818, 64
        %v2937 = vpop.permute.xlu0 %2936
        %2938 = vrot.lane.b32.xlu0 %v821, 64
        %v2939 = vpop.permute.xlu0 %2938
        %2940 = vrot.lane.b32.xlu0 %v824, 64
        %v2941 = vpop.permute.xlu0 %2940
        %2942 = vrot.lane.b32.xlu0 %v827, 64
        %v2943 = vpop.permute.xlu0 %2942
        %2944 = vrot.lane.b32.xlu0 %v830, 64
        %v2945 = vpop.permute.xlu0 %2944
        %2946 = vrot.lane.b32.xlu0 %v833, 64
        %v2947 = vpop.permute.xlu0 %2946
        %2948 = vrot.lane.b32.xlu0 %v836, 64
        %v2949 = vpop.permute.xlu0 %2948
        %2950 = vrot.lane.b32.xlu0 %v839, 64
        %v2951 = vpop.permute.xlu0 %2950
        %2952 = vrot.lane.b32.xlu0 %v842, 64
        %v2953 = vpop.permute.xlu0 %2952
        %v2954 = vsel %vm977, %v2859, 0
        %v2956 = vsel %vm977, %v2861, 0
        %v2958 = vsel %vm977, %v2863, 0
        %v2960 = vsel %vm977, %v2865, 0
        %v2962 = vsel %vm977, %v2867, 0
        %v2964 = vsel %vm977, %v2869, 0
        %v2966 = vsel %vm977, %v2871, 0
        %v2968 = vsel %vm977, %v2873, 0
        %v2970 = vsel %vm977, %v2875, 0
        %v2972 = vsel %vm977, %v2877, 0
        %v2974 = vsel %vm977, %v2879, 0
        %v2976 = vsel %vm977, %v2881, 0
        %v2978 = vsel %vm977, %v2883, 0
        %v2980 = vsel %vm977, %v2885, 0
        %v2982 = vsel %vm977, %v2887, 0
        %v2984 = vsel %vm977, %v2889, 0
        %v2986 = vsel %vm977, %v2891, 0
        %v2988 = vsel %vm977, %v2893, 0
        %v2990 = vsel %vm977, %v2895, 0
        %v2992 = vsel %vm977, %v2897, 0
        %v2994 = vsel %vm977, %v2899, 0
        %v2996 = vsel %vm977, %v2901, 0
        %v2998 = vsel %vm977, %v2903, 0
        %v3000 = vsel %vm977, %v2905, 0
        %v3002 = vsel %vm977, %v2907, 0
        %v3004 = vsel %vm977, %v2909, 0
        %v3006 = vsel %vm977, %v2911, 0
        %v3008 = vsel %vm977, %v2913, 0
        %v3010 = vsel %vm977, %v2915, 0
        %v3012 = vsel %vm977, %v2917, 0
        %v3014 = vsel %vm977, %v2919, 0
        %v3016 = vsel %vm977, %v2921, 0
        %v3018 = vsel %vm977, %v2923, 0
        %v3020 = vsel %vm977, %v2925, 0
        %v3022 = vsel %vm977, %v2927, 0
        %v3024 = vsel %vm977, %v2929, 0
        %v3026 = vsel %vm977, %v2931, 0
        %v3028 = vsel %vm977, %v2933, 0
        %v3030 = vsel %vm977, %v2935, 0
        %v3032 = vsel %vm977, %v2937, 0
        %v3034 = vsel %vm977, %v2939, 0
        %v3036 = vsel %vm977, %v2941, 0
        %v3038 = vsel %vm977, %v2943, 0
        %v3040 = vsel %vm977, %v2945, 0
        %v3042 = vsel %vm977, %v2947, 0
        %v3044 = vsel %vm977, %v2949, 0
        %v3046 = vsel %vm977, %v2951, 0
        %v3048 = vsel %vm977, %v2953, 0
        %3050 = vmatpush.xpose.msra.mxu0 %v3016
        %3051 = vmatpush.xpose.msra.mxu0 %v3014
        %3052 = vmatpush.xpose.msra.mxu0 %v3012
        %3053 = vmatpush.xpose.msra.mxu0 %v3010
        %3054 = vmatpush.xpose.msra.mxu0 %v3008
        %3055 = vmatpush.xpose.msra.mxu0 %v3006
        %3056 = vmatpush.xpose.msra.mxu0 %v3004
        %3057 = vmatpush.xpose.msra.mxu0 %v3002
        %3058 = vmatpush.xpose.msra.mxu0 %v3000
        %3059 = vmatpush.xpose.msra.mxu0 %v2998
        %3060 = vmatpush.xpose.msra.mxu0 %v2996
        %3061 = vmatpush.xpose.msra.mxu0 %v2994
        %3062 = vmatpush.xpose.msra.mxu0 %v2992
        %3063 = vmatpush.xpose.msra.mxu0 %v2990
        %3064 = vmatpush.xpose.msra.mxu0 %v2988
        %3065 = vmatpush.xpose.msra.mxu0 %v2986
        %3066 = vmatmul.f32.gmra.mxu0 %v2954
        %v3067 = vpop.f32.mrf.mxu0
        %v3068 = vadd.f32 0.0, %v3067
        %3069 = vmatmul.f32.gmra.mxu0 %v2956
        %v3070 = vpop.f32.mrf.mxu0
        %v3071 = vadd.f32 0.0, %v3070
        %3072 = vmatmul.f32.gmra.mxu0 %v2958
        %v3073 = vpop.f32.mrf.mxu0
        %v3074 = vadd.f32 0.0, %v3073
        %3075 = vmatmul.f32.gmra.mxu0 %v2960
        %v3076 = vpop.f32.mrf.mxu0
        %v3077 = vadd.f32 0.0, %v3076
        %3078 = vmatmul.f32.gmra.mxu0 %v2962
        %v3079 = vpop.f32.mrf.mxu0
        %v3080 = vadd.f32 0.0, %v3079
        %3081 = vmatmul.f32.gmra.mxu0 %v2964
        %v3082 = vpop.f32.mrf.mxu0
        %v3083 = vadd.f32 0.0, %v3082
        %3084 = vmatmul.f32.gmra.mxu0 %v2966
        %v3085 = vpop.f32.mrf.mxu0
        %v3086 = vadd.f32 0.0, %v3085
        %3087 = vmatmul.f32.gmra.mxu0 %v2968
        %v3088 = vpop.f32.mrf.mxu0
        %v3089 = vadd.f32 0.0, %v3088
        %3090 = vmatmul.f32.gmra.mxu0 %v2970
        %v3091 = vpop.f32.mrf.mxu0
        %v3092 = vadd.f32 0.0, %v3091
        %3093 = vmatmul.f32.gmra.mxu0 %v2972
        %v3094 = vpop.f32.mrf.mxu0
        %v3095 = vadd.f32 0.0, %v3094
        %3096 = vmatmul.f32.gmra.mxu0 %v2974
        %v3097 = vpop.f32.mrf.mxu0
        %v3098 = vadd.f32 0.0, %v3097
        %3099 = vmatmul.f32.gmra.mxu0 %v2976
        %v3100 = vpop.f32.mrf.mxu0
        %v3101 = vadd.f32 0.0, %v3100
        %3102 = vmatmul.f32.gmra.mxu0 %v2978
        %v3103 = vpop.f32.mrf.mxu0
        %v3104 = vadd.f32 0.0, %v3103
        %3105 = vmatmul.f32.gmra.mxu0 %v2980
        %v3106 = vpop.f32.mrf.mxu0
        %v3107 = vadd.f32 0.0, %v3106
        %3108 = vmatmul.f32.gmra.mxu0 %v2982
        %v3109 = vpop.f32.mrf.mxu0
        %v3110 = vadd.f32 0.0, %v3109
        %3111 = vmatmul.f32.gmra.mxu0 %v2984
        %v3112 = vpop.f32.mrf.mxu0
        %v3113 = vadd.f32 0.0, %v3112
        %3114 = vdwg.mxu0
        %3115 = vmatpush.xpose.msra.mxu0 %v3048
        %3116 = vmatpush.xpose.msra.mxu0 %v3046
        %3117 = vmatpush.xpose.msra.mxu0 %v3044
        %3118 = vmatpush.xpose.msra.mxu0 %v3042
        %3119 = vmatpush.xpose.msra.mxu0 %v3040
        %3120 = vmatpush.xpose.msra.mxu0 %v3038
        %3121 = vmatpush.xpose.msra.mxu0 %v3036
        %3122 = vmatpush.xpose.msra.mxu0 %v3034
        %3123 = vmatpush.xpose.msra.mxu0 %v3032
        %3124 = vmatpush.xpose.msra.mxu0 %v3030
        %3125 = vmatpush.xpose.msra.mxu0 %v3028
        %3126 = vmatpush.xpose.msra.mxu0 %v3026
        %3127 = vmatpush.xpose.msra.mxu0 %v3024
        %3128 = vmatpush.xpose.msra.mxu0 %v3022
        %3129 = vmatpush.xpose.msra.mxu0 %v3020
        %3130 = vmatpush.xpose.msra.mxu0 %v3018
        %3131 = vmatmul.f32.gmra.mxu0 %v2954
        %v3132 = vpop.f32.mrf.mxu0
        %v3133 = vadd.f32 0.0, %v3132
        %3134 = vmatmul.f32.gmra.mxu0 %v2956
        %v3135 = vpop.f32.mrf.mxu0
        %v3136 = vadd.f32 0.0, %v3135
        %3137 = vmatmul.f32.gmra.mxu0 %v2958
        %v3138 = vpop.f32.mrf.mxu0
        %v3139 = vadd.f32 0.0, %v3138
        %3140 = vmatmul.f32.gmra.mxu0 %v2960
        %v3141 = vpop.f32.mrf.mxu0
        %v3142 = vadd.f32 0.0, %v3141
        %3143 = vmatmul.f32.gmra.mxu0 %v2962
        %v3144 = vpop.f32.mrf.mxu0
        %v3145 = vadd.f32 0.0, %v3144
        %3146 = vmatmul.f32.gmra.mxu0 %v2964
        %v3147 = vpop.f32.mrf.mxu0
        %v3148 = vadd.f32 0.0, %v3147
        %3149 = vmatmul.f32.gmra.mxu0 %v2966
        %v3150 = vpop.f32.mrf.mxu0
        %v3151 = vadd.f32 0.0, %v3150
        %3152 = vmatmul.f32.gmra.mxu0 %v2968
        %v3153 = vpop.f32.mrf.mxu0
        %v3154 = vadd.f32 0.0, %v3153
        %3155 = vmatmul.f32.gmra.mxu0 %v2970
        %v3156 = vpop.f32.mrf.mxu0
        %v3157 = vadd.f32 0.0, %v3156
        %3158 = vmatmul.f32.gmra.mxu0 %v2972
        %v3159 = vpop.f32.mrf.mxu0
        %v3160 = vadd.f32 0.0, %v3159
        %3161 = vmatmul.f32.gmra.mxu0 %v2974
        %v3162 = vpop.f32.mrf.mxu0
        %v3163 = vadd.f32 0.0, %v3162
        %3164 = vmatmul.f32.gmra.mxu0 %v2976
        %v3165 = vpop.f32.mrf.mxu0
        %v3166 = vadd.f32 0.0, %v3165
        %3167 = vmatmul.f32.gmra.mxu0 %v2978
        %v3168 = vpop.f32.mrf.mxu0
        %v3169 = vadd.f32 0.0, %v3168
        %3170 = vmatmul.f32.gmra.mxu0 %v2980
        %v3171 = vpop.f32.mrf.mxu0
        %v3172 = vadd.f32 0.0, %v3171
        %3173 = vmatmul.f32.gmra.mxu0 %v2982
        %v3174 = vpop.f32.mrf.mxu0
        %v3175 = vadd.f32 0.0, %v3174
        %3176 = vmatmul.f32.gmra.mxu0 %v2984
        %v3177 = vpop.f32.mrf.mxu0
        %v3178 = vadd.f32 0.0, %v3177
        %3179 = vdwg.mxu0
        %v3180 = vmax.f32 %v3068, %v3133
        %3181 = vmax.xlane.f32.xlu0 %v3180
        %v3182 = vpop.xlane.xlu0 %3181
        %v3183 = vmax.f32 %v3071, %v3136
        %3184 = vmax.xlane.f32.xlu0 %v3183
        %v3185 = vpop.xlane.xlu0 %3184
        %v3186 = vmax.f32 %v3074, %v3139
        %3187 = vmax.xlane.f32.xlu0 %v3186
        %v3188 = vpop.xlane.xlu0 %3187
        %v3189 = vmax.f32 %v3077, %v3142
        %3190 = vmax.xlane.f32.xlu0 %v3189
        %v3191 = vpop.xlane.xlu0 %3190
        %v3192 = vmax.f32 %v3080, %v3145
        %3193 = vmax.xlane.f32.xlu0 %v3192
        %v3194 = vpop.xlane.xlu0 %3193
        %v3195 = vmax.f32 %v3083, %v3148
        %3196 = vmax.xlane.f32.xlu0 %v3195
        %v3197 = vpop.xlane.xlu0 %3196
        %v3198 = vmax.f32 %v3086, %v3151
        %3199 = vmax.xlane.f32.xlu0 %v3198
        %v3200 = vpop.xlane.xlu0 %3199
        %v3201 = vmax.f32 %v3089, %v3154
        %3202 = vmax.xlane.f32.xlu0 %v3201
        %v3203 = vpop.xlane.xlu0 %3202
        %v3204 = vmax.f32 %v3092, %v3157
        %3205 = vmax.xlane.f32.xlu0 %v3204
        %v3206 = vpop.xlane.xlu0 %3205
        %v3207 = vmax.f32 %v3095, %v3160
        %3208 = vmax.xlane.f32.xlu0 %v3207
        %v3209 = vpop.xlane.xlu0 %3208
        %v3210 = vmax.f32 %v3098, %v3163
        %3211 = vmax.xlane.f32.xlu0 %v3210
        %v3212 = vpop.xlane.xlu0 %3211
        %v3213 = vmax.f32 %v3101, %v3166
        %3214 = vmax.xlane.f32.xlu0 %v3213
        %v3215 = vpop.xlane.xlu0 %3214
        %v3216 = vmax.f32 %v3104, %v3169
        %3217 = vmax.xlane.f32.xlu0 %v3216
        %v3218 = vpop.xlane.xlu0 %3217
        %v3219 = vmax.f32 %v3107, %v3172
        %3220 = vmax.xlane.f32.xlu0 %v3219
        %v3221 = vpop.xlane.xlu0 %3220
        %v3222 = vmax.f32 %v3110, %v3175
        %3223 = vmax.xlane.f32.xlu0 %v3222
        %v3224 = vpop.xlane.xlu0 %3223
        %v3225 = vmax.f32 %v3113, %v3178
        %3226 = vmax.xlane.f32.xlu0 %v3225
        %v3227 = vpop.xlane.xlu0 %3226
        %v3228 = vsub.f32 %v3068, %v3182
        %v3229 = vsub.f32 %v3133, %v3182
        %v3230 = vsub.f32 %v3071, %v3185
        %v3231 = vsub.f32 %v3136, %v3185
        %v3232 = vsub.f32 %v3074, %v3188
        %v3233 = vsub.f32 %v3139, %v3188
        %v3234 = vsub.f32 %v3077, %v3191
        %v3235 = vsub.f32 %v3142, %v3191
        %v3236 = vsub.f32 %v3080, %v3194
        %v3237 = vsub.f32 %v3145, %v3194
        %v3238 = vsub.f32 %v3083, %v3197
        %v3239 = vsub.f32 %v3148, %v3197
        %v3240 = vsub.f32 %v3086, %v3200
        %v3241 = vsub.f32 %v3151, %v3200
        %v3242 = vsub.f32 %v3089, %v3203
        %v3243 = vsub.f32 %v3154, %v3203
        %v3244 = vsub.f32 %v3092, %v3206
        %v3245 = vsub.f32 %v3157, %v3206
        %v3246 = vsub.f32 %v3095, %v3209
        %v3247 = vsub.f32 %v3160, %v3209
        %v3248 = vsub.f32 %v3098, %v3212
        %v3249 = vsub.f32 %v3163, %v3212
        %v3250 = vsub.f32 %v3101, %v3215
        %v3251 = vsub.f32 %v3166, %v3215
        %v3252 = vsub.f32 %v3104, %v3218
        %v3253 = vsub.f32 %v3169, %v3218
        %v3254 = vsub.f32 %v3107, %v3221
        %v3255 = vsub.f32 %v3172, %v3221
        %v3256 = vsub.f32 %v3110, %v3224
        %v3257 = vsub.f32 %v3175, %v3224
        %v3258 = vsub.f32 %v3113, %v3227
        %v3259 = vsub.f32 %v3178, %v3227
        %v3260 = vmul.f32 %v3228, 1.442695
        %v3261 = vpow.pop %v3260
        %v3262 = vmul.f32 %v3229, 1.442695
        %v3263 = vpow.pop %v3262
        %v3264 = vmul.f32 %v3230, 1.442695
        %v3265 = vpow.pop %v3264
        %v3266 = vmul.f32 %v3231, 1.442695
        %v3267 = vpow.pop %v3266
        %v3268 = vmul.f32 %v3232, 1.442695
        %v3269 = vpow.pop %v3268
        %v3270 = vmul.f32 %v3233, 1.442695
        %v3271 = vpow.pop %v3270
        %v3272 = vmul.f32 %v3234, 1.442695
        %v3273 = vpow.pop %v3272
        %v3274 = vmul.f32 %v3235, 1.442695
        %v3275 = vpow.pop %v3274
        %v3276 = vmul.f32 %v3236, 1.442695
        %v3277 = vpow.pop %v3276
        %v3278 = vmul.f32 %v3237, 1.442695
        %v3279 = vpow.pop %v3278
        %v3280 = vmul.f32 %v3238, 1.442695
        %v3281 = vpow.pop %v3280
        %v3282 = vmul.f32 %v3239, 1.442695
        %v3283 = vpow.pop %v3282
        %v3284 = vmul.f32 %v3240, 1.442695
        %v3285 = vpow.pop %v3284
        %v3286 = vmul.f32 %v3241, 1.442695
        %v3287 = vpow.pop %v3286
        %v3288 = vmul.f32 %v3242, 1.442695
        %v3289 = vpow.pop %v3288
        %v3290 = vmul.f32 %v3243, 1.442695
        %v3291 = vpow.pop %v3290
        %v3292 = vmul.f32 %v3244, 1.442695
        %v3293 = vpow.pop %v3292
        %v3294 = vmul.f32 %v3245, 1.442695
        %v3295 = vpow.pop %v3294
        %v3296 = vmul.f32 %v3246, 1.442695
        %v3297 = vpow.pop %v3296
        %v3298 = vmul.f32 %v3247, 1.442695
        %v3299 = vpow.pop %v3298
        %v3300 = vmul.f32 %v3248, 1.442695
        %v3301 = vpow.pop %v3300
        %v3302 = vmul.f32 %v3249, 1.442695
        %v3303 = vpow.pop %v3302
        %v3304 = vmul.f32 %v3250, 1.442695
        %v3305 = vpow.pop %v3304
        %v3306 = vmul.f32 %v3251, 1.442695
        %v3307 = vpow.pop %v3306
        %v3308 = vmul.f32 %v3252, 1.442695
        %v3309 = vpow.pop %v3308
        %v3310 = vmul.f32 %v3253, 1.442695
        %v3311 = vpow.pop %v3310
        %v3312 = vmul.f32 %v3254, 1.442695
        %v3313 = vpow.pop %v3312
        %v3314 = vmul.f32 %v3255, 1.442695
        %v3315 = vpow.pop %v3314
        %v3316 = vmul.f32 %v3256, 1.442695
        %v3317 = vpow.pop %v3316
        %v3318 = vmul.f32 %v3257, 1.442695
        %v3319 = vpow.pop %v3318
        %v3320 = vmul.f32 %v3258, 1.442695
        %v3321 = vpow.pop %v3320
        %v3322 = vmul.f32 %v3259, 1.442695
        %v3323 = vpow.pop %v3322
        %v3324 = vadd.f32 %v3261, %v3263
        %3325 = vadd.xlane.f32.xlu0 %v3324
        %v3326 = vpop.xlane.xlu0 %3325
        %v3327 = vadd.f32 %v3265, %v3267
        %3328 = vadd.xlane.f32.xlu0 %v3327
        %v3329 = vpop.xlane.xlu0 %3328
        %v3330 = vadd.f32 %v3269, %v3271
        %3331 = vadd.xlane.f32.xlu0 %v3330
        %v3332 = vpop.xlane.xlu0 %3331
        %v3333 = vadd.f32 %v3273, %v3275
        %3334 = vadd.xlane.f32.xlu0 %v3333
        %v3335 = vpop.xlane.xlu0 %3334
        %v3336 = vadd.f32 %v3277, %v3279
        %3337 = vadd.xlane.f32.xlu0 %v3336
        %v3338 = vpop.xlane.xlu0 %3337
        %v3339 = vadd.f32 %v3281, %v3283
        %3340 = vadd.xlane.f32.xlu0 %v3339
        %v3341 = vpop.xlane.xlu0 %3340
        %v3342 = vadd.f32 %v3285, %v3287
        %3343 = vadd.xlane.f32.xlu0 %v3342
        %v3344 = vpop.xlane.xlu0 %3343
        %v3345 = vadd.f32 %v3289, %v3291
        %3346 = vadd.xlane.f32.xlu0 %v3345
        %v3347 = vpop.xlane.xlu0 %3346
        %v3348 = vadd.f32 %v3293, %v3295
        %3349 = vadd.xlane.f32.xlu0 %v3348
        %v3350 = vpop.xlane.xlu0 %3349
        %v3351 = vadd.f32 %v3297, %v3299
        %3352 = vadd.xlane.f32.xlu0 %v3351
        %v3353 = vpop.xlane.xlu0 %3352
        %v3354 = vadd.f32 %v3301, %v3303
        %3355 = vadd.xlane.f32.xlu0 %v3354
        %v3356 = vpop.xlane.xlu0 %3355
        %v3357 = vadd.f32 %v3305, %v3307
        %3358 = vadd.xlane.f32.xlu0 %v3357
        %v3359 = vpop.xlane.xlu0 %3358
        %v3360 = vadd.f32 %v3309, %v3311
        %3361 = vadd.xlane.f32.xlu0 %v3360
        %v3362 = vpop.xlane.xlu0 %3361
        %v3363 = vadd.f32 %v3313, %v3315
        %3364 = vadd.xlane.f32.xlu0 %v3363
        %v3365 = vpop.xlane.xlu0 %3364
        %v3366 = vadd.f32 %v3317, %v3319
        %3367 = vadd.xlane.f32.xlu0 %v3366
        %v3368 = vpop.xlane.xlu0 %3367
        %v3369 = vadd.f32 %v3321, %v3323
        %3370 = vadd.xlane.f32.xlu0 %v3369
        %v3371 = vpop.xlane.xlu0 %3370
        %v3372 = vrcp.pop %v3326
        %v3373 = vmul.f32 %v3326, %v3372
        %v3374 = vsub.f32 1.0, %v3373
        %v3375 = vmul.f32 %v3372, %v3374
        %v3376 = vadd.f32 %v3372, %v3375
        %vm3377 = vweird.f32 %v3326
        %vm3378 = vweird.f32 %v3372
        %vm3379 = vmor %vm3377, %vm3378
        %v3380 = vsel %vm3379, %v3372, %v3376
        %v3381 = vand.u32 2147483647, %v3326
        %vm3382 = vcmp.eq.f32.partialorder %v3381, 8.507059e+37
        %v3383 = vand.u32 %v3326, 2147483648
        %v3384 = vor.u32 1.1754944e-38, %v3383
        %v3385 = vsel %vm3382, %v3384, %v3380
        %v3386 = vrcp.pop %v3329
        %v3387 = vmul.f32 %v3329, %v3386
        %v3388 = vsub.f32 1.0, %v3387
        %v3389 = vmul.f32 %v3386, %v3388
        %v3390 = vadd.f32 %v3386, %v3389
        %vm3391 = vweird.f32 %v3329
        %vm3392 = vweird.f32 %v3386
        %vm3393 = vmor %vm3391, %vm3392
        %v3394 = vsel %vm3393, %v3386, %v3390
        %v3395 = vand.u32 2147483647, %v3329
        %vm3396 = vcmp.eq.f32.partialorder %v3395, 8.507059e+37
        %v3397 = vand.u32 %v3329, 2147483648
        %v3398 = vor.u32 1.1754944e-38, %v3397
        %v3399 = vsel %vm3396, %v3398, %v3394
        %v3400 = vrcp.pop %v3332
        %v3401 = vmul.f32 %v3332, %v3400
        %v3402 = vsub.f32 1.0, %v3401
        %v3403 = vmul.f32 %v3400, %v3402
        %v3404 = vadd.f32 %v3400, %v3403
        %vm3405 = vweird.f32 %v3332
        %vm3406 = vweird.f32 %v3400
        %vm3407 = vmor %vm3405, %vm3406
        %v3408 = vsel %vm3407, %v3400, %v3404
        %v3409 = vand.u32 2147483647, %v3332
        %vm3410 = vcmp.eq.f32.partialorder %v3409, 8.507059e+37
        %v3411 = vand.u32 %v3332, 2147483648
        %v3412 = vor.u32 1.1754944e-38, %v3411
        %v3413 = vsel %vm3410, %v3412, %v3408
        %v3414 = vrcp.pop %v3335
        %v3415 = vmul.f32 %v3335, %v3414
        %v3416 = vsub.f32 1.0, %v3415
        %v3417 = vmul.f32 %v3414, %v3416
        %v3418 = vadd.f32 %v3414, %v3417
        %vm3419 = vweird.f32 %v3335
        %vm3420 = vweird.f32 %v3414
        %vm3421 = vmor %vm3419, %vm3420
        %v3422 = vsel %vm3421, %v3414, %v3418
        %v3423 = vand.u32 2147483647, %v3335
        %vm3424 = vcmp.eq.f32.partialorder %v3423, 8.507059e+37
        %v3425 = vand.u32 %v3335, 2147483648
        %v3426 = vor.u32 1.1754944e-38, %v3425
        %v3427 = vsel %vm3424, %v3426, %v3422
        %v3428 = vrcp.pop %v3338
        %v3429 = vmul.f32 %v3338, %v3428
        %v3430 = vsub.f32 1.0, %v3429
        %v3431 = vmul.f32 %v3428, %v3430
        %v3432 = vadd.f32 %v3428, %v3431
        %vm3433 = vweird.f32 %v3338
        %vm3434 = vweird.f32 %v3428
        %vm3435 = vmor %vm3433, %vm3434
        %v3436 = vsel %vm3435, %v3428, %v3432
        %v3437 = vand.u32 2147483647, %v3338
        %vm3438 = vcmp.eq.f32.partialorder %v3437, 8.507059e+37
        %v3439 = vand.u32 %v3338, 2147483648
        %v3440 = vor.u32 1.1754944e-38, %v3439
        %v3441 = vsel %vm3438, %v3440, %v3436
        %v3442 = vrcp.pop %v3341
        %v3443 = vmul.f32 %v3341, %v3442
        %v3444 = vsub.f32 1.0, %v3443
        %v3445 = vmul.f32 %v3442, %v3444
        %v3446 = vadd.f32 %v3442, %v3445
        %vm3447 = vweird.f32 %v3341
        %vm3448 = vweird.f32 %v3442
        %vm3449 = vmor %vm3447, %vm3448
        %v3450 = vsel %vm3449, %v3442, %v3446
        %v3451 = vand.u32 2147483647, %v3341
        %vm3452 = vcmp.eq.f32.partialorder %v3451, 8.507059e+37
        %v3453 = vand.u32 %v3341, 2147483648
        %v3454 = vor.u32 1.1754944e-38, %v3453
        %v3455 = vsel %vm3452, %v3454, %v3450
        %v3456 = vrcp.pop %v3344
        %v3457 = vmul.f32 %v3344, %v3456
        %v3458 = vsub.f32 1.0, %v3457
        %v3459 = vmul.f32 %v3456, %v3458
        %v3460 = vadd.f32 %v3456, %v3459
        %vm3461 = vweird.f32 %v3344
        %vm3462 = vweird.f32 %v3456
        %vm3463 = vmor %vm3461, %vm3462
        %v3464 = vsel %vm3463, %v3456, %v3460
        %v3465 = vand.u32 2147483647, %v3344
        %vm3466 = vcmp.eq.f32.partialorder %v3465, 8.507059e+37
        %v3467 = vand.u32 %v3344, 2147483648
        %v3468 = vor.u32 1.1754944e-38, %v3467
        %v3469 = vsel %vm3466, %v3468, %v3464
        %v3470 = vrcp.pop %v3347
        %v3471 = vmul.f32 %v3347, %v3470
        %v3472 = vsub.f32 1.0, %v3471
        %v3473 = vmul.f32 %v3470, %v3472
        %v3474 = vadd.f32 %v3470, %v3473
        %vm3475 = vweird.f32 %v3347
        %vm3476 = vweird.f32 %v3470
        %vm3477 = vmor %vm3475, %vm3476
        %v3478 = vsel %vm3477, %v3470, %v3474
        %v3479 = vand.u32 2147483647, %v3347
        %vm3480 = vcmp.eq.f32.partialorder %v3479, 8.507059e+37
        %v3481 = vand.u32 %v3347, 2147483648
        %v3482 = vor.u32 1.1754944e-38, %v3481
        %v3483 = vsel %vm3480, %v3482, %v3478
        %v3484 = vrcp.pop %v3350
        %v3485 = vmul.f32 %v3350, %v3484
        %v3486 = vsub.f32 1.0, %v3485
        %v3487 = vmul.f32 %v3484, %v3486
        %v3488 = vadd.f32 %v3484, %v3487
        %vm3489 = vweird.f32 %v3350
        %vm3490 = vweird.f32 %v3484
        %vm3491 = vmor %vm3489, %vm3490
        %v3492 = vsel %vm3491, %v3484, %v3488
        %v3493 = vand.u32 2147483647, %v3350
        %vm3494 = vcmp.eq.f32.partialorder %v3493, 8.507059e+37
        %v3495 = vand.u32 %v3350, 2147483648
        %v3496 = vor.u32 1.1754944e-38, %v3495
        %v3497 = vsel %vm3494, %v3496, %v3492
        %v3498 = vrcp.pop %v3353
        %v3499 = vmul.f32 %v3353, %v3498
        %v3500 = vsub.f32 1.0, %v3499
        %v3501 = vmul.f32 %v3498, %v3500
        %v3502 = vadd.f32 %v3498, %v3501
        %vm3503 = vweird.f32 %v3353
        %vm3504 = vweird.f32 %v3498
        %vm3505 = vmor %vm3503, %vm3504
        %v3506 = vsel %vm3505, %v3498, %v3502
        %v3507 = vand.u32 2147483647, %v3353
        %vm3508 = vcmp.eq.f32.partialorder %v3507, 8.507059e+37
        %v3509 = vand.u32 %v3353, 2147483648
        %v3510 = vor.u32 1.1754944e-38, %v3509
        %v3511 = vsel %vm3508, %v3510, %v3506
        %v3512 = vrcp.pop %v3356
        %v3513 = vmul.f32 %v3356, %v3512
        %v3514 = vsub.f32 1.0, %v3513
        %v3515 = vmul.f32 %v3512, %v3514
        %v3516 = vadd.f32 %v3512, %v3515
        %vm3517 = vweird.f32 %v3356
        %vm3518 = vweird.f32 %v3512
        %vm3519 = vmor %vm3517, %vm3518
        %v3520 = vsel %vm3519, %v3512, %v3516
        %v3521 = vand.u32 2147483647, %v3356
        %vm3522 = vcmp.eq.f32.partialorder %v3521, 8.507059e+37
        %v3523 = vand.u32 %v3356, 2147483648
        %v3524 = vor.u32 1.1754944e-38, %v3523
        %v3525 = vsel %vm3522, %v3524, %v3520
        %v3526 = vrcp.pop %v3359
        %v3527 = vmul.f32 %v3359, %v3526
        %v3528 = vsub.f32 1.0, %v3527
        %v3529 = vmul.f32 %v3526, %v3528
        %v3530 = vadd.f32 %v3526, %v3529
        %vm3531 = vweird.f32 %v3359
        %vm3532 = vweird.f32 %v3526
        %vm3533 = vmor %vm3531, %vm3532
        %v3534 = vsel %vm3533, %v3526, %v3530
        %v3535 = vand.u32 2147483647, %v3359
        %vm3536 = vcmp.eq.f32.partialorder %v3535, 8.507059e+37
        %v3537 = vand.u32 %v3359, 2147483648
        %v3538 = vor.u32 1.1754944e-38, %v3537
        %v3539 = vsel %vm3536, %v3538, %v3534
        %v3540 = vrcp.pop %v3362
        %v3541 = vmul.f32 %v3362, %v3540
        %v3542 = vsub.f32 1.0, %v3541
        %v3543 = vmul.f32 %v3540, %v3542
        %v3544 = vadd.f32 %v3540, %v3543
        %vm3545 = vweird.f32 %v3362
        %vm3546 = vweird.f32 %v3540
        %vm3547 = vmor %vm3545, %vm3546
        %v3548 = vsel %vm3547, %v3540, %v3544
        %v3549 = vand.u32 2147483647, %v3362
        %vm3550 = vcmp.eq.f32.partialorder %v3549, 8.507059e+37
        %v3551 = vand.u32 %v3362, 2147483648
        %v3552 = vor.u32 1.1754944e-38, %v3551
        %v3553 = vsel %vm3550, %v3552, %v3548
        %v3554 = vrcp.pop %v3365
        %v3555 = vmul.f32 %v3365, %v3554
        %v3556 = vsub.f32 1.0, %v3555
        %v3557 = vmul.f32 %v3554, %v3556
        %v3558 = vadd.f32 %v3554, %v3557
        %vm3559 = vweird.f32 %v3365
        %vm3560 = vweird.f32 %v3554
        %vm3561 = vmor %vm3559, %vm3560
        %v3562 = vsel %vm3561, %v3554, %v3558
        %v3563 = vand.u32 2147483647, %v3365
        %vm3564 = vcmp.eq.f32.partialorder %v3563, 8.507059e+37
        %v3565 = vand.u32 %v3365, 2147483648
        %v3566 = vor.u32 1.1754944e-38, %v3565
        %v3567 = vsel %vm3564, %v3566, %v3562
        %v3568 = vrcp.pop %v3368
        %v3569 = vmul.f32 %v3368, %v3568
        %v3570 = vsub.f32 1.0, %v3569
        %v3571 = vmul.f32 %v3568, %v3570
        %v3572 = vadd.f32 %v3568, %v3571
        %vm3573 = vweird.f32 %v3368
        %vm3574 = vweird.f32 %v3568
        %vm3575 = vmor %vm3573, %vm3574
        %v3576 = vsel %vm3575, %v3568, %v3572
        %v3577 = vand.u32 2147483647, %v3368
        %vm3578 = vcmp.eq.f32.partialorder %v3577, 8.507059e+37
        %v3579 = vand.u32 %v3368, 2147483648
        %v3580 = vor.u32 1.1754944e-38, %v3579
        %v3581 = vsel %vm3578, %v3580, %v3576
        %v3582 = vrcp.pop %v3371
        %v3583 = vmul.f32 %v3371, %v3582
        %v3584 = vsub.f32 1.0, %v3583
        %v3585 = vmul.f32 %v3582, %v3584
        %v3586 = vadd.f32 %v3582, %v3585
        %vm3587 = vweird.f32 %v3371
        %vm3588 = vweird.f32 %v3582
        %vm3589 = vmor %vm3587, %vm3588
        %v3590 = vsel %vm3589, %v3582, %v3586
        %v3591 = vand.u32 2147483647, %v3371
        %vm3592 = vcmp.eq.f32.partialorder %v3591, 8.507059e+37
        %v3593 = vand.u32 %v3371, 2147483648
        %v3594 = vor.u32 1.1754944e-38, %v3593
        %v3595 = vsel %vm3592, %v3594, %v3590
        %v3596 = vmul.f32 %v3261, %v3385
        %v3597 = vmul.f32 %v3263, %v3385
        %v3598 = vmul.f32 %v3265, %v3399
        %v3599 = vmul.f32 %v3267, %v3399
        %v3600 = vmul.f32 %v3269, %v3413
        %v3601 = vmul.f32 %v3271, %v3413
        %v3602 = vmul.f32 %v3273, %v3427
        %v3603 = vmul.f32 %v3275, %v3427
        %v3604 = vmul.f32 %v3277, %v3441
        %v3605 = vmul.f32 %v3279, %v3441
        %v3606 = vmul.f32 %v3281, %v3455
        %v3607 = vmul.f32 %v3283, %v3455
        %v3608 = vmul.f32 %v3285, %v3469
        %v3609 = vmul.f32 %v3287, %v3469
        %v3610 = vmul.f32 %v3289, %v3483
        %v3611 = vmul.f32 %v3291, %v3483
        %v3612 = vmul.f32 %v3293, %v3497
        %v3613 = vmul.f32 %v3295, %v3497
        %v3614 = vmul.f32 %v3297, %v3511
        %v3615 = vmul.f32 %v3299, %v3511
        %v3616 = vmul.f32 %v3301, %v3525
        %v3617 = vmul.f32 %v3303, %v3525
        %v3618 = vmul.f32 %v3305, %v3539
        %v3619 = vmul.f32 %v3307, %v3539
        %v3620 = vmul.f32 %v3309, %v3553
        %v3621 = vmul.f32 %v3311, %v3553
        %v3622 = vmul.f32 %v3313, %v3567
        %v3623 = vmul.f32 %v3315, %v3567
        %v3624 = vmul.f32 %v3317, %v3581
        %v3625 = vmul.f32 %v3319, %v3581
        %v3626 = vmul.f32 %v3321, %v3595
        %v3627 = vmul.f32 %v3323, %v3595
        %3628 = vrot.lane.b32.xlu0 %v882, 64
        %v3629 = vpop.permute.xlu0 %3628
        %3630 = vrot.lane.b32.xlu0 %v885, 64
        %v3631 = vpop.permute.xlu0 %3630
        %3632 = vrot.lane.b32.xlu0 %v888, 64
        %v3633 = vpop.permute.xlu0 %3632
        %3634 = vrot.lane.b32.xlu0 %v891, 64
        %v3635 = vpop.permute.xlu0 %3634
        %3636 = vrot.lane.b32.xlu0 %v894, 64
        %v3637 = vpop.permute.xlu0 %3636
        %3638 = vrot.lane.b32.xlu0 %v897, 64
        %v3639 = vpop.permute.xlu0 %3638
        %3640 = vrot.lane.b32.xlu0 %v900, 64
        %v3641 = vpop.permute.xlu0 %3640
        %3642 = vrot.lane.b32.xlu0 %v903, 64
        %v3643 = vpop.permute.xlu0 %3642
        %3644 = vrot.lane.b32.xlu0 %v906, 64
        %v3645 = vpop.permute.xlu0 %3644
        %3646 = vrot.lane.b32.xlu0 %v909, 64
        %v3647 = vpop.permute.xlu0 %3646
        %3648 = vrot.lane.b32.xlu0 %v912, 64
        %v3649 = vpop.permute.xlu0 %3648
        %3650 = vrot.lane.b32.xlu0 %v915, 64
        %v3651 = vpop.permute.xlu0 %3650
        %3652 = vrot.lane.b32.xlu0 %v918, 64
        %v3653 = vpop.permute.xlu0 %3652
        %3654 = vrot.lane.b32.xlu0 %v921, 64
        %v3655 = vpop.permute.xlu0 %3654
        %3656 = vrot.lane.b32.xlu0 %v924, 64
        %v3657 = vpop.permute.xlu0 %3656
        %3658 = vrot.lane.b32.xlu0 %v927, 64
        %v3659 = vpop.permute.xlu0 %3658
        %3660 = vrot.lane.b32.xlu0 %v930, 64
        %v3661 = vpop.permute.xlu0 %3660
        %3662 = vrot.lane.b32.xlu0 %v933, 64
        %v3663 = vpop.permute.xlu0 %3662
        %3664 = vrot.lane.b32.xlu0 %v936, 64
        %v3665 = vpop.permute.xlu0 %3664
        %3666 = vrot.lane.b32.xlu0 %v939, 64
        %v3667 = vpop.permute.xlu0 %3666
        %3668 = vrot.lane.b32.xlu0 %v942, 64
        %v3669 = vpop.permute.xlu0 %3668
        %3670 = vrot.lane.b32.xlu0 %v945, 64
        %v3671 = vpop.permute.xlu0 %3670
        %3672 = vrot.lane.b32.xlu0 %v948, 64
        %v3673 = vpop.permute.xlu0 %3672
        %3674 = vrot.lane.b32.xlu0 %v951, 64
        %v3675 = vpop.permute.xlu0 %3674
        %3676 = vrot.lane.b32.xlu0 %v954, 64
        %v3677 = vpop.permute.xlu0 %3676
        %3678 = vrot.lane.b32.xlu0 %v957, 64
        %v3679 = vpop.permute.xlu0 %3678
        %3680 = vrot.lane.b32.xlu0 %v960, 64
        %v3681 = vpop.permute.xlu0 %3680
        %3682 = vrot.lane.b32.xlu0 %v963, 64
        %v3683 = vpop.permute.xlu0 %3682
        %3684 = vrot.lane.b32.xlu0 %v966, 64
        %v3685 = vpop.permute.xlu0 %3684
        %3686 = vrot.lane.b32.xlu0 %v969, 64
        %v3687 = vpop.permute.xlu0 %3686
        %3688 = vrot.lane.b32.xlu0 %v972, 64
        %v3689 = vpop.permute.xlu0 %3688
        %3690 = vrot.lane.b32.xlu0 %v975, 64
        %v3691 = vpop.permute.xlu0 %3690
        %3724 = vmatpush.msra.mxu0 %v3659
        %3725 = vmatpush.msra.mxu0 %v3657
        %3726 = vmatpush.msra.mxu0 %v3655
        %3727 = vmatpush.msra.mxu0 %v3653
        %3728 = vmatpush.msra.mxu0 %v3651
        %3729 = vmatpush.msra.mxu0 %v3649
        %3730 = vmatpush.msra.mxu0 %v3647
        %3731 = vmatpush.msra.mxu0 %v3645
        %3732 = vmatpush.msra.mxu0 %v3643
        %3733 = vmatpush.msra.mxu0 %v3641
        %3734 = vmatpush.msra.mxu0 %v3639
        %3735 = vmatpush.msra.mxu0 %v3637
        %3736 = vmatpush.msra.mxu0 %v3635
        %3737 = vmatpush.msra.mxu0 %v3633
        %3738 = vmatpush.msra.mxu0 %v3631
        %3739 = vmatpush.msra.mxu0 %v3629
        %3740 = vmatmul.f32.gmra.mxu0 %v3596
        %v3741 = vpop.f32.mrf.mxu0
        %v3742 = vadd.f32 0.0, %v3741
        %3743 = vmatmul.f32.gmra.mxu0 %v3598
        %v3744 = vpop.f32.mrf.mxu0
        %v3745 = vadd.f32 0.0, %v3744
        %3746 = vmatmul.f32.gmra.mxu0 %v3600
        %v3747 = vpop.f32.mrf.mxu0
        %v3748 = vadd.f32 0.0, %v3747
        %3749 = vmatmul.f32.gmra.mxu0 %v3602
        %v3750 = vpop.f32.mrf.mxu0
        %v3751 = vadd.f32 0.0, %v3750
        %3752 = vmatmul.f32.gmra.mxu0 %v3604
        %v3753 = vpop.f32.mrf.mxu0
        %v3754 = vadd.f32 0.0, %v3753
        %3755 = vmatmul.f32.gmra.mxu0 %v3606
        %v3756 = vpop.f32.mrf.mxu0
        %v3757 = vadd.f32 0.0, %v3756
        %3758 = vmatmul.f32.gmra.mxu0 %v3608
        %v3759 = vpop.f32.mrf.mxu0
        %v3760 = vadd.f32 0.0, %v3759
        %3761 = vmatmul.f32.gmra.mxu0 %v3610
        %v3762 = vpop.f32.mrf.mxu0
        %v3763 = vadd.f32 0.0, %v3762
        %3764 = vmatmul.f32.gmra.mxu0 %v3612
        %v3765 = vpop.f32.mrf.mxu0
        %v3766 = vadd.f32 0.0, %v3765
        %3767 = vmatmul.f32.gmra.mxu0 %v3614
        %v3768 = vpop.f32.mrf.mxu0
        %v3769 = vadd.f32 0.0, %v3768
        %3770 = vmatmul.f32.gmra.mxu0 %v3616
        %v3771 = vpop.f32.mrf.mxu0
        %v3772 = vadd.f32 0.0, %v3771
        %3773 = vmatmul.f32.gmra.mxu0 %v3618
        %v3774 = vpop.f32.mrf.mxu0
        %v3775 = vadd.f32 0.0, %v3774
        %3776 = vmatmul.f32.gmra.mxu0 %v3620
        %v3777 = vpop.f32.mrf.mxu0
        %v3778 = vadd.f32 0.0, %v3777
        %3779 = vmatmul.f32.gmra.mxu0 %v3622
        %v3780 = vpop.f32.mrf.mxu0
        %v3781 = vadd.f32 0.0, %v3780
        %3782 = vmatmul.f32.gmra.mxu0 %v3624
        %v3783 = vpop.f32.mrf.mxu0
        %v3784 = vadd.f32 0.0, %v3783
        %3785 = vmatmul.f32.gmra.mxu0 %v3626
        %v3786 = vpop.f32.mrf.mxu0
        %v3787 = vadd.f32 0.0, %v3786
        %3788 = vdwg.mxu0
        %3789 = vmatpush.msra.mxu0 %v3691
        %3790 = vmatpush.msra.mxu0 %v3689
        %3791 = vmatpush.msra.mxu0 %v3687
        %3792 = vmatpush.msra.mxu0 %v3685
        %3793 = vmatpush.msra.mxu0 %v3683
        %3794 = vmatpush.msra.mxu0 %v3681
        %3795 = vmatpush.msra.mxu0 %v3679
        %3796 = vmatpush.msra.mxu0 %v3677
        %3797 = vmatpush.msra.mxu0 %v3675
        %3798 = vmatpush.msra.mxu0 %v3673
        %3799 = vmatpush.msra.mxu0 %v3671
        %3800 = vmatpush.msra.mxu0 %v3669
        %3801 = vmatpush.msra.mxu0 %v3667
        %3802 = vmatpush.msra.mxu0 %v3665
        %3803 = vmatpush.msra.mxu0 %v3663
        %3804 = vmatpush.msra.mxu0 %v3661
        %3805 = vmatmul.f32.gmra.mxu0 %v3597
        %v3806 = vpop.f32.mrf.mxu0
        %v3807 = vadd.f32 %v3742, %v3806
        %3808 = vmatmul.f32.gmra.mxu0 %v3599
        %v3809 = vpop.f32.mrf.mxu0
        %v3810 = vadd.f32 %v3745, %v3809
        %3811 = vmatmul.f32.gmra.mxu0 %v3601
        %v3812 = vpop.f32.mrf.mxu0
        %v3813 = vadd.f32 %v3748, %v3812
        %3814 = vmatmul.f32.gmra.mxu0 %v3603
        %v3815 = vpop.f32.mrf.mxu0
        %v3816 = vadd.f32 %v3751, %v3815
        %3817 = vmatmul.f32.gmra.mxu0 %v3605
        %v3818 = vpop.f32.mrf.mxu0
        %v3819 = vadd.f32 %v3754, %v3818
        %3820 = vmatmul.f32.gmra.mxu0 %v3607
        %v3821 = vpop.f32.mrf.mxu0
        %v3822 = vadd.f32 %v3757, %v3821
        %3823 = vmatmul.f32.gmra.mxu0 %v3609
        %v3824 = vpop.f32.mrf.mxu0
        %v3825 = vadd.f32 %v3760, %v3824
        %3826 = vmatmul.f32.gmra.mxu0 %v3611
        %v3827 = vpop.f32.mrf.mxu0
        %v3828 = vadd.f32 %v3763, %v3827
        %3829 = vmatmul.f32.gmra.mxu0 %v3613
        %v3830 = vpop.f32.mrf.mxu0
        %v3831 = vadd.f32 %v3766, %v3830
        %3832 = vmatmul.f32.gmra.mxu0 %v3615
        %v3833 = vpop.f32.mrf.mxu0
        %v3834 = vadd.f32 %v3769, %v3833
        %3835 = vmatmul.f32.gmra.mxu0 %v3617
        %v3836 = vpop.f32.mrf.mxu0
        %v3837 = vadd.f32 %v3772, %v3836
        %3838 = vmatmul.f32.gmra.mxu0 %v3619
        %v3839 = vpop.f32.mrf.mxu0
        %v3840 = vadd.f32 %v3775, %v3839
        %3841 = vmatmul.f32.gmra.mxu0 %v3621
        %v3842 = vpop.f32.mrf.mxu0
        %v3843 = vadd.f32 %v3778, %v3842
        %3844 = vmatmul.f32.gmra.mxu0 %v3623
        %v3845 = vpop.f32.mrf.mxu0
        %v3846 = vadd.f32 %v3781, %v3845
        %3847 = vmatmul.f32.gmra.mxu0 %v3625
        %v3848 = vpop.f32.mrf.mxu0
        %v3849 = vadd.f32 %v3784, %v3848
        %3850 = vmatmul.f32.gmra.mxu0 %v3627
        %v3851 = vpop.f32.mrf.mxu0
        %v3852 = vadd.f32 %v3787, %v3851
        %3853 = vdwg.mxu0
        %3854 = vrot.lane.b32.xlu0 %v695, 32
        %v3855 = vpop.permute.xlu0 %3854
        %3856 = vrot.lane.b32.xlu0 %v696, 32
        %v3857 = vpop.permute.xlu0 %3856
        %3858 = vrot.lane.b32.xlu0 %v697, 32
        %v3859 = vpop.permute.xlu0 %3858
        %3860 = vrot.lane.b32.xlu0 %v698, 32
        %v3861 = vpop.permute.xlu0 %3860
        %3862 = vrot.lane.b32.xlu0 %v699, 32
        %v3863 = vpop.permute.xlu0 %3862
        %3864 = vrot.lane.b32.xlu0 %v700, 32
        %v3865 = vpop.permute.xlu0 %3864
        %3866 = vrot.lane.b32.xlu0 %v701, 32
        %v3867 = vpop.permute.xlu0 %3866
        %3868 = vrot.lane.b32.xlu0 %v702, 32
        %v3869 = vpop.permute.xlu0 %3868
        %3870 = vrot.lane.b32.xlu0 %v703, 32
        %v3871 = vpop.permute.xlu0 %3870
        %3872 = vrot.lane.b32.xlu0 %v704, 32
        %v3873 = vpop.permute.xlu0 %3872
        %3874 = vrot.lane.b32.xlu0 %v705, 32
        %v3875 = vpop.permute.xlu0 %3874
        %3876 = vrot.lane.b32.xlu0 %v706, 32
        %v3877 = vpop.permute.xlu0 %3876
        %3878 = vrot.lane.b32.xlu0 %v707, 32
        %v3879 = vpop.permute.xlu0 %3878
        %3880 = vrot.lane.b32.xlu0 %v708, 32
        %v3881 = vpop.permute.xlu0 %3880
        %3882 = vrot.lane.b32.xlu0 %v709, 32
        %v3883 = vpop.permute.xlu0 %3882
        %3884 = vrot.lane.b32.xlu0 %v710, 32
        %v3885 = vpop.permute.xlu0 %3884
        %3886 = vrot.lane.b32.xlu0 %v749, 32
        %v3887 = vpop.permute.xlu0 %3886
        %3888 = vrot.lane.b32.xlu0 %v752, 32
        %v3889 = vpop.permute.xlu0 %3888
        %3890 = vrot.lane.b32.xlu0 %v755, 32
        %v3891 = vpop.permute.xlu0 %3890
        %3892 = vrot.lane.b32.xlu0 %v758, 32
        %v3893 = vpop.permute.xlu0 %3892
        %3894 = vrot.lane.b32.xlu0 %v761, 32
        %v3895 = vpop.permute.xlu0 %3894
        %3896 = vrot.lane.b32.xlu0 %v764, 32
        %v3897 = vpop.permute.xlu0 %3896
        %3898 = vrot.lane.b32.xlu0 %v767, 32
        %v3899 = vpop.permute.xlu0 %3898
        %3900 = vrot.lane.b32.xlu0 %v770, 32
        %v3901 = vpop.permute.xlu0 %3900
        %3902 = vrot.lane.b32.xlu0 %v773, 32
        %v3903 = vpop.permute.xlu0 %3902
        %3904 = vrot.lane.b32.xlu0 %v776, 32
        %v3905 = vpop.permute.xlu0 %3904
        %3906 = vrot.lane.b32.xlu0 %v779, 32
        %v3907 = vpop.permute.xlu0 %3906
        %3908 = vrot.lane.b32.xlu0 %v782, 32
        %v3909 = vpop.permute.xlu0 %3908
        %3910 = vrot.lane.b32.xlu0 %v785, 32
        %v3911 = vpop.permute.xlu0 %3910
        %3912 = vrot.lane.b32.xlu0 %v788, 32
        %v3913 = vpop.permute.xlu0 %3912
        %3914 = vrot.lane.b32.xlu0 %v791, 32
        %v3915 = vpop.permute.xlu0 %3914
        %3916 = vrot.lane.b32.xlu0 %v794, 32
        %v3917 = vpop.permute.xlu0 %3916
        %3918 = vrot.lane.b32.xlu0 %v797, 32
        %v3919 = vpop.permute.xlu0 %3918
        %3920 = vrot.lane.b32.xlu0 %v800, 32
        %v3921 = vpop.permute.xlu0 %3920
        %3922 = vrot.lane.b32.xlu0 %v803, 32
        %v3923 = vpop.permute.xlu0 %3922
        %3924 = vrot.lane.b32.xlu0 %v806, 32
        %v3925 = vpop.permute.xlu0 %3924
        %3926 = vrot.lane.b32.xlu0 %v809, 32
        %v3927 = vpop.permute.xlu0 %3926
        %3928 = vrot.lane.b32.xlu0 %v812, 32
        %v3929 = vpop.permute.xlu0 %3928
        %3930 = vrot.lane.b32.xlu0 %v815, 32
        %v3931 = vpop.permute.xlu0 %3930
        %3932 = vrot.lane.b32.xlu0 %v818, 32
        %v3933 = vpop.permute.xlu0 %3932
        %3934 = vrot.lane.b32.xlu0 %v821, 32
        %v3935 = vpop.permute.xlu0 %3934
        %3936 = vrot.lane.b32.xlu0 %v824, 32
        %v3937 = vpop.permute.xlu0 %3936
        %3938 = vrot.lane.b32.xlu0 %v827, 32
        %v3939 = vpop.permute.xlu0 %3938
        %3940 = vrot.lane.b32.xlu0 %v830, 32
        %v3941 = vpop.permute.xlu0 %3940
        %3942 = vrot.lane.b32.xlu0 %v833, 32
        %v3943 = vpop.permute.xlu0 %3942
        %3944 = vrot.lane.b32.xlu0 %v836, 32
        %v3945 = vpop.permute.xlu0 %3944
        %3946 = vrot.lane.b32.xlu0 %v839, 32
        %v3947 = vpop.permute.xlu0 %3946
        %3948 = vrot.lane.b32.xlu0 %v842, 32
        %v3949 = vpop.permute.xlu0 %3948
        %v3950 = vsel %vm977, %v3855, 0
        %v3952 = vsel %vm977, %v3857, 0
        %v3954 = vsel %vm977, %v3859, 0
        %v3956 = vsel %vm977, %v3861, 0
        %v3958 = vsel %vm977, %v3863, 0
        %v3960 = vsel %vm977, %v3865, 0
        %v3962 = vsel %vm977, %v3867, 0
        %v3964 = vsel %vm977, %v3869, 0
        %v3966 = vsel %vm977, %v3871, 0
        %v3968 = vsel %vm977, %v3873, 0
        %v3970 = vsel %vm977, %v3875, 0
        %v3972 = vsel %vm977, %v3877, 0
        %v3974 = vsel %vm977, %v3879, 0
        %v3976 = vsel %vm977, %v3881, 0
        %v3978 = vsel %vm977, %v3883, 0
        %v3980 = vsel %vm977, %v3885, 0
        %v3982 = vsel %vm977, %v3887, 0
        %v3984 = vsel %vm977, %v3889, 0
        %v3986 = vsel %vm977, %v3891, 0
        %v3988 = vsel %vm977, %v3893, 0
        %v3990 = vsel %vm977, %v3895, 0
        %v3992 = vsel %vm977, %v3897, 0
        %v3994 = vsel %vm977, %v3899, 0
        %v3996 = vsel %vm977, %v3901, 0
        %v3998 = vsel %vm977, %v3903, 0
        %v4000 = vsel %vm977, %v3905, 0
        %v4002 = vsel %vm977, %v3907, 0
        %v4004 = vsel %vm977, %v3909, 0
        %v4006 = vsel %vm977, %v3911, 0
        %v4008 = vsel %vm977, %v3913, 0
        %v4010 = vsel %vm977, %v3915, 0
        %v4012 = vsel %vm977, %v3917, 0
        %v4014 = vsel %vm977, %v3919, 0
        %v4016 = vsel %vm977, %v3921, 0
        %v4018 = vsel %vm977, %v3923, 0
        %v4020 = vsel %vm977, %v3925, 0
        %v4022 = vsel %vm977, %v3927, 0
        %v4024 = vsel %vm977, %v3929, 0
        %v4026 = vsel %vm977, %v3931, 0
        %v4028 = vsel %vm977, %v3933, 0
        %v4030 = vsel %vm977, %v3935, 0
        %v4032 = vsel %vm977, %v3937, 0
        %v4034 = vsel %vm977, %v3939, 0
        %v4036 = vsel %vm977, %v3941, 0
        %v4038 = vsel %vm977, %v3943, 0
        %v4040 = vsel %vm977, %v3945, 0
        %v4042 = vsel %vm977, %v3947, 0
        %v4044 = vsel %vm977, %v3949, 0
        %4046 = vmatpush.xpose.msra.mxu0 %v4012
        %4047 = vmatpush.xpose.msra.mxu0 %v4010
        %4048 = vmatpush.xpose.msra.mxu0 %v4008
        %4049 = vmatpush.xpose.msra.mxu0 %v4006
        %4050 = vmatpush.xpose.msra.mxu0 %v4004
        %4051 = vmatpush.xpose.msra.mxu0 %v4002
        %4052 = vmatpush.xpose.msra.mxu0 %v4000
        %4053 = vmatpush.xpose.msra.mxu0 %v3998
        %4054 = vmatpush.xpose.msra.mxu0 %v3996
        %4055 = vmatpush.xpose.msra.mxu0 %v3994
        %4056 = vmatpush.xpose.msra.mxu0 %v3992
        %4057 = vmatpush.xpose.msra.mxu0 %v3990
        %4058 = vmatpush.xpose.msra.mxu0 %v3988
        %4059 = vmatpush.xpose.msra.mxu0 %v3986
        %4060 = vmatpush.xpose.msra.mxu0 %v3984
        %4061 = vmatpush.xpose.msra.mxu0 %v3982
        %4062 = vmatmul.f32.gmra.mxu0 %v3950
        %v4063 = vpop.f32.mrf.mxu0
        %v4064 = vadd.f32 0.0, %v4063
        %4065 = vmatmul.f32.gmra.mxu0 %v3952
        %v4066 = vpop.f32.mrf.mxu0
        %v4067 = vadd.f32 0.0, %v4066
        %4068 = vmatmul.f32.gmra.mxu0 %v3954
        %v4069 = vpop.f32.mrf.mxu0
        %v4070 = vadd.f32 0.0, %v4069
        %4071 = vmatmul.f32.gmra.mxu0 %v3956
        %v4072 = vpop.f32.mrf.mxu0
        %v4073 = vadd.f32 0.0, %v4072
        %4074 = vmatmul.f32.gmra.mxu0 %v3958
        %v4075 = vpop.f32.mrf.mxu0
        %v4076 = vadd.f32 0.0, %v4075
        %4077 = vmatmul.f32.gmra.mxu0 %v3960
        %v4078 = vpop.f32.mrf.mxu0
        %v4079 = vadd.f32 0.0, %v4078
        %4080 = vmatmul.f32.gmra.mxu0 %v3962
        %v4081 = vpop.f32.mrf.mxu0
        %v4082 = vadd.f32 0.0, %v4081
        %4083 = vmatmul.f32.gmra.mxu0 %v3964
        %v4084 = vpop.f32.mrf.mxu0
        %v4085 = vadd.f32 0.0, %v4084
        %4086 = vmatmul.f32.gmra.mxu0 %v3966
        %v4087 = vpop.f32.mrf.mxu0
        %v4088 = vadd.f32 0.0, %v4087
        %4089 = vmatmul.f32.gmra.mxu0 %v3968
        %v4090 = vpop.f32.mrf.mxu0
        %v4091 = vadd.f32 0.0, %v4090
        %4092 = vmatmul.f32.gmra.mxu0 %v3970
        %v4093 = vpop.f32.mrf.mxu0
        %v4094 = vadd.f32 0.0, %v4093
        %4095 = vmatmul.f32.gmra.mxu0 %v3972
        %v4096 = vpop.f32.mrf.mxu0
        %v4097 = vadd.f32 0.0, %v4096
        %4098 = vmatmul.f32.gmra.mxu0 %v3974
        %v4099 = vpop.f32.mrf.mxu0
        %v4100 = vadd.f32 0.0, %v4099
        %4101 = vmatmul.f32.gmra.mxu0 %v3976
        %v4102 = vpop.f32.mrf.mxu0
        %v4103 = vadd.f32 0.0, %v4102
        %4104 = vmatmul.f32.gmra.mxu0 %v3978
        %v4105 = vpop.f32.mrf.mxu0
        %v4106 = vadd.f32 0.0, %v4105
        %4107 = vmatmul.f32.gmra.mxu0 %v3980
        %v4108 = vpop.f32.mrf.mxu0
        %v4109 = vadd.f32 0.0, %v4108
        %4110 = vdwg.mxu0
        %4111 = vmatpush.xpose.msra.mxu0 %v4044
        %4112 = vmatpush.xpose.msra.mxu0 %v4042
        %4113 = vmatpush.xpose.msra.mxu0 %v4040
        %4114 = vmatpush.xpose.msra.mxu0 %v4038
        %4115 = vmatpush.xpose.msra.mxu0 %v4036
        %4116 = vmatpush.xpose.msra.mxu0 %v4034
        %4117 = vmatpush.xpose.msra.mxu0 %v4032
        %4118 = vmatpush.xpose.msra.mxu0 %v4030
        %4119 = vmatpush.xpose.msra.mxu0 %v4028
        %4120 = vmatpush.xpose.msra.mxu0 %v4026
        %4121 = vmatpush.xpose.msra.mxu0 %v4024
        %4122 = vmatpush.xpose.msra.mxu0 %v4022
        %4123 = vmatpush.xpose.msra.mxu0 %v4020
        %4124 = vmatpush.xpose.msra.mxu0 %v4018
        %4125 = vmatpush.xpose.msra.mxu0 %v4016
        %4126 = vmatpush.xpose.msra.mxu0 %v4014
        %4127 = vmatmul.f32.gmra.mxu0 %v3950
        %v4128 = vpop.f32.mrf.mxu0
        %v4129 = vadd.f32 0.0, %v4128
        %4130 = vmatmul.f32.gmra.mxu0 %v3952
        %v4131 = vpop.f32.mrf.mxu0
        %v4132 = vadd.f32 0.0, %v4131
        %4133 = vmatmul.f32.gmra.mxu0 %v3954
        %v4134 = vpop.f32.mrf.mxu0
        %v4135 = vadd.f32 0.0, %v4134
        %4136 = vmatmul.f32.gmra.mxu0 %v3956
        %v4137 = vpop.f32.mrf.mxu0
        %v4138 = vadd.f32 0.0, %v4137
        %4139 = vmatmul.f32.gmra.mxu0 %v3958
        %v4140 = vpop.f32.mrf.mxu0
        %v4141 = vadd.f32 0.0, %v4140
        %4142 = vmatmul.f32.gmra.mxu0 %v3960
        %v4143 = vpop.f32.mrf.mxu0
        %v4144 = vadd.f32 0.0, %v4143
        %4145 = vmatmul.f32.gmra.mxu0 %v3962
        %v4146 = vpop.f32.mrf.mxu0
        %v4147 = vadd.f32 0.0, %v4146
        %4148 = vmatmul.f32.gmra.mxu0 %v3964
        %v4149 = vpop.f32.mrf.mxu0
        %v4150 = vadd.f32 0.0, %v4149
        %4151 = vmatmul.f32.gmra.mxu0 %v3966
        %v4152 = vpop.f32.mrf.mxu0
        %v4153 = vadd.f32 0.0, %v4152
        %4154 = vmatmul.f32.gmra.mxu0 %v3968
        %v4155 = vpop.f32.mrf.mxu0
        %v4156 = vadd.f32 0.0, %v4155
        %4157 = vmatmul.f32.gmra.mxu0 %v3970
        %v4158 = vpop.f32.mrf.mxu0
        %v4159 = vadd.f32 0.0, %v4158
        %4160 = vmatmul.f32.gmra.mxu0 %v3972
        %v4161 = vpop.f32.mrf.mxu0
        %v4162 = vadd.f32 0.0, %v4161
        %4163 = vmatmul.f32.gmra.mxu0 %v3974
        %v4164 = vpop.f32.mrf.mxu0
        %v4165 = vadd.f32 0.0, %v4164
        %4166 = vmatmul.f32.gmra.mxu0 %v3976
        %v4167 = vpop.f32.mrf.mxu0
        %v4168 = vadd.f32 0.0, %v4167
        %4169 = vmatmul.f32.gmra.mxu0 %v3978
        %v4170 = vpop.f32.mrf.mxu0
        %v4171 = vadd.f32 0.0, %v4170
        %4172 = vmatmul.f32.gmra.mxu0 %v3980
        %v4173 = vpop.f32.mrf.mxu0
        %v4174 = vadd.f32 0.0, %v4173
        %4175 = vdwg.mxu0
        %v4176 = vmax.f32 %v4064, %v4129
        %4177 = vmax.xlane.f32.xlu0 %v4176
        %v4178 = vpop.xlane.xlu0 %4177
        %v4179 = vmax.f32 %v4067, %v4132
        %4180 = vmax.xlane.f32.xlu0 %v4179
        %v4181 = vpop.xlane.xlu0 %4180
        %v4182 = vmax.f32 %v4070, %v4135
        %4183 = vmax.xlane.f32.xlu0 %v4182
        %v4184 = vpop.xlane.xlu0 %4183
        %v4185 = vmax.f32 %v4073, %v4138
        %4186 = vmax.xlane.f32.xlu0 %v4185
        %v4187 = vpop.xlane.xlu0 %4186
        %v4188 = vmax.f32 %v4076, %v4141
        %4189 = vmax.xlane.f32.xlu0 %v4188
        %v4190 = vpop.xlane.xlu0 %4189
        %v4191 = vmax.f32 %v4079, %v4144
        %4192 = vmax.xlane.f32.xlu0 %v4191
        %v4193 = vpop.xlane.xlu0 %4192
        %v4194 = vmax.f32 %v4082, %v4147
        %4195 = vmax.xlane.f32.xlu0 %v4194
        %v4196 = vpop.xlane.xlu0 %4195
        %v4197 = vmax.f32 %v4085, %v4150
        %4198 = vmax.xlane.f32.xlu0 %v4197
        %v4199 = vpop.xlane.xlu0 %4198
        %v4200 = vmax.f32 %v4088, %v4153
        %4201 = vmax.xlane.f32.xlu0 %v4200
        %v4202 = vpop.xlane.xlu0 %4201
        %v4203 = vmax.f32 %v4091, %v4156
        %4204 = vmax.xlane.f32.xlu0 %v4203
        %v4205 = vpop.xlane.xlu0 %4204
        %v4206 = vmax.f32 %v4094, %v4159
        %4207 = vmax.xlane.f32.xlu0 %v4206
        %v4208 = vpop.xlane.xlu0 %4207
        %v4209 = vmax.f32 %v4097, %v4162
        %4210 = vmax.xlane.f32.xlu0 %v4209
        %v4211 = vpop.xlane.xlu0 %4210
        %v4212 = vmax.f32 %v4100, %v4165
        %4213 = vmax.xlane.f32.xlu0 %v4212
        %v4214 = vpop.xlane.xlu0 %4213
        %v4215 = vmax.f32 %v4103, %v4168
        %4216 = vmax.xlane.f32.xlu0 %v4215
        %v4217 = vpop.xlane.xlu0 %4216
        %v4218 = vmax.f32 %v4106, %v4171
        %4219 = vmax.xlane.f32.xlu0 %v4218
        %v4220 = vpop.xlane.xlu0 %4219
        %v4221 = vmax.f32 %v4109, %v4174
        %4222 = vmax.xlane.f32.xlu0 %v4221
        %v4223 = vpop.xlane.xlu0 %4222
        %v4224 = vsub.f32 %v4064, %v4178
        %v4225 = vsub.f32 %v4129, %v4178
        %v4226 = vsub.f32 %v4067, %v4181
        %v4227 = vsub.f32 %v4132, %v4181
        %v4228 = vsub.f32 %v4070, %v4184
        %v4229 = vsub.f32 %v4135, %v4184
        %v4230 = vsub.f32 %v4073, %v4187
        %v4231 = vsub.f32 %v4138, %v4187
        %v4232 = vsub.f32 %v4076, %v4190
        %v4233 = vsub.f32 %v4141, %v4190
        %v4234 = vsub.f32 %v4079, %v4193
        %v4235 = vsub.f32 %v4144, %v4193
        %v4236 = vsub.f32 %v4082, %v4196
        %v4237 = vsub.f32 %v4147, %v4196
        %v4238 = vsub.f32 %v4085, %v4199
        %v4239 = vsub.f32 %v4150, %v4199
        %v4240 = vsub.f32 %v4088, %v4202
        %v4241 = vsub.f32 %v4153, %v4202
        %v4242 = vsub.f32 %v4091, %v4205
        %v4243 = vsub.f32 %v4156, %v4205
        %v4244 = vsub.f32 %v4094, %v4208
        %v4245 = vsub.f32 %v4159, %v4208
        %v4246 = vsub.f32 %v4097, %v4211
        %v4247 = vsub.f32 %v4162, %v4211
        %v4248 = vsub.f32 %v4100, %v4214
        %v4249 = vsub.f32 %v4165, %v4214
        %v4250 = vsub.f32 %v4103, %v4217
        %v4251 = vsub.f32 %v4168, %v4217
        %v4252 = vsub.f32 %v4106, %v4220
        %v4253 = vsub.f32 %v4171, %v4220
        %v4254 = vsub.f32 %v4109, %v4223
        %v4255 = vsub.f32 %v4174, %v4223
        %v4256 = vmul.f32 %v4224, 1.442695
        %v4257 = vpow.pop %v4256
        %v4258 = vmul.f32 %v4225, 1.442695
        %v4259 = vpow.pop %v4258
        %v4260 = vmul.f32 %v4226, 1.442695
        %v4261 = vpow.pop %v4260
        %v4262 = vmul.f32 %v4227, 1.442695
        %v4263 = vpow.pop %v4262
        %v4264 = vmul.f32 %v4228, 1.442695
        %v4265 = vpow.pop %v4264
        %v4266 = vmul.f32 %v4229, 1.442695
        %v4267 = vpow.pop %v4266
        %v4268 = vmul.f32 %v4230, 1.442695
        %v4269 = vpow.pop %v4268
        %v4270 = vmul.f32 %v4231, 1.442695
        %v4271 = vpow.pop %v4270
        %v4272 = vmul.f32 %v4232, 1.442695
        %v4273 = vpow.pop %v4272
        %v4274 = vmul.f32 %v4233, 1.442695
        %v4275 = vpow.pop %v4274
        %v4276 = vmul.f32 %v4234, 1.442695
        %v4277 = vpow.pop %v4276
        %v4278 = vmul.f32 %v4235, 1.442695
        %v4279 = vpow.pop %v4278
        %v4280 = vmul.f32 %v4236, 1.442695
        %v4281 = vpow.pop %v4280
        %v4282 = vmul.f32 %v4237, 1.442695
        %v4283 = vpow.pop %v4282
        %v4284 = vmul.f32 %v4238, 1.442695
        %v4285 = vpow.pop %v4284
        %v4286 = vmul.f32 %v4239, 1.442695
        %v4287 = vpow.pop %v4286
        %v4288 = vmul.f32 %v4240, 1.442695
        %v4289 = vpow.pop %v4288
        %v4290 = vmul.f32 %v4241, 1.442695
        %v4291 = vpow.pop %v4290
        %v4292 = vmul.f32 %v4242, 1.442695
        %v4293 = vpow.pop %v4292
        %v4294 = vmul.f32 %v4243, 1.442695
        %v4295 = vpow.pop %v4294
        %v4296 = vmul.f32 %v4244, 1.442695
        %v4297 = vpow.pop %v4296
        %v4298 = vmul.f32 %v4245, 1.442695
        %v4299 = vpow.pop %v4298
        %v4300 = vmul.f32 %v4246, 1.442695
        %v4301 = vpow.pop %v4300
        %v4302 = vmul.f32 %v4247, 1.442695
        %v4303 = vpow.pop %v4302
        %v4304 = vmul.f32 %v4248, 1.442695
        %v4305 = vpow.pop %v4304
        %v4306 = vmul.f32 %v4249, 1.442695
        %v4307 = vpow.pop %v4306
        %v4308 = vmul.f32 %v4250, 1.442695
        %v4309 = vpow.pop %v4308
        %v4310 = vmul.f32 %v4251, 1.442695
        %v4311 = vpow.pop %v4310
        %v4312 = vmul.f32 %v4252, 1.442695
        %v4313 = vpow.pop %v4312
        %v4314 = vmul.f32 %v4253, 1.442695
        %v4315 = vpow.pop %v4314
        %v4316 = vmul.f32 %v4254, 1.442695
        %v4317 = vpow.pop %v4316
        %v4318 = vmul.f32 %v4255, 1.442695
        %v4319 = vpow.pop %v4318
        %v4320 = vadd.f32 %v4257, %v4259
        %4321 = vadd.xlane.f32.xlu0 %v4320
        %v4322 = vpop.xlane.xlu0 %4321
        %v4323 = vadd.f32 %v4261, %v4263
        %4324 = vadd.xlane.f32.xlu0 %v4323
        %v4325 = vpop.xlane.xlu0 %4324
        %v4326 = vadd.f32 %v4265, %v4267
        %4327 = vadd.xlane.f32.xlu0 %v4326
        %v4328 = vpop.xlane.xlu0 %4327
        %v4329 = vadd.f32 %v4269, %v4271
        %4330 = vadd.xlane.f32.xlu0 %v4329
        %v4331 = vpop.xlane.xlu0 %4330
        %v4332 = vadd.f32 %v4273, %v4275
        %4333 = vadd.xlane.f32.xlu0 %v4332
        %v4334 = vpop.xlane.xlu0 %4333
        %v4335 = vadd.f32 %v4277, %v4279
        %4336 = vadd.xlane.f32.xlu0 %v4335
        %v4337 = vpop.xlane.xlu0 %4336
        %v4338 = vadd.f32 %v4281, %v4283
        %4339 = vadd.xlane.f32.xlu0 %v4338
        %v4340 = vpop.xlane.xlu0 %4339
        %v4341 = vadd.f32 %v4285, %v4287
        %4342 = vadd.xlane.f32.xlu0 %v4341
        %v4343 = vpop.xlane.xlu0 %4342
        %v4344 = vadd.f32 %v4289, %v4291
        %4345 = vadd.xlane.f32.xlu0 %v4344
        %v4346 = vpop.xlane.xlu0 %4345
        %v4347 = vadd.f32 %v4293, %v4295
        %4348 = vadd.xlane.f32.xlu0 %v4347
        %v4349 = vpop.xlane.xlu0 %4348
        %v4350 = vadd.f32 %v4297, %v4299
        %4351 = vadd.xlane.f32.xlu0 %v4350
        %v4352 = vpop.xlane.xlu0 %4351
        %v4353 = vadd.f32 %v4301, %v4303
        %4354 = vadd.xlane.f32.xlu0 %v4353
        %v4355 = vpop.xlane.xlu0 %4354
        %v4356 = vadd.f32 %v4305, %v4307
        %4357 = vadd.xlane.f32.xlu0 %v4356
        %v4358 = vpop.xlane.xlu0 %4357
        %v4359 = vadd.f32 %v4309, %v4311
        %4360 = vadd.xlane.f32.xlu0 %v4359
        %v4361 = vpop.xlane.xlu0 %4360
        %v4362 = vadd.f32 %v4313, %v4315
        %4363 = vadd.xlane.f32.xlu0 %v4362
        %v4364 = vpop.xlane.xlu0 %4363
        %v4365 = vadd.f32 %v4317, %v4319
        %4366 = vadd.xlane.f32.xlu0 %v4365
        %v4367 = vpop.xlane.xlu0 %4366
        %v4368 = vrcp.pop %v4322
        %v4369 = vmul.f32 %v4322, %v4368
        %v4370 = vsub.f32 1.0, %v4369
        %v4371 = vmul.f32 %v4368, %v4370
        %v4372 = vadd.f32 %v4368, %v4371
        %vm4373 = vweird.f32 %v4322
        %vm4374 = vweird.f32 %v4368
        %vm4375 = vmor %vm4373, %vm4374
        %v4376 = vsel %vm4375, %v4368, %v4372
        %v4377 = vand.u32 2147483647, %v4322
        %vm4378 = vcmp.eq.f32.partialorder %v4377, 8.507059e+37
        %v4379 = vand.u32 %v4322, 2147483648
        %v4380 = vor.u32 1.1754944e-38, %v4379
        %v4381 = vsel %vm4378, %v4380, %v4376
        %v4382 = vrcp.pop %v4325
        %v4383 = vmul.f32 %v4325, %v4382
        %v4384 = vsub.f32 1.0, %v4383
        %v4385 = vmul.f32 %v4382, %v4384
        %v4386 = vadd.f32 %v4382, %v4385
        %vm4387 = vweird.f32 %v4325
        %vm4388 = vweird.f32 %v4382
        %vm4389 = vmor %vm4387, %vm4388
        %v4390 = vsel %vm4389, %v4382, %v4386
        %v4391 = vand.u32 2147483647, %v4325
        %vm4392 = vcmp.eq.f32.partialorder %v4391, 8.507059e+37
        %v4393 = vand.u32 %v4325, 2147483648
        %v4394 = vor.u32 1.1754944e-38, %v4393
        %v4395 = vsel %vm4392, %v4394, %v4390
        %v4396 = vrcp.pop %v4328
        %v4397 = vmul.f32 %v4328, %v4396
        %v4398 = vsub.f32 1.0, %v4397
        %v4399 = vmul.f32 %v4396, %v4398
        %v4400 = vadd.f32 %v4396, %v4399
        %vm4401 = vweird.f32 %v4328
        %vm4402 = vweird.f32 %v4396
        %vm4403 = vmor %vm4401, %vm4402
        %v4404 = vsel %vm4403, %v4396, %v4400
        %v4405 = vand.u32 2147483647, %v4328
        %vm4406 = vcmp.eq.f32.partialorder %v4405, 8.507059e+37
        %v4407 = vand.u32 %v4328, 2147483648
        %v4408 = vor.u32 1.1754944e-38, %v4407
        %v4409 = vsel %vm4406, %v4408, %v4404
        %v4410 = vrcp.pop %v4331
        %v4411 = vmul.f32 %v4331, %v4410
        %v4412 = vsub.f32 1.0, %v4411
        %v4413 = vmul.f32 %v4410, %v4412
        %v4414 = vadd.f32 %v4410, %v4413
        %vm4415 = vweird.f32 %v4331
        %vm4416 = vweird.f32 %v4410
        %vm4417 = vmor %vm4415, %vm4416
        %v4418 = vsel %vm4417, %v4410, %v4414
        %v4419 = vand.u32 2147483647, %v4331
        %vm4420 = vcmp.eq.f32.partialorder %v4419, 8.507059e+37
        %v4421 = vand.u32 %v4331, 2147483648
        %v4422 = vor.u32 1.1754944e-38, %v4421
        %v4423 = vsel %vm4420, %v4422, %v4418
        %v4424 = vrcp.pop %v4334
        %v4425 = vmul.f32 %v4334, %v4424
        %v4426 = vsub.f32 1.0, %v4425
        %v4427 = vmul.f32 %v4424, %v4426
        %v4428 = vadd.f32 %v4424, %v4427
        %vm4429 = vweird.f32 %v4334
        %vm4430 = vweird.f32 %v4424
        %vm4431 = vmor %vm4429, %vm4430
        %v4432 = vsel %vm4431, %v4424, %v4428
        %v4433 = vand.u32 2147483647, %v4334
        %vm4434 = vcmp.eq.f32.partialorder %v4433, 8.507059e+37
        %v4435 = vand.u32 %v4334, 2147483648
        %v4436 = vor.u32 1.1754944e-38, %v4435
        %v4437 = vsel %vm4434, %v4436, %v4432
        %v4438 = vrcp.pop %v4337
        %v4439 = vmul.f32 %v4337, %v4438
        %v4440 = vsub.f32 1.0, %v4439
        %v4441 = vmul.f32 %v4438, %v4440
        %v4442 = vadd.f32 %v4438, %v4441
        %vm4443 = vweird.f32 %v4337
        %vm4444 = vweird.f32 %v4438
        %vm4445 = vmor %vm4443, %vm4444
        %v4446 = vsel %vm4445, %v4438, %v4442
        %v4447 = vand.u32 2147483647, %v4337
        %vm4448 = vcmp.eq.f32.partialorder %v4447, 8.507059e+37
        %v4449 = vand.u32 %v4337, 2147483648
        %v4450 = vor.u32 1.1754944e-38, %v4449
        %v4451 = vsel %vm4448, %v4450, %v4446
        %v4452 = vrcp.pop %v4340
        %v4453 = vmul.f32 %v4340, %v4452
        %v4454 = vsub.f32 1.0, %v4453
        %v4455 = vmul.f32 %v4452, %v4454
        %v4456 = vadd.f32 %v4452, %v4455
        %vm4457 = vweird.f32 %v4340
        %vm4458 = vweird.f32 %v4452
        %vm4459 = vmor %vm4457, %vm4458
        %v4460 = vsel %vm4459, %v4452, %v4456
        %v4461 = vand.u32 2147483647, %v4340
        %vm4462 = vcmp.eq.f32.partialorder %v4461, 8.507059e+37
        %v4463 = vand.u32 %v4340, 2147483648
        %v4464 = vor.u32 1.1754944e-38, %v4463
        %v4465 = vsel %vm4462, %v4464, %v4460
        %v4466 = vrcp.pop %v4343
        %v4467 = vmul.f32 %v4343, %v4466
        %v4468 = vsub.f32 1.0, %v4467
        %v4469 = vmul.f32 %v4466, %v4468
        %v4470 = vadd.f32 %v4466, %v4469
        %vm4471 = vweird.f32 %v4343
        %vm4472 = vweird.f32 %v4466
        %vm4473 = vmor %vm4471, %vm4472
        %v4474 = vsel %vm4473, %v4466, %v4470
        %v4475 = vand.u32 2147483647, %v4343
        %vm4476 = vcmp.eq.f32.partialorder %v4475, 8.507059e+37
        %v4477 = vand.u32 %v4343, 2147483648
        %v4478 = vor.u32 1.1754944e-38, %v4477
        %v4479 = vsel %vm4476, %v4478, %v4474
        %v4480 = vrcp.pop %v4346
        %v4481 = vmul.f32 %v4346, %v4480
        %v4482 = vsub.f32 1.0, %v4481
        %v4483 = vmul.f32 %v4480, %v4482
        %v4484 = vadd.f32 %v4480, %v4483
        %vm4485 = vweird.f32 %v4346
        %vm4486 = vweird.f32 %v4480
        %vm4487 = vmor %vm4485, %vm4486
        %v4488 = vsel %vm4487, %v4480, %v4484
        %v4489 = vand.u32 2147483647, %v4346
        %vm4490 = vcmp.eq.f32.partialorder %v4489, 8.507059e+37
        %v4491 = vand.u32 %v4346, 2147483648
        %v4492 = vor.u32 1.1754944e-38, %v4491
        %v4493 = vsel %vm4490, %v4492, %v4488
        %v4494 = vrcp.pop %v4349
        %v4495 = vmul.f32 %v4349, %v4494
        %v4496 = vsub.f32 1.0, %v4495
        %v4497 = vmul.f32 %v4494, %v4496
        %v4498 = vadd.f32 %v4494, %v4497
        %vm4499 = vweird.f32 %v4349
        %vm4500 = vweird.f32 %v4494
        %vm4501 = vmor %vm4499, %vm4500
        %v4502 = vsel %vm4501, %v4494, %v4498
        %v4503 = vand.u32 2147483647, %v4349
        %vm4504 = vcmp.eq.f32.partialorder %v4503, 8.507059e+37
        %v4505 = vand.u32 %v4349, 2147483648
        %v4506 = vor.u32 1.1754944e-38, %v4505
        %v4507 = vsel %vm4504, %v4506, %v4502
        %v4508 = vrcp.pop %v4352
        %v4509 = vmul.f32 %v4352, %v4508
        %v4510 = vsub.f32 1.0, %v4509
        %v4511 = vmul.f32 %v4508, %v4510
        %v4512 = vadd.f32 %v4508, %v4511
        %vm4513 = vweird.f32 %v4352
        %vm4514 = vweird.f32 %v4508
        %vm4515 = vmor %vm4513, %vm4514
        %v4516 = vsel %vm4515, %v4508, %v4512
        %v4517 = vand.u32 2147483647, %v4352
        %vm4518 = vcmp.eq.f32.partialorder %v4517, 8.507059e+37
        %v4519 = vand.u32 %v4352, 2147483648
        %v4520 = vor.u32 1.1754944e-38, %v4519
        %v4521 = vsel %vm4518, %v4520, %v4516
        %v4522 = vrcp.pop %v4355
        %v4523 = vmul.f32 %v4355, %v4522
        %v4524 = vsub.f32 1.0, %v4523
        %v4525 = vmul.f32 %v4522, %v4524
        %v4526 = vadd.f32 %v4522, %v4525
        %vm4527 = vweird.f32 %v4355
        %vm4528 = vweird.f32 %v4522
        %vm4529 = vmor %vm4527, %vm4528
        %v4530 = vsel %vm4529, %v4522, %v4526
        %v4531 = vand.u32 2147483647, %v4355
        %vm4532 = vcmp.eq.f32.partialorder %v4531, 8.507059e+37
        %v4533 = vand.u32 %v4355, 2147483648
        %v4534 = vor.u32 1.1754944e-38, %v4533
        %v4535 = vsel %vm4532, %v4534, %v4530
        %v4536 = vrcp.pop %v4358
        %v4537 = vmul.f32 %v4358, %v4536
        %v4538 = vsub.f32 1.0, %v4537
        %v4539 = vmul.f32 %v4536, %v4538
        %v4540 = vadd.f32 %v4536, %v4539
        %vm4541 = vweird.f32 %v4358
        %vm4542 = vweird.f32 %v4536
        %vm4543 = vmor %vm4541, %vm4542
        %v4544 = vsel %vm4543, %v4536, %v4540
        %v4545 = vand.u32 2147483647, %v4358
        %vm4546 = vcmp.eq.f32.partialorder %v4545, 8.507059e+37
        %v4547 = vand.u32 %v4358, 2147483648
        %v4548 = vor.u32 1.1754944e-38, %v4547
        %v4549 = vsel %vm4546, %v4548, %v4544
        %v4550 = vrcp.pop %v4361
        %v4551 = vmul.f32 %v4361, %v4550
        %v4552 = vsub.f32 1.0, %v4551
        %v4553 = vmul.f32 %v4550, %v4552
        %v4554 = vadd.f32 %v4550, %v4553
        %vm4555 = vweird.f32 %v4361
        %vm4556 = vweird.f32 %v4550
        %vm4557 = vmor %vm4555, %vm4556
        %v4558 = vsel %vm4557, %v4550, %v4554
        %v4559 = vand.u32 2147483647, %v4361
        %vm4560 = vcmp.eq.f32.partialorder %v4559, 8.507059e+37
        %v4561 = vand.u32 %v4361, 2147483648
        %v4562 = vor.u32 1.1754944e-38, %v4561
        %v4563 = vsel %vm4560, %v4562, %v4558
        %v4564 = vrcp.pop %v4364
        %v4565 = vmul.f32 %v4364, %v4564
        %v4566 = vsub.f32 1.0, %v4565
        %v4567 = vmul.f32 %v4564, %v4566
        %v4568 = vadd.f32 %v4564, %v4567
        %vm4569 = vweird.f32 %v4364
        %vm4570 = vweird.f32 %v4564
        %vm4571 = vmor %vm4569, %vm4570
        %v4572 = vsel %vm4571, %v4564, %v4568
        %v4573 = vand.u32 2147483647, %v4364
        %vm4574 = vcmp.eq.f32.partialorder %v4573, 8.507059e+37
        %v4575 = vand.u32 %v4364, 2147483648
        %v4576 = vor.u32 1.1754944e-38, %v4575
        %v4577 = vsel %vm4574, %v4576, %v4572
        %v4578 = vrcp.pop %v4367
        %v4579 = vmul.f32 %v4367, %v4578
        %v4580 = vsub.f32 1.0, %v4579
        %v4581 = vmul.f32 %v4578, %v4580
        %v4582 = vadd.f32 %v4578, %v4581
        %vm4583 = vweird.f32 %v4367
        %vm4584 = vweird.f32 %v4578
        %vm4585 = vmor %vm4583, %vm4584
        %v4586 = vsel %vm4585, %v4578, %v4582
        %v4587 = vand.u32 2147483647, %v4367
        %vm4588 = vcmp.eq.f32.partialorder %v4587, 8.507059e+37
        %v4589 = vand.u32 %v4367, 2147483648
        %v4590 = vor.u32 1.1754944e-38, %v4589
        %v4591 = vsel %vm4588, %v4590, %v4586
        %v4592 = vmul.f32 %v4257, %v4381
        %v4593 = vmul.f32 %v4259, %v4381
        %v4594 = vmul.f32 %v4261, %v4395
        %v4595 = vmul.f32 %v4263, %v4395
        %v4596 = vmul.f32 %v4265, %v4409
        %v4597 = vmul.f32 %v4267, %v4409
        %v4598 = vmul.f32 %v4269, %v4423
        %v4599 = vmul.f32 %v4271, %v4423
        %v4600 = vmul.f32 %v4273, %v4437
        %v4601 = vmul.f32 %v4275, %v4437
        %v4602 = vmul.f32 %v4277, %v4451
        %v4603 = vmul.f32 %v4279, %v4451
        %v4604 = vmul.f32 %v4281, %v4465
        %v4605 = vmul.f32 %v4283, %v4465
        %v4606 = vmul.f32 %v4285, %v4479
        %v4607 = vmul.f32 %v4287, %v4479
        %v4608 = vmul.f32 %v4289, %v4493
        %v4609 = vmul.f32 %v4291, %v4493
        %v4610 = vmul.f32 %v4293, %v4507
        %v4611 = vmul.f32 %v4295, %v4507
        %v4612 = vmul.f32 %v4297, %v4521
        %v4613 = vmul.f32 %v4299, %v4521
        %v4614 = vmul.f32 %v4301, %v4535
        %v4615 = vmul.f32 %v4303, %v4535
        %v4616 = vmul.f32 %v4305, %v4549
        %v4617 = vmul.f32 %v4307, %v4549
        %v4618 = vmul.f32 %v4309, %v4563
        %v4619 = vmul.f32 %v4311, %v4563
        %v4620 = vmul.f32 %v4313, %v4577
        %v4621 = vmul.f32 %v4315, %v4577
        %v4622 = vmul.f32 %v4317, %v4591
        %v4623 = vmul.f32 %v4319, %v4591
        %4624 = vrot.lane.b32.xlu0 %v882, 32
        %v4625 = vpop.permute.xlu0 %4624
        %4626 = vrot.lane.b32.xlu0 %v885, 32
        %v4627 = vpop.permute.xlu0 %4626
        %4628 = vrot.lane.b32.xlu0 %v888, 32
        %v4629 = vpop.permute.xlu0 %4628
        %4630 = vrot.lane.b32.xlu0 %v891, 32
        %v4631 = vpop.permute.xlu0 %4630
        %4632 = vrot.lane.b32.xlu0 %v894, 32
        %v4633 = vpop.permute.xlu0 %4632
        %4634 = vrot.lane.b32.xlu0 %v897, 32
        %v4635 = vpop.permute.xlu0 %4634
        %4636 = vrot.lane.b32.xlu0 %v900, 32
        %v4637 = vpop.permute.xlu0 %4636
        %4638 = vrot.lane.b32.xlu0 %v903, 32
        %v4639 = vpop.permute.xlu0 %4638
        %4640 = vrot.lane.b32.xlu0 %v906, 32
        %v4641 = vpop.permute.xlu0 %4640
        %4642 = vrot.lane.b32.xlu0 %v909, 32
        %v4643 = vpop.permute.xlu0 %4642
        %4644 = vrot.lane.b32.xlu0 %v912, 32
        %v4645 = vpop.permute.xlu0 %4644
        %4646 = vrot.lane.b32.xlu0 %v915, 32
        %v4647 = vpop.permute.xlu0 %4646
        %4648 = vrot.lane.b32.xlu0 %v918, 32
        %v4649 = vpop.permute.xlu0 %4648
        %4650 = vrot.lane.b32.xlu0 %v921, 32
        %v4651 = vpop.permute.xlu0 %4650
        %4652 = vrot.lane.b32.xlu0 %v924, 32
        %v4653 = vpop.permute.xlu0 %4652
        %4654 = vrot.lane.b32.xlu0 %v927, 32
        %v4655 = vpop.permute.xlu0 %4654
        %4656 = vrot.lane.b32.xlu0 %v930, 32
        %v4657 = vpop.permute.xlu0 %4656
        %4658 = vrot.lane.b32.xlu0 %v933, 32
        %v4659 = vpop.permute.xlu0 %4658
        %4660 = vrot.lane.b32.xlu0 %v936, 32
        %v4661 = vpop.permute.xlu0 %4660
        %4662 = vrot.lane.b32.xlu0 %v939, 32
        %v4663 = vpop.permute.xlu0 %4662
        %4664 = vrot.lane.b32.xlu0 %v942, 32
        %v4665 = vpop.permute.xlu0 %4664
        %4666 = vrot.lane.b32.xlu0 %v945, 32
        %v4667 = vpop.permute.xlu0 %4666
        %4668 = vrot.lane.b32.xlu0 %v948, 32
        %v4669 = vpop.permute.xlu0 %4668
        %4670 = vrot.lane.b32.xlu0 %v951, 32
        %v4671 = vpop.permute.xlu0 %4670
        %4672 = vrot.lane.b32.xlu0 %v954, 32
        %v4673 = vpop.permute.xlu0 %4672
        %4674 = vrot.lane.b32.xlu0 %v957, 32
        %v4675 = vpop.permute.xlu0 %4674
        %4676 = vrot.lane.b32.xlu0 %v960, 32
        %v4677 = vpop.permute.xlu0 %4676
        %4678 = vrot.lane.b32.xlu0 %v963, 32
        %v4679 = vpop.permute.xlu0 %4678
        %4680 = vrot.lane.b32.xlu0 %v966, 32
        %v4681 = vpop.permute.xlu0 %4680
        %4682 = vrot.lane.b32.xlu0 %v969, 32
        %v4683 = vpop.permute.xlu0 %4682
        %4684 = vrot.lane.b32.xlu0 %v972, 32
        %v4685 = vpop.permute.xlu0 %4684
        %4686 = vrot.lane.b32.xlu0 %v975, 32
        %v4687 = vpop.permute.xlu0 %4686
        %4720 = vmatpush.msra.mxu0 %v4655
        %4721 = vmatpush.msra.mxu0 %v4653
        %4722 = vmatpush.msra.mxu0 %v4651
        %4723 = vmatpush.msra.mxu0 %v4649
        %4724 = vmatpush.msra.mxu0 %v4647
        %4725 = vmatpush.msra.mxu0 %v4645
        %4726 = vmatpush.msra.mxu0 %v4643
        %4727 = vmatpush.msra.mxu0 %v4641
        %4728 = vmatpush.msra.mxu0 %v4639
        %4729 = vmatpush.msra.mxu0 %v4637
        %4730 = vmatpush.msra.mxu0 %v4635
        %4731 = vmatpush.msra.mxu0 %v4633
        %4732 = vmatpush.msra.mxu0 %v4631
        %4733 = vmatpush.msra.mxu0 %v4629
        %4734 = vmatpush.msra.mxu0 %v4627
        %4735 = vmatpush.msra.mxu0 %v4625
        %4736 = vmatmul.f32.gmra.mxu0 %v4592
        %v4737 = vpop.f32.mrf.mxu0
        %v4738 = vadd.f32 0.0, %v4737
        %4739 = vmatmul.f32.gmra.mxu0 %v4594
        %v4740 = vpop.f32.mrf.mxu0
        %v4741 = vadd.f32 0.0, %v4740
        %4742 = vmatmul.f32.gmra.mxu0 %v4596
        %v4743 = vpop.f32.mrf.mxu0
        %v4744 = vadd.f32 0.0, %v4743
        %4745 = vmatmul.f32.gmra.mxu0 %v4598
        %v4746 = vpop.f32.mrf.mxu0
        %v4747 = vadd.f32 0.0, %v4746
        %4748 = vmatmul.f32.gmra.mxu0 %v4600
        %v4749 = vpop.f32.mrf.mxu0
        %v4750 = vadd.f32 0.0, %v4749
        %4751 = vmatmul.f32.gmra.mxu0 %v4602
        %v4752 = vpop.f32.mrf.mxu0
        %v4753 = vadd.f32 0.0, %v4752
        %4754 = vmatmul.f32.gmra.mxu0 %v4604
        %v4755 = vpop.f32.mrf.mxu0
        %v4756 = vadd.f32 0.0, %v4755
        %4757 = vmatmul.f32.gmra.mxu0 %v4606
        %v4758 = vpop.f32.mrf.mxu0
        %v4759 = vadd.f32 0.0, %v4758
        %4760 = vmatmul.f32.gmra.mxu0 %v4608
        %v4761 = vpop.f32.mrf.mxu0
        %v4762 = vadd.f32 0.0, %v4761
        %4763 = vmatmul.f32.gmra.mxu0 %v4610
        %v4764 = vpop.f32.mrf.mxu0
        %v4765 = vadd.f32 0.0, %v4764
        %4766 = vmatmul.f32.gmra.mxu0 %v4612
        %v4767 = vpop.f32.mrf.mxu0
        %v4768 = vadd.f32 0.0, %v4767
        %4769 = vmatmul.f32.gmra.mxu0 %v4614
        %v4770 = vpop.f32.mrf.mxu0
        %v4771 = vadd.f32 0.0, %v4770
        %4772 = vmatmul.f32.gmra.mxu0 %v4616
        %v4773 = vpop.f32.mrf.mxu0
        %v4774 = vadd.f32 0.0, %v4773
        %4775 = vmatmul.f32.gmra.mxu0 %v4618
        %v4776 = vpop.f32.mrf.mxu0
        %v4777 = vadd.f32 0.0, %v4776
        %4778 = vmatmul.f32.gmra.mxu0 %v4620
        %v4779 = vpop.f32.mrf.mxu0
        %v4780 = vadd.f32 0.0, %v4779
        %4781 = vmatmul.f32.gmra.mxu0 %v4622
        %v4782 = vpop.f32.mrf.mxu0
        %v4783 = vadd.f32 0.0, %v4782
        %4784 = vdwg.mxu0
        %4785 = vmatpush.msra.mxu0 %v4687
        %4786 = vmatpush.msra.mxu0 %v4685
        %4787 = vmatpush.msra.mxu0 %v4683
        %4788 = vmatpush.msra.mxu0 %v4681
        %4789 = vmatpush.msra.mxu0 %v4679
        %4790 = vmatpush.msra.mxu0 %v4677
        %4791 = vmatpush.msra.mxu0 %v4675
        %4792 = vmatpush.msra.mxu0 %v4673
        %4793 = vmatpush.msra.mxu0 %v4671
        %4794 = vmatpush.msra.mxu0 %v4669
        %4795 = vmatpush.msra.mxu0 %v4667
        %4796 = vmatpush.msra.mxu0 %v4665
        %4797 = vmatpush.msra.mxu0 %v4663
        %4798 = vmatpush.msra.mxu0 %v4661
        %4799 = vmatpush.msra.mxu0 %v4659
        %4800 = vmatpush.msra.mxu0 %v4657
        %4801 = vmatmul.f32.gmra.mxu0 %v4593
        %v4802 = vpop.f32.mrf.mxu0
        %v4803 = vadd.f32 %v4738, %v4802
        %4804 = vmatmul.f32.gmra.mxu0 %v4595
        %v4805 = vpop.f32.mrf.mxu0
        %v4806 = vadd.f32 %v4741, %v4805
        %4807 = vmatmul.f32.gmra.mxu0 %v4597
        %v4808 = vpop.f32.mrf.mxu0
        %v4809 = vadd.f32 %v4744, %v4808
        %4810 = vmatmul.f32.gmra.mxu0 %v4599
        %v4811 = vpop.f32.mrf.mxu0
        %v4812 = vadd.f32 %v4747, %v4811
        %4813 = vmatmul.f32.gmra.mxu0 %v4601
        %v4814 = vpop.f32.mrf.mxu0
        %v4815 = vadd.f32 %v4750, %v4814
        %4816 = vmatmul.f32.gmra.mxu0 %v4603
        %v4817 = vpop.f32.mrf.mxu0
        %v4818 = vadd.f32 %v4753, %v4817
        %4819 = vmatmul.f32.gmra.mxu0 %v4605
        %v4820 = vpop.f32.mrf.mxu0
        %v4821 = vadd.f32 %v4756, %v4820
        %4822 = vmatmul.f32.gmra.mxu0 %v4607
        %v4823 = vpop.f32.mrf.mxu0
        %v4824 = vadd.f32 %v4759, %v4823
        %4825 = vmatmul.f32.gmra.mxu0 %v4609
        %v4826 = vpop.f32.mrf.mxu0
        %v4827 = vadd.f32 %v4762, %v4826
        %4828 = vmatmul.f32.gmra.mxu0 %v4611
        %v4829 = vpop.f32.mrf.mxu0
        %v4830 = vadd.f32 %v4765, %v4829
        %4831 = vmatmul.f32.gmra.mxu0 %v4613
        %v4832 = vpop.f32.mrf.mxu0
        %v4833 = vadd.f32 %v4768, %v4832
        %4834 = vmatmul.f32.gmra.mxu0 %v4615
        %v4835 = vpop.f32.mrf.mxu0
        %v4836 = vadd.f32 %v4771, %v4835
        %4837 = vmatmul.f32.gmra.mxu0 %v4617
        %v4838 = vpop.f32.mrf.mxu0
        %v4839 = vadd.f32 %v4774, %v4838
        %4840 = vmatmul.f32.gmra.mxu0 %v4619
        %v4841 = vpop.f32.mrf.mxu0
        %v4842 = vadd.f32 %v4777, %v4841
        %4843 = vmatmul.f32.gmra.mxu0 %v4621
        %v4844 = vpop.f32.mrf.mxu0
        %v4845 = vadd.f32 %v4780, %v4844
        %4846 = vmatmul.f32.gmra.mxu0 %v4623
        %v4847 = vpop.f32.mrf.mxu0
        %v4848 = vadd.f32 %v4783, %v4847
        %4849 = vdwg.mxu0
        %4866 = vrot.lane.b32.xlu0 %v2811, 32
        %v4867 = vpop.permute.xlu0 %4866
        %4868 = vrot.lane.b32.xlu0 %v2814, 32
        %v4869 = vpop.permute.xlu0 %4868
        %4870 = vrot.lane.b32.xlu0 %v2817, 32
        %v4871 = vpop.permute.xlu0 %4870
        %4872 = vrot.lane.b32.xlu0 %v2820, 32
        %v4873 = vpop.permute.xlu0 %4872
        %4874 = vrot.lane.b32.xlu0 %v2823, 32
        %v4875 = vpop.permute.xlu0 %4874
        %4876 = vrot.lane.b32.xlu0 %v2826, 32
        %v4877 = vpop.permute.xlu0 %4876
        %4878 = vrot.lane.b32.xlu0 %v2829, 32
        %v4879 = vpop.permute.xlu0 %4878
        %4880 = vrot.lane.b32.xlu0 %v2832, 32
        %v4881 = vpop.permute.xlu0 %4880
        %4882 = vrot.lane.b32.xlu0 %v2835, 32
        %v4883 = vpop.permute.xlu0 %4882
        %4884 = vrot.lane.b32.xlu0 %v2838, 32
        %v4885 = vpop.permute.xlu0 %4884
        %4886 = vrot.lane.b32.xlu0 %v2841, 32
        %v4887 = vpop.permute.xlu0 %4886
        %4888 = vrot.lane.b32.xlu0 %v2844, 32
        %v4889 = vpop.permute.xlu0 %4888
        %4890 = vrot.lane.b32.xlu0 %v2847, 32
        %v4891 = vpop.permute.xlu0 %4890
        %4892 = vrot.lane.b32.xlu0 %v2850, 32
        %v4893 = vpop.permute.xlu0 %4892
        %4894 = vrot.lane.b32.xlu0 %v2853, 32
        %v4895 = vpop.permute.xlu0 %4894
        %4896 = vrot.lane.b32.xlu0 %v2856, 32
        %v4897 = vpop.permute.xlu0 %4896
        %4930 = vrot.lane.b32.xlu0 %v3807, 64
        %v4931 = vpop.permute.xlu0 %4930
        %4932 = vrot.lane.b32.xlu0 %v3810, 64
        %v4933 = vpop.permute.xlu0 %4932
        %4934 = vrot.lane.b32.xlu0 %v3813, 64
        %v4935 = vpop.permute.xlu0 %4934
        %4936 = vrot.lane.b32.xlu0 %v3816, 64
        %v4937 = vpop.permute.xlu0 %4936
        %4938 = vrot.lane.b32.xlu0 %v3819, 64
        %v4939 = vpop.permute.xlu0 %4938
        %4940 = vrot.lane.b32.xlu0 %v3822, 64
        %v4941 = vpop.permute.xlu0 %4940
        %4942 = vrot.lane.b32.xlu0 %v3825, 64
        %v4943 = vpop.permute.xlu0 %4942
        %4944 = vrot.lane.b32.xlu0 %v3828, 64
        %v4945 = vpop.permute.xlu0 %4944
        %4946 = vrot.lane.b32.xlu0 %v3831, 64
        %v4947 = vpop.permute.xlu0 %4946
        %4948 = vrot.lane.b32.xlu0 %v3834, 64
        %v4949 = vpop.permute.xlu0 %4948
        %4950 = vrot.lane.b32.xlu0 %v3837, 64
        %v4951 = vpop.permute.xlu0 %4950
        %4952 = vrot.lane.b32.xlu0 %v3840, 64
        %v4953 = vpop.permute.xlu0 %4952
        %4954 = vrot.lane.b32.xlu0 %v3843, 64
        %v4955 = vpop.permute.xlu0 %4954
        %4956 = vrot.lane.b32.xlu0 %v3846, 64
        %v4957 = vpop.permute.xlu0 %4956
        %4958 = vrot.lane.b32.xlu0 %v3849, 64
        %v4959 = vpop.permute.xlu0 %4958
        %4960 = vrot.lane.b32.xlu0 %v3852, 64
        %v4961 = vpop.permute.xlu0 %4960
        %4994 = vrot.lane.b32.xlu0 %v4803, 96
        %v4995 = vpop.permute.xlu0 %4994
        %4996 = vrot.lane.b32.xlu0 %v4806, 96
        %v4997 = vpop.permute.xlu0 %4996
        %4998 = vrot.lane.b32.xlu0 %v4809, 96
        %v4999 = vpop.permute.xlu0 %4998
        %5000 = vrot.lane.b32.xlu0 %v4812, 96
        %v5001 = vpop.permute.xlu0 %5000
        %5002 = vrot.lane.b32.xlu0 %v4815, 96
        %v5003 = vpop.permute.xlu0 %5002
        %5004 = vrot.lane.b32.xlu0 %v4818, 96
        %v5005 = vpop.permute.xlu0 %5004
        %5006 = vrot.lane.b32.xlu0 %v4821, 96
        %v5007 = vpop.permute.xlu0 %5006
        %5008 = vrot.lane.b32.xlu0 %v4824, 96
        %v5009 = vpop.permute.xlu0 %5008
        %5010 = vrot.lane.b32.xlu0 %v4827, 96
        %v5011 = vpop.permute.xlu0 %5010
        %5012 = vrot.lane.b32.xlu0 %v4830, 96
        %v5013 = vpop.permute.xlu0 %5012
        %5014 = vrot.lane.b32.xlu0 %v4833, 96
        %v5015 = vpop.permute.xlu0 %5014
        %5016 = vrot.lane.b32.xlu0 %v4836, 96
        %v5017 = vpop.permute.xlu0 %5016
        %5018 = vrot.lane.b32.xlu0 %v4839, 96
        %v5019 = vpop.permute.xlu0 %5018
        %5020 = vrot.lane.b32.xlu0 %v4842, 96
        %v5021 = vpop.permute.xlu0 %5020
        %5022 = vrot.lane.b32.xlu0 %v4845, 96
        %v5023 = vpop.permute.xlu0 %5022
        %5024 = vrot.lane.b32.xlu0 %v4848, 96
        %v5025 = vpop.permute.xlu0 %5024
        %v5042 = vsel %vm977, %v1783, %v4867
        %v5043 = vsel %vm977, %v1786, %v4869
        %v5044 = vsel %vm977, %v1789, %v4871
        %v5045 = vsel %vm977, %v1792, %v4873
        %v5046 = vsel %vm977, %v1795, %v4875
        %v5047 = vsel %vm977, %v1798, %v4877
        %v5048 = vsel %vm977, %v1801, %v4879
        %v5049 = vsel %vm977, %v1804, %v4881
        %v5050 = vsel %vm977, %v1807, %v4883
        %v5051 = vsel %vm977, %v1810, %v4885
        %v5052 = vsel %vm977, %v1813, %v4887
        %v5053 = vsel %vm977, %v1816, %v4889
        %v5054 = vsel %vm977, %v1819, %v4891
        %v5055 = vsel %vm977, %v1822, %v4893
        %v5056 = vsel %vm977, %v1825, %v4895
        %v5057 = vsel %vm977, %v1828, %v4897
        %vm5058 = vcmask 523264
        %v5059 = vsel %vm5058, %v5042, %v4931
        %v5060 = vsel %vm5058, %v5043, %v4933
        %v5061 = vsel %vm5058, %v5044, %v4935
        %v5062 = vsel %vm5058, %v5045, %v4937
        %v5063 = vsel %vm5058, %v5046, %v4939
        %v5064 = vsel %vm5058, %v5047, %v4941
        %v5065 = vsel %vm5058, %v5048, %v4943
        %v5066 = vsel %vm5058, %v5049, %v4945
        %v5067 = vsel %vm5058, %v5050, %v4947
        %v5068 = vsel %vm5058, %v5051, %v4949
        %v5069 = vsel %vm5058, %v5052, %v4951
        %v5070 = vsel %vm5058, %v5053, %v4953
        %v5071 = vsel %vm5058, %v5054, %v4955
        %v5072 = vsel %vm5058, %v5055, %v4957
        %v5073 = vsel %vm5058, %v5056, %v4959
        %v5074 = vsel %vm5058, %v5057, %v4961
        %vm5075 = vcmask 785408
        %v5076 = vsel %vm5075, %v5059, %v4995
        %v5077 = vsel %vm5075, %v5060, %v4997
        %v5078 = vsel %vm5075, %v5061, %v4999
        %v5079 = vsel %vm5075, %v5062, %v5001
        %v5080 = vsel %vm5075, %v5063, %v5003
        %v5081 = vsel %vm5075, %v5064, %v5005
        %v5082 = vsel %vm5075, %v5065, %v5007
        %v5083 = vsel %vm5075, %v5066, %v5009
        %v5084 = vsel %vm5075, %v5067, %v5011
        %v5085 = vsel %vm5075, %v5068, %v5013
        %v5086 = vsel %vm5075, %v5069, %v5015
        %v5087 = vsel %vm5075, %v5070, %v5017
        %v5088 = vsel %vm5075, %v5071, %v5019
        %v5089 = vsel %vm5075, %v5072, %v5021
        %v5090 = vsel %vm5075, %v5073, %v5023
        %v5091 = vsel %vm5075, %v5074, %v5025
        %v5092 = vld [vmem:[#allocation11] sm:$0xff]
        %v5093 = vld [vmem:[#allocation11 + $0x8] sm:$0xff]
        %v5094 = vld [vmem:[#allocation11 + $0x10] sm:$0xff]
        %v5095 = vld [vmem:[#allocation11 + $0x18] sm:$0xff]
        %v5096 = vld [vmem:[#allocation11 + $0x20] sm:$0xff]
        %v5097 = vld [vmem:[#allocation11 + $0x28] sm:$0xff]
        %v5098 = vld [vmem:[#allocation11 + $0x30] sm:$0xff]
        %v5099 = vld [vmem:[#allocation11 + $0x38] sm:$0xff]
        %v5100 = vld [vmem:[#allocation11 + $0x40] sm:$0xff]
        %v5101 = vld [vmem:[#allocation11 + $0x48] sm:$0xff]
        %v5102 = vld [vmem:[#allocation11 + $0x50] sm:$0xff]
        %v5103 = vld [vmem:[#allocation11 + $0x58] sm:$0xff]
        %v5104 = vld [vmem:[#allocation11 + $0x60] sm:$0xff]
        %v5105 = vld [vmem:[#allocation11 + $0x68] sm:$0xff]
        %v5106 = vld [vmem:[#allocation11 + $0x70] sm:$0xff]
        %v5107 = vld [vmem:[#allocation11 + $0x78] sm:$0xff]
        %v5108 = vld [vmem:[%s9] sm:$0x1]
        %v5110 = vperm.slane %v5108, 0
        %5112 = vmatpush.msra.mxu0 %v5107
        %5113 = vmatpush.msra.mxu0 %v5106
        %5114 = vmatpush.msra.mxu0 %v5105
        %5115 = vmatpush.msra.mxu0 %v5104
        %5116 = vmatpush.msra.mxu0 %v5103
        %5117 = vmatpush.msra.mxu0 %v5102
        %5118 = vmatpush.msra.mxu0 %v5101
        %5119 = vmatpush.msra.mxu0 %v5100
        %5120 = vmatpush.msra.mxu0 %v5099
        %5121 = vmatpush.msra.mxu0 %v5098
        %5122 = vmatpush.msra.mxu0 %v5097
        %5123 = vmatpush.msra.mxu0 %v5096
        %5124 = vmatpush.msra.mxu0 %v5095
        %5125 = vmatpush.msra.mxu0 %v5094
        %5126 = vmatpush.msra.mxu0 %v5093
        %5127 = vmatpush.msra.mxu0 %v5092
        %5128 = vmatmul.f32.gmra.mxu0 %v5076
        %v5129 = vpop.f32.mrf.mxu0
        %v5130 = vadd.f32 %v5110, %v5129
        %5131 = vmatmul.f32.gmra.mxu0 %v5077
        %v5132 = vpop.f32.mrf.mxu0
        %v5133 = vadd.f32 %v5110, %v5132
        %5134 = vmatmul.f32.gmra.mxu0 %v5078
        %v5135 = vpop.f32.mrf.mxu0
        %v5136 = vadd.f32 %v5110, %v5135
        %5137 = vmatmul.f32.gmra.mxu0 %v5079
        %v5138 = vpop.f32.mrf.mxu0
        %v5139 = vadd.f32 %v5110, %v5138
        %5140 = vmatmul.f32.gmra.mxu0 %v5080
        %v5141 = vpop.f32.mrf.mxu0
        %v5142 = vadd.f32 %v5110, %v5141
        %5143 = vmatmul.f32.gmra.mxu0 %v5081
        %v5144 = vpop.f32.mrf.mxu0
        %v5145 = vadd.f32 %v5110, %v5144
        %5146 = vmatmul.f32.gmra.mxu0 %v5082
        %v5147 = vpop.f32.mrf.mxu0
        %v5148 = vadd.f32 %v5110, %v5147
        %5149 = vmatmul.f32.gmra.mxu0 %v5083
        %v5150 = vpop.f32.mrf.mxu0
        %v5151 = vadd.f32 %v5110, %v5150
        %5152 = vmatmul.f32.gmra.mxu0 %v5084
        %v5153 = vpop.f32.mrf.mxu0
        %v5154 = vadd.f32 %v5110, %v5153
        %5155 = vmatmul.f32.gmra.mxu0 %v5085
        %v5156 = vpop.f32.mrf.mxu0
        %v5157 = vadd.f32 %v5110, %v5156
        %5158 = vmatmul.f32.gmra.mxu0 %v5086
        %v5159 = vpop.f32.mrf.mxu0
        %v5160 = vadd.f32 %v5110, %v5159
        %5161 = vmatmul.f32.gmra.mxu0 %v5087
        %v5162 = vpop.f32.mrf.mxu0
        %v5163 = vadd.f32 %v5110, %v5162
        %5164 = vmatmul.f32.gmra.mxu0 %v5088
        %v5165 = vpop.f32.mrf.mxu0
        %v5166 = vadd.f32 %v5110, %v5165
        %5167 = vmatmul.f32.gmra.mxu0 %v5089
        %v5168 = vpop.f32.mrf.mxu0
        %v5169 = vadd.f32 %v5110, %v5168
        %5170 = vmatmul.f32.gmra.mxu0 %v5090
        %v5171 = vpop.f32.mrf.mxu0
        %v5172 = vadd.f32 %v5110, %v5171
        %5173 = vmatmul.f32.gmra.mxu0 %v5091
        %v5174 = vpop.f32.mrf.mxu0
        %v5175 = vadd.f32 %v5110, %v5174
        %5176 = vdwg.mxu0
        %v5177 = vadd.f32 %v562, %v5130
        %v5178 = vadd.f32 %v563, %v5133
        %v5179 = vadd.f32 %v564, %v5136
        %v5180 = vadd.f32 %v565, %v5139
        %v5181 = vadd.f32 %v566, %v5142
        %v5182 = vadd.f32 %v567, %v5145
        %v5183 = vadd.f32 %v568, %v5148
        %v5184 = vadd.f32 %v569, %v5151
        %v5185 = vadd.f32 %v570, %v5154
        %v5186 = vadd.f32 %v571, %v5157
        %v5187 = vadd.f32 %v572, %v5160
        %v5188 = vadd.f32 %v573, %v5163
        %v5189 = vadd.f32 %v574, %v5166
        %v5190 = vadd.f32 %v575, %v5169
        %v5191 = vadd.f32 %v576, %v5172
        %v5192 = vadd.f32 %v577, %v5175
        %5193 = vadd.xlane.f32.xlu0 %v5177
        %v5194 = vpop.xlane.xlu0 %5193
        %5195 = vadd.xlane.f32.xlu0 %v5178
        %v5196 = vpop.xlane.xlu0 %5195
        %5197 = vadd.xlane.f32.xlu0 %v5179
        %v5198 = vpop.xlane.xlu0 %5197
        %5199 = vadd.xlane.f32.xlu0 %v5180
        %v5200 = vpop.xlane.xlu0 %5199
        %5201 = vadd.xlane.f32.xlu0 %v5181
        %v5202 = vpop.xlane.xlu0 %5201
        %5203 = vadd.xlane.f32.xlu0 %v5182
        %v5204 = vpop.xlane.xlu0 %5203
        %5205 = vadd.xlane.f32.xlu0 %v5183
        %v5206 = vpop.xlane.xlu0 %5205
        %5207 = vadd.xlane.f32.xlu0 %v5184
        %v5208 = vpop.xlane.xlu0 %5207
        %5209 = vadd.xlane.f32.xlu0 %v5185
        %v5210 = vpop.xlane.xlu0 %5209
        %5211 = vadd.xlane.f32.xlu0 %v5186
        %v5212 = vpop.xlane.xlu0 %5211
        %5213 = vadd.xlane.f32.xlu0 %v5187
        %v5214 = vpop.xlane.xlu0 %5213
        %5215 = vadd.xlane.f32.xlu0 %v5188
        %v5216 = vpop.xlane.xlu0 %5215
        %5217 = vadd.xlane.f32.xlu0 %v5189
        %v5218 = vpop.xlane.xlu0 %5217
        %5219 = vadd.xlane.f32.xlu0 %v5190
        %v5220 = vpop.xlane.xlu0 %5219
        %5221 = vadd.xlane.f32.xlu0 %v5191
        %v5222 = vpop.xlane.xlu0 %5221
        %5223 = vadd.xlane.f32.xlu0 %v5192
        %v5224 = vpop.xlane.xlu0 %5223
        %v5225 = vrcp.pop 128.0
        %v5226 = vmul.f32 128.0, %v5225
        %v5227 = vsub.f32 1.0, %v5226
        %v5228 = vmul.f32 %v5225, %v5227
        %v5229 = vadd.f32 %v5225, %v5228
        %vm5230 = vweird.f32 %v5225
        %v5231 = vsel %vm5230, %v5225, %v5229
        %v5232 = vmul.f32 %v5194, %v5231
        %v5233 = vmul.f32 %v5196, %v5231
        %v5234 = vmul.f32 %v5198, %v5231
        %v5235 = vmul.f32 %v5200, %v5231
        %v5236 = vmul.f32 %v5202, %v5231
        %v5237 = vmul.f32 %v5204, %v5231
        %v5238 = vmul.f32 %v5206, %v5231
        %v5239 = vmul.f32 %v5208, %v5231
        %v5240 = vmul.f32 %v5210, %v5231
        %v5241 = vmul.f32 %v5212, %v5231
        %v5242 = vmul.f32 %v5214, %v5231
        %v5243 = vmul.f32 %v5216, %v5231
        %v5244 = vmul.f32 %v5218, %v5231
        %v5245 = vmul.f32 %v5220, %v5231
        %v5246 = vmul.f32 %v5222, %v5231
        %v5247 = vmul.f32 %v5224, %v5231
        %v5248 = vsub.f32 %v5177, %v5232
        %v5249 = vsub.f32 %v5178, %v5233
        %v5250 = vsub.f32 %v5179, %v5234
        %v5251 = vsub.f32 %v5180, %v5235
        %v5252 = vsub.f32 %v5181, %v5236
        %v5253 = vsub.f32 %v5182, %v5237
        %v5254 = vsub.f32 %v5183, %v5238
        %v5255 = vsub.f32 %v5184, %v5239
        %v5256 = vsub.f32 %v5185, %v5240
        %v5257 = vsub.f32 %v5186, %v5241
        %v5258 = vsub.f32 %v5187, %v5242
        %v5259 = vsub.f32 %v5188, %v5243
        %v5260 = vsub.f32 %v5189, %v5244
        %v5261 = vsub.f32 %v5190, %v5245
        %v5262 = vsub.f32 %v5191, %v5246
        %v5263 = vsub.f32 %v5192, %v5247
        %v5264 = vmul.f32 %v5248, %v5248
        %v5265 = vmul.f32 %v5249, %v5249
        %v5266 = vmul.f32 %v5250, %v5250
        %v5267 = vmul.f32 %v5251, %v5251
        %v5268 = vmul.f32 %v5252, %v5252
        %v5269 = vmul.f32 %v5253, %v5253
        %v5270 = vmul.f32 %v5254, %v5254
        %v5271 = vmul.f32 %v5255, %v5255
        %v5272 = vmul.f32 %v5256, %v5256
        %v5273 = vmul.f32 %v5257, %v5257
        %v5274 = vmul.f32 %v5258, %v5258
        %v5275 = vmul.f32 %v5259, %v5259
        %v5276 = vmul.f32 %v5260, %v5260
        %v5277 = vmul.f32 %v5261, %v5261
        %v5278 = vmul.f32 %v5262, %v5262
        %v5279 = vmul.f32 %v5263, %v5263
        %5280 = vadd.xlane.f32.xlu0 %v5264
        %v5281 = vpop.xlane.xlu0 %5280
        %5282 = vadd.xlane.f32.xlu0 %v5265
        %v5283 = vpop.xlane.xlu0 %5282
        %5284 = vadd.xlane.f32.xlu0 %v5266
        %v5285 = vpop.xlane.xlu0 %5284
        %5286 = vadd.xlane.f32.xlu0 %v5267
        %v5287 = vpop.xlane.xlu0 %5286
        %5288 = vadd.xlane.f32.xlu0 %v5268
        %v5289 = vpop.xlane.xlu0 %5288
        %5290 = vadd.xlane.f32.xlu0 %v5269
        %v5291 = vpop.xlane.xlu0 %5290
        %5292 = vadd.xlane.f32.xlu0 %v5270
        %v5293 = vpop.xlane.xlu0 %5292
        %5294 = vadd.xlane.f32.xlu0 %v5271
        %v5295 = vpop.xlane.xlu0 %5294
        %5296 = vadd.xlane.f32.xlu0 %v5272
        %v5297 = vpop.xlane.xlu0 %5296
        %5298 = vadd.xlane.f32.xlu0 %v5273
        %v5299 = vpop.xlane.xlu0 %5298
        %5300 = vadd.xlane.f32.xlu0 %v5274
        %v5301 = vpop.xlane.xlu0 %5300
        %5302 = vadd.xlane.f32.xlu0 %v5275
        %v5303 = vpop.xlane.xlu0 %5302
        %5304 = vadd.xlane.f32.xlu0 %v5276
        %v5305 = vpop.xlane.xlu0 %5304
        %5306 = vadd.xlane.f32.xlu0 %v5277
        %v5307 = vpop.xlane.xlu0 %5306
        %5308 = vadd.xlane.f32.xlu0 %v5278
        %v5309 = vpop.xlane.xlu0 %5308
        %5310 = vadd.xlane.f32.xlu0 %v5279
        %v5311 = vpop.xlane.xlu0 %5310
        %v5312 = vmul.f32 %v5281, %v5231
        %v5313 = vmul.f32 %v5283, %v5231
        %v5314 = vmul.f32 %v5285, %v5231
        %v5315 = vmul.f32 %v5287, %v5231
        %v5316 = vmul.f32 %v5289, %v5231
        %v5317 = vmul.f32 %v5291, %v5231
        %v5318 = vmul.f32 %v5293, %v5231
        %v5319 = vmul.f32 %v5295, %v5231
        %v5320 = vmul.f32 %v5297, %v5231
        %v5321 = vmul.f32 %v5299, %v5231
        %v5322 = vmul.f32 %v5301, %v5231
        %v5323 = vmul.f32 %v5303, %v5231
        %v5324 = vmul.f32 %v5305, %v5231
        %v5325 = vmul.f32 %v5307, %v5231
        %v5326 = vmul.f32 %v5309, %v5231
        %v5327 = vmul.f32 %v5311, %v5231
        %v5328 = vadd.f32 %v5312, 1e-05
        %v5329 = vadd.f32 %v5313, 1e-05
        %v5330 = vadd.f32 %v5314, 1e-05
        %v5331 = vadd.f32 %v5315, 1e-05
        %v5332 = vadd.f32 %v5316, 1e-05
        %v5333 = vadd.f32 %v5317, 1e-05
        %v5334 = vadd.f32 %v5318, 1e-05
        %v5335 = vadd.f32 %v5319, 1e-05
        %v5336 = vadd.f32 %v5320, 1e-05
        %v5337 = vadd.f32 %v5321, 1e-05
        %v5338 = vadd.f32 %v5322, 1e-05
        %v5339 = vadd.f32 %v5323, 1e-05
        %v5340 = vadd.f32 %v5324, 1e-05
        %v5341 = vadd.f32 %v5325, 1e-05
        %v5342 = vadd.f32 %v5326, 1e-05
        %v5343 = vadd.f32 %v5327, 1e-05
        %v5344 = vrsqrt.pop %v5328
        %v5345 = vmul.f32 %v5344, %v5328
        %v5346 = vmul.f32 %v5345, %v5344
        %v5347 = vmul.f32 0.5, %v5346
        %v5348 = vsub.f32 1.5, %v5347
        %v5349 = vmul.f32 %v5344, %v5348
        %vm5350 = vweird.f32 %v5328
        %vm5351 = vweird.f32 %v5344
        %vm5352 = vmor %vm5350, %vm5351
        %v5353 = vsel %vm5352, %v5344, %v5349
        %v5354 = vrsqrt.pop %v5329
        %v5355 = vmul.f32 %v5354, %v5329
        %v5356 = vmul.f32 %v5355, %v5354
        %v5357 = vmul.f32 0.5, %v5356
        %v5358 = vsub.f32 1.5, %v5357
        %v5359 = vmul.f32 %v5354, %v5358
        %vm5360 = vweird.f32 %v5329
        %vm5361 = vweird.f32 %v5354
        %vm5362 = vmor %vm5360, %vm5361
        %v5363 = vsel %vm5362, %v5354, %v5359
        %v5364 = vrsqrt.pop %v5330
        %v5365 = vmul.f32 %v5364, %v5330
        %v5366 = vmul.f32 %v5365, %v5364
        %v5367 = vmul.f32 0.5, %v5366
        %v5368 = vsub.f32 1.5, %v5367
        %v5369 = vmul.f32 %v5364, %v5368
        %vm5370 = vweird.f32 %v5330
        %vm5371 = vweird.f32 %v5364
        %vm5372 = vmor %vm5370, %vm5371
        %v5373 = vsel %vm5372, %v5364, %v5369
        %v5374 = vrsqrt.pop %v5331
        %v5375 = vmul.f32 %v5374, %v5331
        %v5376 = vmul.f32 %v5375, %v5374
        %v5377 = vmul.f32 0.5, %v5376
        %v5378 = vsub.f32 1.5, %v5377
        %v5379 = vmul.f32 %v5374, %v5378
        %vm5380 = vweird.f32 %v5331
        %vm5381 = vweird.f32 %v5374
        %vm5382 = vmor %vm5380, %vm5381
        %v5383 = vsel %vm5382, %v5374, %v5379
        %v5384 = vrsqrt.pop %v5332
        %v5385 = vmul.f32 %v5384, %v5332
        %v5386 = vmul.f32 %v5385, %v5384
        %v5387 = vmul.f32 0.5, %v5386
        %v5388 = vsub.f32 1.5, %v5387
        %v5389 = vmul.f32 %v5384, %v5388
        %vm5390 = vweird.f32 %v5332
        %vm5391 = vweird.f32 %v5384
        %vm5392 = vmor %vm5390, %vm5391
        %v5393 = vsel %vm5392, %v5384, %v5389
        %v5394 = vrsqrt.pop %v5333
        %v5395 = vmul.f32 %v5394, %v5333
        %v5396 = vmul.f32 %v5395, %v5394
        %v5397 = vmul.f32 0.5, %v5396
        %v5398 = vsub.f32 1.5, %v5397
        %v5399 = vmul.f32 %v5394, %v5398
        %vm5400 = vweird.f32 %v5333
        %vm5401 = vweird.f32 %v5394
        %vm5402 = vmor %vm5400, %vm5401
        %v5403 = vsel %vm5402, %v5394, %v5399
        %v5404 = vrsqrt.pop %v5334
        %v5405 = vmul.f32 %v5404, %v5334
        %v5406 = vmul.f32 %v5405, %v5404
        %v5407 = vmul.f32 0.5, %v5406
        %v5408 = vsub.f32 1.5, %v5407
        %v5409 = vmul.f32 %v5404, %v5408
        %vm5410 = vweird.f32 %v5334
        %vm5411 = vweird.f32 %v5404
        %vm5412 = vmor %vm5410, %vm5411
        %v5413 = vsel %vm5412, %v5404, %v5409
        %v5414 = vrsqrt.pop %v5335
        %v5415 = vmul.f32 %v5414, %v5335
        %v5416 = vmul.f32 %v5415, %v5414
        %v5417 = vmul.f32 0.5, %v5416
        %v5418 = vsub.f32 1.5, %v5417
        %v5419 = vmul.f32 %v5414, %v5418
        %vm5420 = vweird.f32 %v5335
        %vm5421 = vweird.f32 %v5414
        %vm5422 = vmor %vm5420, %vm5421
        %v5423 = vsel %vm5422, %v5414, %v5419
        %v5424 = vrsqrt.pop %v5336
        %v5425 = vmul.f32 %v5424, %v5336
        %v5426 = vmul.f32 %v5425, %v5424
        %v5427 = vmul.f32 0.5, %v5426
        %v5428 = vsub.f32 1.5, %v5427
        %v5429 = vmul.f32 %v5424, %v5428
        %vm5430 = vweird.f32 %v5336
        %vm5431 = vweird.f32 %v5424
        %vm5432 = vmor %vm5430, %vm5431
        %v5433 = vsel %vm5432, %v5424, %v5429
        %v5434 = vrsqrt.pop %v5337
        %v5435 = vmul.f32 %v5434, %v5337
        %v5436 = vmul.f32 %v5435, %v5434
        %v5437 = vmul.f32 0.5, %v5436
        %v5438 = vsub.f32 1.5, %v5437
        %v5439 = vmul.f32 %v5434, %v5438
        %vm5440 = vweird.f32 %v5337
        %vm5441 = vweird.f32 %v5434
        %vm5442 = vmor %vm5440, %vm5441
        %v5443 = vsel %vm5442, %v5434, %v5439
        %v5444 = vrsqrt.pop %v5338
        %v5445 = vmul.f32 %v5444, %v5338
        %v5446 = vmul.f32 %v5445, %v5444
        %v5447 = vmul.f32 0.5, %v5446
        %v5448 = vsub.f32 1.5, %v5447
        %v5449 = vmul.f32 %v5444, %v5448
        %vm5450 = vweird.f32 %v5338
        %vm5451 = vweird.f32 %v5444
        %vm5452 = vmor %vm5450, %vm5451
        %v5453 = vsel %vm5452, %v5444, %v5449
        %v5454 = vrsqrt.pop %v5339
        %v5455 = vmul.f32 %v5454, %v5339
        %v5456 = vmul.f32 %v5455, %v5454
        %v5457 = vmul.f32 0.5, %v5456
        %v5458 = vsub.f32 1.5, %v5457
        %v5459 = vmul.f32 %v5454, %v5458
        %vm5460 = vweird.f32 %v5339
        %vm5461 = vweird.f32 %v5454
        %vm5462 = vmor %vm5460, %vm5461
        %v5463 = vsel %vm5462, %v5454, %v5459
        %v5464 = vrsqrt.pop %v5340
        %v5465 = vmul.f32 %v5464, %v5340
        %v5466 = vmul.f32 %v5465, %v5464
        %v5467 = vmul.f32 0.5, %v5466
        %v5468 = vsub.f32 1.5, %v5467
        %v5469 = vmul.f32 %v5464, %v5468
        %vm5470 = vweird.f32 %v5340
        %vm5471 = vweird.f32 %v5464
        %vm5472 = vmor %vm5470, %vm5471
        %v5473 = vsel %vm5472, %v5464, %v5469
        %v5474 = vrsqrt.pop %v5341
        %v5475 = vmul.f32 %v5474, %v5341
        %v5476 = vmul.f32 %v5475, %v5474
        %v5477 = vmul.f32 0.5, %v5476
        %v5478 = vsub.f32 1.5, %v5477
        %v5479 = vmul.f32 %v5474, %v5478
        %vm5480 = vweird.f32 %v5341
        %vm5481 = vweird.f32 %v5474
        %vm5482 = vmor %vm5480, %vm5481
        %v5483 = vsel %vm5482, %v5474, %v5479
        %v5484 = vrsqrt.pop %v5342
        %v5485 = vmul.f32 %v5484, %v5342
        %v5486 = vmul.f32 %v5485, %v5484
        %v5487 = vmul.f32 0.5, %v5486
        %v5488 = vsub.f32 1.5, %v5487
        %v5489 = vmul.f32 %v5484, %v5488
        %vm5490 = vweird.f32 %v5342
        %vm5491 = vweird.f32 %v5484
        %vm5492 = vmor %vm5490, %vm5491
        %v5493 = vsel %vm5492, %v5484, %v5489
        %v5494 = vrsqrt.pop %v5343
        %v5495 = vmul.f32 %v5494, %v5343
        %v5496 = vmul.f32 %v5495, %v5494
        %v5497 = vmul.f32 0.5, %v5496
        %v5498 = vsub.f32 1.5, %v5497
        %v5499 = vmul.f32 %v5494, %v5498
        %vm5500 = vweird.f32 %v5343
        %vm5501 = vweird.f32 %v5494
        %vm5502 = vmor %vm5500, %vm5501
        %v5503 = vsel %vm5502, %v5494, %v5499
        %v5504 = vmul.f32 %v5248, %v5353
        %v5505 = vmul.f32 %v5249, %v5363
        %v5506 = vmul.f32 %v5250, %v5373
        %v5507 = vmul.f32 %v5251, %v5383
        %v5508 = vmul.f32 %v5252, %v5393
        %v5509 = vmul.f32 %v5253, %v5403
        %v5510 = vmul.f32 %v5254, %v5413
        %v5511 = vmul.f32 %v5255, %v5423
        %v5512 = vmul.f32 %v5256, %v5433
        %v5513 = vmul.f32 %v5257, %v5443
        %v5514 = vmul.f32 %v5258, %v5453
        %v5515 = vmul.f32 %v5259, %v5463
        %v5516 = vmul.f32 %v5260, %v5473
        %v5517 = vmul.f32 %v5261, %v5483
        %v5518 = vmul.f32 %v5262, %v5493
        %v5519 = vmul.f32 %v5263, %v5503
        %v5520 = vld [vmem:[%s10] sm:$0x1]
        %v5522 = vperm.slane %v5520, 0
        %v5524 = vmul.f32 %v5504, %v5522
        %v5525 = vmul.f32 %v5505, %v5522
        %v5526 = vmul.f32 %v5506, %v5522
        %v5527 = vmul.f32 %v5507, %v5522
        %v5528 = vmul.f32 %v5508, %v5522
        %v5529 = vmul.f32 %v5509, %v5522
        %v5530 = vmul.f32 %v5510, %v5522
        %v5531 = vmul.f32 %v5511, %v5522
        %v5532 = vmul.f32 %v5512, %v5522
        %v5533 = vmul.f32 %v5513, %v5522
        %v5534 = vmul.f32 %v5514, %v5522
        %v5535 = vmul.f32 %v5515, %v5522
        %v5536 = vmul.f32 %v5516, %v5522
        %v5537 = vmul.f32 %v5517, %v5522
        %v5538 = vmul.f32 %v5518, %v5522
        %v5539 = vmul.f32 %v5519, %v5522
        %v5540 = vld [vmem:[%s11] sm:$0x1]
        %v5542 = vperm.slane %v5540, 0
        %v5544 = vadd.f32 %v5524, %v5542
        %v5545 = vadd.f32 %v5525, %v5542
        %v5546 = vadd.f32 %v5526, %v5542
        %v5547 = vadd.f32 %v5527, %v5542
        %v5548 = vadd.f32 %v5528, %v5542
        %v5549 = vadd.f32 %v5529, %v5542
        %v5550 = vadd.f32 %v5530, %v5542
        %v5551 = vadd.f32 %v5531, %v5542
        %v5552 = vadd.f32 %v5532, %v5542
        %v5553 = vadd.f32 %v5533, %v5542
        %v5554 = vadd.f32 %v5534, %v5542
        %v5555 = vadd.f32 %v5535, %v5542
        %v5556 = vadd.f32 %v5536, %v5542
        %v5557 = vadd.f32 %v5537, %v5542
        %v5558 = vadd.f32 %v5538, %v5542
        %v5559 = vadd.f32 %v5539, %v5542
        %5560 = vst [vmem:[%s559] sm:$0xff] %v5544
        %5561 = vst [vmem:[%s559 + $0x8] sm:$0xff] %v5545
        %5562 = vst [vmem:[%s559 + $0x10] sm:$0xff] %v5546
        %5563 = vst [vmem:[%s559 + $0x18] sm:$0xff] %v5547
        %5564 = vst [vmem:[%s559 + $0x20] sm:$0xff] %v5548
        %5565 = vst [vmem:[%s559 + $0x28] sm:$0xff] %v5549
        %5566 = vst [vmem:[%s559 + $0x30] sm:$0xff] %v5550
        %5567 = vst [vmem:[%s559 + $0x38] sm:$0xff] %v5551
        %5568 = vst [vmem:[%s559 + $0x40] sm:$0xff] %v5552
        %5569 = vst [vmem:[%s559 + $0x48] sm:$0xff] %v5553
        %5570 = vst [vmem:[%s559 + $0x50] sm:$0xff] %v5554
        %5571 = vst [vmem:[%s559 + $0x58] sm:$0xff] %v5555
        %5572 = vst [vmem:[%s559 + $0x60] sm:$0xff] %v5556
        %5573 = vst [vmem:[%s559 + $0x68] sm:$0xff] %v5557
        %5574 = vst [vmem:[%s559 + $0x70] sm:$0xff] %v5558
        %5575 = vst [vmem:[%s559 + $0x78] sm:$0xff] %v5559
        %s5576 = sand.u32 %s320, 1
        %s5577 = scalar_lea.sflag [#allocation4], %s5576
        %s5578 = sand.u32 %s320, 1
        %s5579 = smul.addr %s5578, 128
        %s5580 = scalar_lea.vmem [#allocation13], %s5579
        // Predicated region
        $region93: #{tpu_custom_call.1} parent=67 // pred_check
          %p5581 = pneg %p330
        $region94: #{tpu_custom_call.1} parent=67 // pred_check_branch
          %5583 = sbr.rel (%p5581) target = $region96
        $region95: #{tpu_custom_call.1} parent=67 // pred_region
          %s5584 = smul.u32 16, %s39
          %5586 = vsyncadd %s5577, 0
          %s5587 = smul.addr %s38, 32
          %s5588 = sadd.s32 %s5584, %s5587
          %s5589 = smul.addr %s5588, 8
          %s5590 = scalar_lea.hbm %s12, %s5589
          %s5591 = sshll.u32 %s5580, 4
          %s5592 = int_to_ptr.vmem [resolvable:$true] %s5591
          %s5593 = sshll.u32 %s5590, 4
          %s5594 = int_to_ptr.hbm [resolvable:$true] %s5593
          %5599 = dma.vmem_to_hbm [thread:$0]  %s5592, 2048, %s5594, %s5577, 128, 128, 8
        $region96: #{tpu_custom_call.1} parent=67 // pred_fallthru
          _
      $region68: #{tpu_custom_call.1} parent=5 // pred_fallthru
        _
      %p5600 = scmp.le.s32.totalorder 2, %s29
      // Predicated region
      $region97: #{tpu_custom_call.1} parent=5 // pred_check
        %p5601 = pneg %p5600
      $region98: #{tpu_custom_call.1} parent=5 // pred_check_branch
        %5603 = sbr.rel (%p5601) target = $region100
      $region99: #{tpu_custom_call.1} parent=5 // pred_region
        %s5604 = ssub.s32 %s29, 2
        // Predicated region
        $region101: #{tpu_custom_call.1} parent=99 // pred_check
          %p5605 = pneg %p336
        $region102: #{tpu_custom_call.1} parent=99 // pred_check_branch
          %5607 = sbr.rel (%p5605) target = $region104
        $region103: #{tpu_custom_call.1} parent=99 // pred_region
          %s5608 = sand.u32 %s321, 1
          %s5609 = scalar_lea.sflag [#allocation4], %s5608
          %s5610 = sand.u32 %s321, 1
          %s5611 = smul.addr %s5610, 128
          %s5612 = scalar_lea.vmem [#allocation13], %s5611
          %5614 = dma.done %s5609, 2048
        $region104: #{tpu_custom_call.1} parent=99 // pred_fallthru
          _
      $region100: #{tpu_custom_call.1} parent=5 // pred_fallthru
        _
    $region6: #{tpu_custom_call.1} parent=1 // loop_footer
      %s33 = sadd.s32 1, %s29
    $region7: #{tpu_custom_call.1} parent=1 // loop_footer_branch
      %28 = sbr.rel target = $region3
    $region8: #{tpu_custom_call.1} parent=1 // loop_exit
      _
    %5615 = vsyncpa [#allocation3], 1
    %s5616 = scalar_lea.sflag [#allocation3], 1
    %5617 = vsyncpa %s5616, 1
    %5618 = vsyncpa [#allocation6], 1
    %s5619 = scalar_lea.sflag [#allocation6], 1
    %5620 = vsyncpa %s5619, 1
    %5621 = vsyncpa [#allocation9], 1
    %5622 = vsyncpa [#allocation12], 1
    %5623 = vsyncpa [#allocation4], 1
    %s5624 = scalar_lea.sflag [#allocation4], 1
    %5625 = vsyncpa %s5624, 1

</llo_original>
